<compile_context>
chip_gen: v6e
topology: v6e:2x2x1
jax: 0.10.0
libtpu: 0.0.40
codegen_flags: <defaults>
</compile_context>

<pallas_src>
import functools
import math

import jax
import jax.numpy as jnp
from jax.experimental import pallas as pl
from jax.experimental.pallas import tpu as pltpu


# ----------------------------------------------------------------------------
# tiling helpers
# ----------------------------------------------------------------------------
_NODE_TILE_MAX = 256
_EDGE_TILE_MAX = 256


def _ceil_to(v, m):
    return ((v + m - 1) // m) * m


def _node_tiling(n):
    nt = _NODE_TILE_MAX if n > _NODE_TILE_MAX else _ceil_to(n, 8)
    return nt, _ceil_to(n, nt)


def _edge_tiling(e):
    et = _EDGE_TILE_MAX if e > _EDGE_TILE_MAX else _ceil_to(e, 8)
    return et, _ceil_to(e, et)


# ----------------------------------------------------------------------------
# Kernel 1: projection with folded eval-mode BatchNorm, then ReLU
# ----------------------------------------------------------------------------
def _proj_relu_kernel(x_ref, w_ref, b_ref, o_ref):
    h = jnp.dot(x_ref[...], w_ref[...], preferred_element_type=jnp.float32) + b_ref[...]
    o_ref[...] = jnp.maximum(h, 0.0)


def proj_relu(x, w, b, *, node_tile):
    n_pad, in_dim = x.shape
    hid = w.shape[1]
    return pl.pallas_call(
        _proj_relu_kernel,
        out_shape=jax.ShapeDtypeStruct((n_pad, hid), jnp.float32),
        grid=(n_pad // node_tile,),
        in_specs=[
            pl.BlockSpec((node_tile, in_dim), lambda i: (i, 0)),
            pl.BlockSpec((in_dim, hid), lambda i: (0, 0)),
            pl.BlockSpec((1, hid), lambda i: (0, 0)),
        ],
        out_specs=pl.BlockSpec((node_tile, hid), lambda i: (i, 0)),
        compiler_params=pltpu.CompilerParams(dimension_semantics=("parallel",)),
    )(x, w, b)


# ----------------------------------------------------------------------------
# Kernel 2: gcn_norm degree pass -> dinv = deg(src)^-1/2  (edges are layer-invariant)
# ----------------------------------------------------------------------------
def _degree_kernel(src_ref, dinv_ref, *, n_pad, e_real, e_tile):
    t = pl.program_id(0)

    @pl.when(t == 0)
    def _():
        dinv_ref[...] = jnp.zeros_like(dinv_ref)

    lane = jax.lax.broadcasted_iota(jnp.int32, (1, e_tile), 1)
    valid = (t * e_tile + lane) < e_real                                  # (1, ET)
    node_iota = jax.lax.broadcasted_iota(jnp.int32, (n_pad, e_tile), 0)
    s_oh = jnp.where((node_iota == src_ref[...]) & valid, 1.0, 0.0)        # (N, ET) f32
    dinv_ref[...] += jnp.sum(s_oh, axis=1, keepdims=True)

    @pl.when(t == pl.num_programs(0) - 1)
    def _():
        deg = dinv_ref[...]
        dinv_ref[...] = jnp.where(deg > 0.0, jax.lax.rsqrt(deg), 0.0)


def degree_inv_sqrt(src, *, n_pad, e_real, e_tile):
    e_pad = src.shape[1]
    kern = functools.partial(_degree_kernel, n_pad=n_pad, e_real=e_real, e_tile=e_tile)
    return pl.pallas_call(
        kern,
        out_shape=jax.ShapeDtypeStruct((n_pad, 1), jnp.float32),
        grid=(e_pad // e_tile,),
        in_specs=[pl.BlockSpec((1, e_tile), lambda t: (0, t))],
        out_specs=pl.BlockSpec((n_pad, 1), lambda t: (0, 0)),
        compiler_params=pltpu.CompilerParams(dimension_semantics=("arbitrary",)),
    )(src)


# ----------------------------------------------------------------------------
# Kernel 3: per-node transform of one DAN layer
#   x = W_input(cr);  xy = [x | x*dinv] (bf16, for the edge pass)
#   h_gcn = LayerNorm(relu(proj_gcn(x)))
# ----------------------------------------------------------------------------
def _dan_node_kernel(cr_ref, dinv_ref, w_in_ref, b_in_ref,
                     w_pg_ref, b_pg_ref, g_pg_ref, be_pg_ref,
                     xy_ref, hgcn_ref):
    x = jnp.dot(cr_ref[...], w_in_ref[...], preferred_element_type=jnp.float32) + b_in_ref[...]
    y = x * dinv_ref[...]
    xy_ref[...] = jnp.concatenate([x, y], axis=1).astype(xy_ref.dtype)

    h = jnp.maximum(
        jnp.dot(x, w_pg_ref[...], preferred_element_type=jnp.float32) + b_pg_ref[...], 0.0)
    mu = jnp.mean(h, axis=-1, keepdims=True)
    var = jnp.mean((h - mu) ** 2, axis=-1, keepdims=True)
    hgcn_ref[...] = (h - mu) * jax.lax.rsqrt(var + 1e-5) * g_pg_ref[...] + be_pg_ref[...]


def dan_node(cr, dinv, p, *, node_tile):
    n_pad, hin = cr.shape
    hid = p["w_in"].shape[1]
    row = lambda i: (i, 0)
    full = lambda i: (0, 0)
    return pl.pallas_call(
        _dan_node_kernel,
        out_shape=(jax.ShapeDtypeStruct((n_pad, 2 * hid), jnp.bfloat16),
                   jax.ShapeDtypeStruct((n_pad, hid), jnp.float32)),
        grid=(n_pad // node_tile,),
        in_specs=[
            pl.BlockSpec((node_tile, hin), row),
            pl.BlockSpec((node_tile, 1), row),
            pl.BlockSpec((hin, hid), full),
            pl.BlockSpec((1, hid), full),
            pl.BlockSpec((hid, hid), full),
            pl.BlockSpec((1, hid), full),
            pl.BlockSpec((1, hid), full),
            pl.BlockSpec((1, hid), full),
        ],
        out_specs=(pl.BlockSpec((node_tile, 2 * hid), row),
                   pl.BlockSpec((node_tile, hid), row)),
        compiler_params=pltpu.CompilerParams(dimension_semantics=("parallel",)),
    )(cr, dinv, p["w_in"], p["b_in"], p["w_pg"], p["b_pg"], p["g_pg"], p["be_pg"])


# ----------------------------------------------------------------------------
# Kernel 4: edge pass of one DAN layer (tiled over edges, one resident accumulator)
#   acc[:,  0:H ] = sum_{e: dst=n} (x*dinv)[src_e]                 (GCN scatter)
#   acc[:,  H:2H] = sum_{e: dst=n} res_e * exp(res_e - m)          (softmax numerator)
#   acc[:, 2H:3H] = sum_{e: dst=n} exp(res_e - m)                  (softmax denominator)
#   with res_e = x[src_e] @ W_rel[etype_e], m = running per-feature max (online rescale).
# ----------------------------------------------------------------------------
def _dan_edge_kernel(src_ref, dst_ref, eoh_ref, xy_ref, w_all_ref,
                     acc_ref, m_ref,
                     *, n_pad, hid, rel_num, e_real, e_tile):
    t = pl.program_id(0)

    @pl.when(t == 0)
    def _():
        acc_ref[...] = jnp.zeros_like(acc_ref)
        m_ref[...] = jnp.full_like(m_ref, -1e30)

    # one-hot incidence for this edge tile only (bf16: 0/1 exact); padded edges masked
    lane = jax.lax.broadcasted_iota(jnp.int32, (1, e_tile), 1)
    valid = (t * e_tile + lane) < e_real                                  # (1, ET)
    node_iota = jax.lax.broadcasted_iota(jnp.int32, (n_pad, e_tile), 0)
    s_oh = jnp.where((node_iota == src_ref[...]) & valid, 1.0, 0.0).astype(jnp.bfloat16)
    d_oh = jnp.where((node_iota == dst_ref[...]) & valid, 1.0, 0.0).astype(jnp.bfloat16)

    # fused gather: [x_j | (x*dinv)_j] = onehot_src^T @ [x | x*dinv]      (ET, 2H)
    xy_j = jax.lax.dot_general(s_oh, xy_ref[...], (((0,), (0,)), ((), ())),
                               preferred_element_type=jnp.float32)
    x_j = xy_j[:, :hid]
    y_j = xy_j[:, hid:]

    # fused per-relation transform: one (H, R*H) matmul + one-hot relation select
    res_all = jnp.dot(x_j, w_all_ref[...], preferred_element_type=jnp.float32)   # (ET, R*H)
    res = eoh_ref[:, 0:1] * res_all[:, :hid]
    for rr in range(1, rel_num):
        res = res + eoh_ref[:, rr:rr + 1] * res_all[:, rr * hid:(rr + 1) * hid]

    # online segment-softmax pieces with per-feature global-max stabilizer
    m_old = m_ref[...]
    m_new = jnp.maximum(m_old, jnp.max(res, axis=0, keepdims=True))                # (1, H)
    alpha = jnp.exp(m_old - m_new)
    ex = jnp.exp(res - m_new)
    m_ref[...] = m_new

    # batched scatter: one (N, ET) x (ET, 3H) matmul feeds the whole accumulator;
    # rescale = [1 | alpha | alpha] so the GCN part is untouched by the softmax rescale.
    payload = jnp.concatenate([y_j, res * ex, ex], axis=1).astype(jnp.bfloat16)    # (ET, 3H)
    g = jnp.dot(d_oh, payload, preferred_element_type=jnp.float32)                 # (N, 3H)
    scale = jnp.concatenate([jnp.ones_like(alpha), alpha, alpha], axis=1)          # (1, 3H)
    acc_ref[...] = acc_ref[...] * scale + g


def dan_edge(src, dst, eoh, xy, w_all, *, e_real, e_tile):
    n_pad, two_h = xy.shape
    hid = two_h // 2
    rel_num = eoh.shape[1]
    e_pad = src.shape[1]
    kern = functools.partial(_dan_edge_kernel, n_pad=n_pad, hid=hid,
                             rel_num=rel_num, e_real=e_real, e_tile=e_tile)
    return pl.pallas_call(
        kern,
        out_shape=jax.ShapeDtypeStruct((n_pad, 3 * hid), jnp.float32),
        grid=(e_pad // e_tile,),
        in_specs=[
            pl.BlockSpec((1, e_tile), lambda t: (0, t)),
            pl.BlockSpec((1, e_tile), lambda t: (0, t)),
            pl.BlockSpec((e_tile, rel_num), lambda t: (t, 0)),
            pl.BlockSpec((n_pad, two_h), lambda t: (0, 0)),
            pl.BlockSpec((hid, rel_num * hid), lambda t: (0, 0)),
        ],
        out_specs=pl.BlockSpec((n_pad, 3 * hid), lambda t: (0, 0)),
        scratch_shapes=[pltpu.VMEM((1, hid), jnp.float32)],
        compiler_params=pltpu.CompilerParams(
            dimension_semantics=("arbitrary",),
            vmem_limit_bytes=32 * 1024 * 1024),
    )(src, dst, eoh, xy, w_all)


# ----------------------------------------------------------------------------
# Kernel 5: per-node finalize of one DAN layer
#   msg_gcn = h_gcn + dinv[dst] * agg ; msg = num / den ; out = LN(contagion_out(...))
# ----------------------------------------------------------------------------
def _dan_final_kernel(hgcn_ref, acc_ref, dinv_ref,
                      w_out_ref, b_out_ref, g_out_ref, be_out_ref, o_ref, *, hid):
    acc = acc_ref[...]
    agg = acc[:, :hid]
    num = acc[:, hid:2 * hid]
    den = acc[:, 2 * hid:]
    msg_gcn = hgcn_ref[...] + dinv_ref[...] * agg
    msg = num * pl.reciprocal(den + 1e-16, approx=True)
    pre = msg_gcn + 0.1 * jnp.maximum(msg, 0.0)
    out = jnp.dot(pre, w_out_ref[...], preferred_element_type=jnp.float32) + b_out_ref[...]
    mu = jnp.mean(out, axis=-1, keepdims=True)
    var = jnp.mean((out - mu) ** 2, axis=-1, keepdims=True)
    o_ref[...] = (out - mu) * jax.lax.rsqrt(var + 1e-5) * g_out_ref[...] + be_out_ref[...]


def dan_final(hgcn, acc, dinv, p, *, node_tile):
    n_pad, hid = hgcn.shape
    dout = p["w_out"].shape[1]
    row = lambda i: (i, 0)
    full = lambda i: (0, 0)
    kern = functools.partial(_dan_final_kernel, hid=hid)
    return pl.pallas_call(
        kern,
        out_shape=jax.ShapeDtypeStruct((n_pad, dout), jnp.float32),
        grid=(n_pad // node_tile,),
        in_specs=[
            pl.BlockSpec((node_tile, hid), row),
            pl.BlockSpec((node_tile, 3 * hid), row),
            pl.BlockSpec((node_tile, 1), row),
            pl.BlockSpec((hid, dout), full),
            pl.BlockSpec((1, dout), full),
            pl.BlockSpec((1, dout), full),
            pl.BlockSpec((1, dout), full),
        ],
        out_specs=pl.BlockSpec((node_tile, dout), row),
        compiler_params=pltpu.CompilerParams(dimension_semantics=("parallel",)),
    )(hgcn, acc, dinv, p["w_out"], p["b_out"], p["g_out"], p["be_out"])


# ----------------------------------------------------------------------------
# Parameter init (deterministic, shapes follow the PyTorch __init__)
# ----------------------------------------------------------------------------
def init_linear(key, fan_in, fan_out):
    k1, k2 = jax.random.split(key)
    bound = 1.0 / math.sqrt(fan_in)
    w = jax.random.uniform(k1, (fan_in, fan_out), jnp.float32, -bound, bound)
    b = jax.random.uniform(k2, (1, fan_out), jnp.float32, -bound, bound)
    return w, b


def init_dan_params(key, hidden_dim, output_dim, rel_num):
    ks = jax.random.split(key, 4)
    w_in, b_in = init_linear(ks[0], hidden_dim, hidden_dim)
    w_pg, b_pg = init_linear(ks[1], hidden_dim, hidden_dim)
    w_out, b_out = init_linear(ks[2], hidden_dim, output_dim)
    w_rel = jax.random.uniform(ks[3], (rel_num, hidden_dim, hidden_dim),
                               jnp.float32, -1.0 / hidden_dim, 1.0 / hidden_dim)
    return dict(
        w_in=w_in, b_in=b_in,
        w_pg=w_pg, b_pg=b_pg,
        g_pg=jnp.ones((1, hidden_dim), jnp.float32),
        be_pg=jnp.zeros((1, hidden_dim), jnp.float32),
        w_rel=w_rel,
        w_out=w_out, b_out=b_out,
        g_out=jnp.ones((1, output_dim), jnp.float32),
        be_out=jnp.zeros((1, output_dim), jnp.float32),
    )


def init_risk_gnn_params(key, input_dim, hidden_dim, output_dim, rel_num, n_layer):
    ks = jax.random.split(key, n_layer + 1)
    proj_w, proj_b = init_linear(ks[0], input_dim, hidden_dim)
    layers = []
    for i in range(n_layer):
        in_dim = hidden_dim if i == 0 else output_dim
        layers.append(init_dan_params(ks[i + 1], in_dim, output_dim, rel_num))
    return dict(
        proj_w=proj_w, proj_b=proj_b,
        bn_gamma=jnp.ones((1, hidden_dim), jnp.float32),
        bn_beta=jnp.zeros((1, hidden_dim), jnp.float32),
        bn_mean=jnp.zeros((1, hidden_dim), jnp.float32),
        bn_var=jnp.ones((1, hidden_dim), jnp.float32),
        layers=layers,
    )


# ----------------------------------------------------------------------------
# Full RiskGNN forward
# ----------------------------------------------------------------------------
def risk_gnn_forward(params, x, edge_index, idx, edge_type, edge_weight=None):
    # TODO(synk): the edge_weight branch dereferences norm_weight=None in the reference; not modelled.
    assert edge_weight is None

    n_real, in_dim = x.shape
    e_real = edge_index.shape[1]
    rel_num = params["layers"][0]["w_rel"].shape[0]

    node_tile, n_pad = _node_tiling(n_real)
    e_tile, e_pad = _edge_tiling(e_real)

    # padded / lane-dense device layouts (wrapper-side plumbing only)
    x_p = jnp.zeros((n_pad, in_dim), jnp.float32).at[:n_real].set(x.astype(jnp.float32))
    dst = jnp.zeros((1, e_pad), jnp.int32).at[0, :e_real].set(edge_index[0].astype(jnp.int32))
    src = jnp.zeros((1, e_pad), jnp.int32).at[0, :e_real].set(edge_index[1].astype(jnp.int32))
    et_oh = jnp.zeros((e_pad, rel_num), jnp.float32).at[:e_real].set(
        jax.nn.one_hot(edge_type, rel_num, dtype=jnp.float32))

    # gcn_norm degree term: edges are identical for every layer -> compute once
    dinv = degree_inv_sqrt(src, n_pad=n_pad, e_real=e_real, e_tile=e_tile)

    # eval-mode BatchNorm1d folded into the projection Linear
    scale = params["bn_gamma"] * jax.lax.rsqrt(params["bn_var"] + 1e-5)
    w_proj = params["proj_w"] * scale
    b_proj = (params["proj_b"] - params["bn_mean"]) * scale + params["bn_beta"]
    cr = proj_relu(x_p, w_proj, b_proj, node_tile=node_tile)

    for lp in params["layers"]:
        hid = lp["w_in"].shape[1]
        # (R, H, H) -> (H, R*H) so all relation matmuls fuse into one MXU op
        w_all = jnp.transpose(lp["w_rel"], (1, 0, 2)).reshape(hid, rel_num * hid)
        xy, hgcn = dan_node(cr, dinv, lp, node_tile=node_tile)
        acc = dan_edge(src, dst, et_oh, xy, w_all, e_real=e_real, e_tile=e_tile)
        cr = dan_final(hgcn, acc, dinv, lp, node_tile=node_tile)

    # F.gelu (exact, erf-based) + eval-mode Dropout (identity); elementwise glue in JAX.
    cr = 0.5 * cr * (1.0 + jax.lax.erf(cr * (1.0 / math.sqrt(2.0))))
    return cr[idx]


if __name__ == "__main__":
    INPUT_DIM, HIDDEN_DIM, OUTPUT_DIM = 16, 32, 16
    REL_NUM, N_LAYER = 3, 2
    N_NODES, N_EDGES = 64, 128   # stands in for the hard-coded 3976 nodes

    root = jax.random.PRNGKey(0)
    kx, ke, kt, kp = jax.random.split(root, 4)

    x = jax.random.normal(kx, (N_NODES, INPUT_DIM), jnp.float32)
    edge_index = jax.random.randint(ke, (2, N_EDGES), 0, N_NODES, dtype=jnp.int32)
    edge_type = jax.random.randint(kt, (N_EDGES,), 0, REL_NUM, dtype=jnp.int32)
    idx = jnp.arange(0, N_NODES, 4, dtype=jnp.int32)

    params = init_risk_gnn_params(kp, INPUT_DIM, HIDDEN_DIM, OUTPUT_DIM, REL_NUM, N_LAYER)

    fwd = jax.jit(lambda p, x_, ei, ix, et: risk_gnn_forward(p, x_, ei, ix, et, None))
    out = fwd(params, x, edge_index, idx, edge_type)
    jax.block_until_ready(out)
    assert out.shape == (idx.shape[0], OUTPUT_DIM)
    assert bool(jnp.all(jnp.isfinite(out)))
    print("KERNEL_OK")
</pallas_src>

<mosaic_0001>
module attributes {stable_mosaic.version = 11 : i64} {
  func.func @_proj_relu_kernel(%arg0: i32, %arg1: memref<64x16xf32, #tpu.memory_space<vmem>>, %arg2: memref<16x32xf32, #tpu.memory_space<vmem>>, %arg3: memref<1x32xf32, #tpu.memory_space<vmem>>, %arg4: memref<64x32xf32, #tpu.memory_space<vmem>>) attributes {dimension_semantics = [#tpu.dimension_semantics<parallel>], iteration_bounds = array<i64: 1>, scalar_prefetch = 0 : i64, scratch_operands = 0 : i64, tpu.core_type = #tpu.core_type<tc>, window_params = [{transform_indices = @transform_0, window_bounds = array<i64: 64, 16>}, {pipeline_mode = #tpu.pipeline_mode<synchronous>, transform_indices = @transform_1, window_bounds = array<i64: 16, 32>}, {pipeline_mode = #tpu.pipeline_mode<synchronous>, transform_indices = @transform_2, window_bounds = array<i64: 1, 32>}, {transform_indices = @transform_3, window_bounds = array<i64: 64, 32>}]} {
    %c0 = arith.constant 0 : index
    %c0_0 = arith.constant 0 : index
    %0 = vector.load %arg1[%c0, %c0_0] : memref<64x16xf32, #tpu.memory_space<vmem>>, vector<64x16xf32>
    %c0_1 = arith.constant 0 : index
    %c0_2 = arith.constant 0 : index
    %1 = vector.load %arg2[%c0_1, %c0_2] : memref<16x32xf32, #tpu.memory_space<vmem>>, vector<16x32xf32>
    %cst = arith.constant dense<0.000000e+00> : vector<64x32xf32>
    %2 = tpu.matmul %0, %1, %cst {dimension_numbers = #tpu.dot_dimension_numbers<[1], [0], [0], [1], [0, 0, 1, 1], [], []>} : vector<64x16xf32>, vector<16x32xf32>, vector<64x32xf32> -> vector<64x32xf32>
    %c0_3 = arith.constant 0 : index
    %c0_4 = arith.constant 0 : index
    %3 = vector.load %arg3[%c0_3, %c0_4] : memref<1x32xf32, #tpu.memory_space<vmem>>, vector<1x32xf32>
    %4 = vector.broadcast %3 : vector<1x32xf32> to vector<64x32xf32>
    %5 = arith.addf %2, %4 : vector<64x32xf32>
    %cst_5 = arith.constant 0.000000e+00 : f32
    %6 = vector.broadcast %cst_5 : f32 to vector<64x32xf32>
    %7 = arith.maximumf %5, %6 : vector<64x32xf32>
    %c0_6 = arith.constant 0 : index
    %c0_7 = arith.constant 0 : index
    %8 = vector.load %arg4[%c0_6, %c0_7] : memref<64x32xf32, #tpu.memory_space<vmem>>, vector<64x32xf32>
    tpu.vector_store %arg4[%c0_6, %c0_7], %7 {strides = array<i32>} : memref<64x32xf32, #tpu.memory_space<vmem>>, vector<64x32xf32>,
    return
  }
  func.func @transform_0(%arg0: i32) -> (i32, i32) {
    %c0_i32 = arith.constant 0 : i32
    %c0_i32_0 = arith.constant 0 : i32
    return %arg0, %c0_i32 : i32, i32
  }
  func.func @transform_1(%arg0: i32) -> (i32, i32) {
    %c0_i32 = arith.constant 0 : i32
    %c0_i32_0 = arith.constant 0 : i32
    %c0_i32_1 = arith.constant 0 : i32
    return %c0_i32, %c0_i32_0 : i32, i32
  }
  func.func @transform_2(%arg0: i32) -> (i32, i32) {
    %c0_i32 = arith.constant 0 : i32
    %c0_i32_0 = arith.constant 0 : i32
    %c0_i32_1 = arith.constant 0 : i32
    return %c0_i32, %c0_i32_0 : i32, i32
  }
  func.func @transform_3(%arg0: i32) -> (i32, i32) {
    %c0_i32 = arith.constant 0 : i32
    %c0_i32_0 = arith.constant 0 : i32
    return %arg0, %c0_i32 : i32, i32
  }
}

module attributes {stable_mosaic.version = 11 : i64} {
  func.func @_degree_kernel(%arg0: i32, %arg1: memref<1x128xi32, #tpu.memory_space<vmem>>, %arg2: memref<64x1xf32, #tpu.memory_space<vmem>>) attributes {dimension_semantics = [#tpu.dimension_semantics<arbitrary>], iteration_bounds = array<i64: 1>, scalar_prefetch = 0 : i64, scratch_operands = 0 : i64, tpu.core_type = #tpu.core_type<tc>, window_params = [{transform_indices = @transform_0, window_bounds = array<i64: 1, 128>}, {pipeline_mode = #tpu.pipeline_mode<synchronous>, transform_indices = @transform_1, window_bounds = array<i64: 64, 1>}]} {
    %c0_i32 = arith.constant 0 : i32
    %0 = arith.cmpi eq, %arg0, %c0_i32 : i32
    %1 = arith.extui %0 : i1 to i32
    %c0_i32_0 = arith.constant 0 : i32
    %2 = arith.cmpi ne, %1, %c0_i32_0 : i32
    scf.if %2 {
      %cst_11 = arith.constant 0.000000e+00 : f32
      %26 = vector.broadcast %cst_11 : f32 to vector<64x1xf32>
      %c0_12 = arith.constant 0 : index
      %c0_13 = arith.constant 0 : index
      %27 = vector.load %arg2[%c0_12, %c0_13] : memref<64x1xf32, #tpu.memory_space<vmem>>, vector<64x1xf32>
      tpu.vector_store %arg2[%c0_12, %c0_13], %26 {strides = array<i32>} : memref<64x1xf32, #tpu.memory_space<vmem>>, vector<64x1xf32>,
    } else {
    }
    %3 = tpu.iota {dimensions = array<i32: 1>} : vector<1x128xi32>
    %c128_i32 = arith.constant 128 : i32
    %4 = arith.muli %arg0, %c128_i32 : i32
    %5 = vector.broadcast %4 : i32 to vector<1x128xi32>
    %6 = arith.addi %5, %3 : vector<1x128xi32>
    %c128_i32_1 = arith.constant 128 : i32
    %7 = vector.broadcast %c128_i32_1 : i32 to vector<1x128xi32>
    %8 = arith.cmpi slt, %6, %7 : vector<1x128xi32>
    %9 = tpu.iota {dimensions = array<i32: 0>} : vector<64x128xi32>
    %c0 = arith.constant 0 : index
    %c0_2 = arith.constant 0 : index
    %10 = vector.load %arg1[%c0, %c0_2] : memref<1x128xi32, #tpu.memory_space<vmem>>, vector<1x128xi32>
    %11 = vector.broadcast %10 : vector<1x128xi32> to vector<64x128xi32>
    %12 = arith.cmpi eq, %9, %11 : vector<64x128xi32>
    %13 = vector.broadcast %8 : vector<1x128xi1> to vector<64x128xi1>
    %14 = arith.andi %12, %13 : vector<64x128xi1>
    %cst = arith.constant 1.000000e+00 : f32
    %cst_3 = arith.constant 0.000000e+00 : f32
    %15 = vector.broadcast %cst : f32 to vector<64x128xf32>
    %16 = vector.broadcast %cst_3 : f32 to vector<64x128xf32>
    %17 = arith.select %14, %15, %16 : vector<64x128xi1>, vector<64x128xf32>
    %c0_4 = arith.constant 0 : index
    %c0_5 = arith.constant 0 : index
    %18 = vector.load %arg2[%c0_4, %c0_5] : memref<64x1xf32, #tpu.memory_space<vmem>>, vector<64x1xf32>
    %cst_6 = arith.constant dense<0.000000e+00> : vector<64xf32>
    %19 = vector.multi_reduction <add>, %17, %cst_6 [1] : vector<64x128xf32> to vector<64xf32>
    %20 = vector.shape_cast %19 : vector<64xf32> to vector<64x1xf32>
    %21 = arith.addf %18, %20 : vector<64x1xf32>
    %c0_7 = arith.constant 0 : index
    %c0_8 = arith.constant 0 : index
    %22 = vector.load %arg2[%c0_7, %c0_8] : memref<64x1xf32, #tpu.memory_space<vmem>>, vector<64x1xf32>
    tpu.vector_store %arg2[%c0_7, %c0_8], %21 {strides = array<i32>} : memref<64x1xf32, #tpu.memory_space<vmem>>, vector<64x1xf32>,
    %c0_i32_9 = arith.constant 0 : i32
    %23 = arith.cmpi eq, %arg0, %c0_i32_9 : i32
    %24 = arith.extui %23 : i1 to i32
    %c0_i32_10 = arith.constant 0 : i32
    %25 = arith.cmpi ne, %24, %c0_i32_10 : i32
    scf.if %25 {
      %c0_11 = arith.constant 0 : index
      %c0_12 = arith.constant 0 : index
      %26 = vector.load %arg2[%c0_11, %c0_12] : memref<64x1xf32, #tpu.memory_space<vmem>>, vector<64x1xf32>
      %cst_13 = arith.constant 0.000000e+00 : f32
      %27 = vector.broadcast %cst_13 : f32 to vector<64x1xf32>
      %28 = arith.cmpf ogt, %26, %27 : vector<64x1xf32>
      %29 = math.rsqrt %26 : vector<64x1xf32>
      %cst_14 = arith.constant 0.000000e+00 : f32
      %30 = vector.broadcast %cst_14 : f32 to vector<64x1xf32>
      %31 = arith.select %28, %29, %30 : vector<64x1xi1>, vector<64x1xf32>
      %c0_15 = arith.constant 0 : index
      %c0_16 = arith.constant 0 : index
      %32 = vector.load %arg2[%c0_15, %c0_16] : memref<64x1xf32, #tpu.memory_space<vmem>>, vector<64x1xf32>
      tpu.vector_store %arg2[%c0_15, %c0_16], %31 {strides = array<i32>} : memref<64x1xf32, #tpu.memory_space<vmem>>, vector<64x1xf32>,
    } else {
    }
    return
  }
  func.func @transform_0(%arg0: i32) -> (i32, i32) {
    %c0_i32 = arith.constant 0 : i32
    %c0_i32_0 = arith.constant 0 : i32
    return %c0_i32, %arg0 : i32, i32
  }
  func.func @transform_1(%arg0: i32) -> (i32, i32) {
    %c0_i32 = arith.constant 0 : i32
    %c0_i32_0 = arith.constant 0 : i32
    %c0_i32_1 = arith.constant 0 : i32
    return %c0_i32, %c0_i32_0 : i32, i32
  }
}

module attributes {stable_mosaic.version = 11 : i64} {
  func.func @_dan_node_kernel(%arg0: i32, %arg1: memref<64x32xf32, #tpu.memory_space<vmem>>, %arg2: memref<64x1xf32, #tpu.memory_space<vmem>>, %arg3: memref<32x32xf32, #tpu.memory_space<vmem>>, %arg4: memref<1x32xf32, #tpu.memory_space<vmem>>, %arg5: memref<32x32xf32, #tpu.memory_space<vmem>>, %arg6: memref<1x32xf32, #tpu.memory_space<vmem>>, %arg7: memref<1x32xf32, #tpu.memory_space<vmem>>, %arg8: memref<1x32xf32, #tpu.memory_space<vmem>>, %arg9: memref<64x64xbf16, #tpu.memory_space<vmem>>, %arg10: memref<64x32xf32, #tpu.memory_space<vmem>>) attributes {dimension_semantics = [#tpu.dimension_semantics<parallel>], iteration_bounds = array<i64: 1>, scalar_prefetch = 0 : i64, scratch_operands = 0 : i64, tpu.core_type = #tpu.core_type<tc>, window_params = [{transform_indices = @transform_0, window_bounds = array<i64: 64, 32>}, {transform_indices = @transform_1, window_bounds = array<i64: 64, 1>}, {pipeline_mode = #tpu.pipeline_mode<synchronous>, transform_indices = @transform_2, window_bounds = array<i64: 32, 32>}, {pipeline_mode = #tpu.pipeline_mode<synchronous>, transform_indices = @transform_3, window_bounds = array<i64: 1, 32>}, {pipeline_mode = #tpu.pipeline_mode<synchronous>, transform_indices = @transform_4, window_bounds = array<i64: 32, 32>}, {pipeline_mode = #tpu.pipeline_mode<synchronous>, transform_indices = @transform_5, window_bounds = array<i64: 1, 32>}, {pipeline_mode = #tpu.pipeline_mode<synchronous>, transform_indices = @transform_6, window_bounds = array<i64: 1, 32>}, {pipeline_mode = #tpu.pipeline_mode<synchronous>, transform_indices = @transform_7, window_bounds = array<i64: 1, 32>}, {transform_indices = @transform_8, window_bounds = array<i64: 64, 64>}, {transform_indices = @transform_9, window_bounds = array<i64: 64, 32>}]} {
    %c0 = arith.constant 0 : index
    %c0_0 = arith.constant 0 : index
    %0 = vector.load %arg1[%c0, %c0_0] : memref<64x32xf32, #tpu.memory_space<vmem>>, vector<64x32xf32>
    %c0_1 = arith.constant 0 : index
    %c0_2 = arith.constant 0 : index
    %1 = vector.load %arg3[%c0_1, %c0_2] : memref<32x32xf32, #tpu.memory_space<vmem>>, vector<32x32xf32>
    %cst = arith.constant dense<0.000000e+00> : vector<64x32xf32>
    %2 = tpu.matmul %0, %1, %cst {dimension_numbers = #tpu.dot_dimension_numbers<[1], [0], [0], [1], [0, 0, 1, 1], [], []>} : vector<64x32xf32>, vector<32x32xf32>, vector<64x32xf32> -> vector<64x32xf32>
    %c0_3 = arith.constant 0 : index
    %c0_4 = arith.constant 0 : index
    %3 = vector.load %arg4[%c0_3, %c0_4] : memref<1x32xf32, #tpu.memory_space<vmem>>, vector<1x32xf32>
    %4 = vector.broadcast %3 : vector<1x32xf32> to vector<64x32xf32>
    %5 = arith.addf %2, %4 : vector<64x32xf32>
    %c0_5 = arith.constant 0 : index
    %c0_6 = arith.constant 0 : index
    %6 = vector.load %arg2[%c0_5, %c0_6] : memref<64x1xf32, #tpu.memory_space<vmem>>, vector<64x1xf32>
    %7 = vector.broadcast %6 : vector<64x1xf32> to vector<64x32xf32>
    %8 = arith.mulf %5, %7 : vector<64x32xf32>
    %9 = tpu.concatenate %5, %8 in 1 : vector<64x32xf32>, vector<64x32xf32> -> vector<64x64xf32>
    %10 = arith.truncf %9 : vector<64x64xf32> to vector<64x64xbf16>
    %c0_7 = arith.constant 0 : index
    %c0_8 = arith.constant 0 : index
    %11 = vector.load %arg9[%c0_7, %c0_8] : memref<64x64xbf16, #tpu.memory_space<vmem>>, vector<64x64xbf16>
    tpu.vector_store %arg9[%c0_7, %c0_8], %10 {strides = array<i32>} : memref<64x64xbf16, #tpu.memory_space<vmem>>, vector<64x64xbf16>,
    %c0_9 = arith.constant 0 : index
    %c0_10 = arith.constant 0 : index
    %12 = vector.load %arg5[%c0_9, %c0_10] : memref<32x32xf32, #tpu.memory_space<vmem>>, vector<32x32xf32>
    %cst_11 = arith.constant dense<0.000000e+00> : vector<64x32xf32>
    %13 = tpu.matmul %5, %12, %cst_11 {dimension_numbers = #tpu.dot_dimension_numbers<[1], [0], [0], [1], [0, 0, 1, 1], [], []>} : vector<64x32xf32>, vector<32x32xf32>, vector<64x32xf32> -> vector<64x32xf32>
    %c0_12 = arith.constant 0 : index
    %c0_13 = arith.constant 0 : index
    %14 = vector.load %arg6[%c0_12, %c0_13] : memref<1x32xf32, #tpu.memory_space<vmem>>, vector<1x32xf32>
    %15 = vector.broadcast %14 : vector<1x32xf32> to vector<64x32xf32>
    %16 = arith.addf %13, %15 : vector<64x32xf32>
    %cst_14 = arith.constant 0.000000e+00 : f32
    %17 = vector.broadcast %cst_14 : f32 to vector<64x32xf32>
    %18 = arith.maximumf %16, %17 : vector<64x32xf32>
    %cst_15 = arith.constant dense<0.000000e+00> : vector<64xf32>
    %19 = vector.multi_reduction <add>, %18, %cst_15 [1] : vector<64x32xf32> to vector<64xf32>
    %20 = vector.shape_cast %19 : vector<64xf32> to vector<64x1xf32>
    %cst_16 = arith.constant 3.200000e+01 : f32
    %21 = vector.broadcast %cst_16 : f32 to vector<64x1xf32>
    %22 = arith.divf %20, %21 : vector<64x1xf32>
    %23 = vector.broadcast %22 : vector<64x1xf32> to vector<64x32xf32>
    %24 = arith.subf %18, %23 : vector<64x32xf32>
    %25 = arith.mulf %24, %24 : vector<64x32xf32>
    %cst_17 = arith.constant dense<0.000000e+00> : vector<64xf32>
    %26 = vector.multi_reduction <add>, %25, %cst_17 [1] : vector<64x32xf32> to vector<64xf32>
    %27 = vector.shape_cast %26 : vector<64xf32> to vector<64x1xf32>
    %cst_18 = arith.constant 3.200000e+01 : f32
    %28 = vector.broadcast %cst_18 : f32 to vector<64x1xf32>
    %29 = arith.divf %27, %28 : vector<64x1xf32>
    %30 = vector.broadcast %22 : vector<64x1xf32> to vector<64x32xf32>
    %31 = arith.subf %18, %30 : vector<64x32xf32>
    %cst_19 = arith.constant 9.99999974E-6 : f32
    %32 = vector.broadcast %cst_19 : f32 to vector<64x1xf32>
    %33 = arith.addf %29, %32 : vector<64x1xf32>
    %34 = math.rsqrt %33 : vector<64x1xf32>
    %35 = vector.broadcast %34 : vector<64x1xf32> to vector<64x32xf32>
    %36 = arith.mulf %31, %35 : vector<64x32xf32>
    %c0_20 = arith.constant 0 : index
    %c0_21 = arith.constant 0 : index
    %37 = vector.load %arg7[%c0_20, %c0_21] : memref<1x32xf32, #tpu.memory_space<vmem>>, vector<1x32xf32>
    %38 = vector.broadcast %37 : vector<1x32xf32> to vector<64x32xf32>
    %39 = arith.mulf %36, %38 : vector<64x32xf32>
    %c0_22 = arith.constant 0 : index
    %c0_23 = arith.constant 0 : index
    %40 = vector.load %arg8[%c0_22, %c0_23] : memref<1x32xf32, #tpu.memory_space<vmem>>, vector<1x32xf32>
    %41 = vector.broadcast %40 : vector<1x32xf32> to vector<64x32xf32>
    %42 = arith.addf %39, %41 : vector<64x32xf32>
    %c0_24 = arith.constant 0 : index
    %c0_25 = arith.constant 0 : index
    %43 = vector.load %arg10[%c0_24, %c0_25] : memref<64x32xf32, #tpu.memory_space<vmem>>, vector<64x32xf32>
    tpu.vector_store %arg10[%c0_24, %c0_25], %42 {strides = array<i32>} : memref<64x32xf32, #tpu.memory_space<vmem>>, vector<64x32xf32>,
    return
  }
  func.func @transform_0(%arg0: i32) -> (i32, i32) {
    %c0_i32 = arith.constant 0 : i32
    %c0_i32_0 = arith.constant 0 : i32
    return %arg0, %c0_i32 : i32, i32
  }
  func.func @transform_1(%arg0: i32) -> (i32, i32) {
    %c0_i32 = arith.constant 0 : i32
    %c0_i32_0 = arith.constant 0 : i32
    return %arg0, %c0_i32 : i32, i32
  }
  func.func @transform_2(%arg0: i32) -> (i32, i32) {
    %c0_i32 = arith.constant 0 : i32
    %c0_i32_0 = arith.constant 0 : i32
    %c0_i32_1 = arith.constant 0 : i32
    return %c0_i32, %c0_i32_0 : i32, i32
  }
  func.func @transform_3(%arg0: i32) -> (i32, i32) {
    %c0_i32 = arith.constant 0 : i32
    %c0_i32_0 = arith.constant 0 : i32
    %c0_i32_1 = arith.constant 0 : i32
    return %c0_i32, %c0_i32_0 : i32, i32
  }
  func.func @transform_4(%arg0: i32) -> (i32, i32) {
    %c0_i32 = arith.constant 0 : i32
    %c0_i32_0 = arith.constant 0 : i32
    %c0_i32_1 = arith.constant 0 : i32
    return %c0_i32, %c0_i32_0 : i32, i32
  }
  func.func @transform_5(%arg0: i32) -> (i32, i32) {
    %c0_i32 = arith.constant 0 : i32
    %c0_i32_0 = arith.constant 0 : i32
    %c0_i32_1 = arith.constant 0 : i32
    return %c0_i32, %c0_i32_0 : i32, i32
  }
  func.func @transform_6(%arg0: i32) -> (i32, i32) {
    %c0_i32 = arith.constant 0 : i32
    %c0_i32_0 = arith.constant 0 : i32
    %c0_i32_1 = arith.constant 0 : i32
    return %c0_i32, %c0_i32_0 : i32, i32
  }
  func.func @transform_7(%arg0: i32) -> (i32, i32) {
    %c0_i32 = arith.constant 0 : i32
    %c0_i32_0 = arith.constant 0 : i32
    %c0_i32_1 = arith.constant 0 : i32
    return %c0_i32, %c0_i32_0 : i32, i32
  }
  func.func @transform_8(%arg0: i32) -> (i32, i32) {
    %c0_i32 = arith.constant 0 : i32
    %c0_i32_0 = arith.constant 0 : i32
    return %arg0, %c0_i32 : i32, i32
  }
  func.func @transform_9(%arg0: i32) -> (i32, i32) {
    %c0_i32 = arith.constant 0 : i32
    %c0_i32_0 = arith.constant 0 : i32
    return %arg0, %c0_i32 : i32, i32
  }
}

module attributes {stable_mosaic.version = 11 : i64} {
  func.func @_dan_edge_kernel(%arg0: i32, %arg1: memref<1x128xi32, #tpu.memory_space<vmem>>, %arg2: memref<1x128xi32, #tpu.memory_space<vmem>>, %arg3: memref<128x3xf32, #tpu.memory_space<vmem>>, %arg4: memref<64x64xbf16, #tpu.memory_space<vmem>>, %arg5: memref<32x96xf32, #tpu.memory_space<vmem>>, %arg6: memref<64x96xf32, #tpu.memory_space<vmem>>, %arg7: memref<1x32xf32, #tpu.memory_space<vmem>>) attributes {dimension_semantics = [#tpu.dimension_semantics<arbitrary>], iteration_bounds = array<i64: 1>, scalar_prefetch = 0 : i64, scratch_operands = 1 : i64, tpu.core_type = #tpu.core_type<tc>, window_params = [{transform_indices = @transform_0, window_bounds = array<i64: 1, 128>}, {transform_indices = @transform_1, window_bounds = array<i64: 1, 128>}, {transform_indices = @transform_2, window_bounds = array<i64: 128, 3>}, {pipeline_mode = #tpu.pipeline_mode<synchronous>, transform_indices = @transform_3, window_bounds = array<i64: 64, 64>}, {pipeline_mode = #tpu.pipeline_mode<synchronous>, transform_indices = @transform_4, window_bounds = array<i64: 32, 96>}, {pipeline_mode = #tpu.pipeline_mode<synchronous>, transform_indices = @transform_5, window_bounds = array<i64: 64, 96>}]} {
    %c0_i32 = arith.constant 0 : i32
    %0 = arith.cmpi eq, %arg0, %c0_i32 : i32
    %1 = arith.extui %0 : i1 to i32
    %c0_i32_0 = arith.constant 0 : i32
    %2 = arith.cmpi ne, %1, %c0_i32_0 : i32
    scf.if %2 {
      %cst_29 = arith.constant 0.000000e+00 : f32
      %69 = vector.broadcast %cst_29 : f32 to vector<64x96xf32>
      %c0_30 = arith.constant 0 : index
      %c0_31 = arith.constant 0 : index
      %70 = vector.load %arg6[%c0_30, %c0_31] : memref<64x96xf32, #tpu.memory_space<vmem>>, vector<64x96xf32>
      tpu.vector_store %arg6[%c0_30, %c0_31], %69 {strides = array<i32>} : memref<64x96xf32, #tpu.memory_space<vmem>>, vector<64x96xf32>,
      %cst_32 = arith.constant -1.000000e+30 : f32
      %71 = vector.broadcast %cst_32 : f32 to vector<1x32xf32>
      %c0_33 = arith.constant 0 : index
      %c0_34 = arith.constant 0 : index
      %72 = vector.load %arg7[%c0_33, %c0_34] : memref<1x32xf32, #tpu.memory_space<vmem>>, vector<1x32xf32>
      tpu.vector_store %arg7[%c0_33, %c0_34], %71 {strides = array<i32>} : memref<1x32xf32, #tpu.memory_space<vmem>>, vector<1x32xf32>,
    } else {
    }
    %3 = tpu.iota {dimensions = array<i32: 1>} : vector<1x128xi32>
    %c128_i32 = arith.constant 128 : i32
    %4 = arith.muli %arg0, %c128_i32 : i32
    %5 = vector.broadcast %4 : i32 to vector<1x128xi32>
    %6 = arith.addi %5, %3 : vector<1x128xi32>
    %c128_i32_1 = arith.constant 128 : i32
    %7 = vector.broadcast %c128_i32_1 : i32 to vector<1x128xi32>
    %8 = arith.cmpi slt, %6, %7 : vector<1x128xi32>
    %9 = tpu.iota {dimensions = array<i32: 0>} : vector<64x128xi32>
    %c0 = arith.constant 0 : index
    %c0_2 = arith.constant 0 : index
    %10 = vector.load %arg1[%c0, %c0_2] : memref<1x128xi32, #tpu.memory_space<vmem>>, vector<1x128xi32>
    %11 = vector.broadcast %10 : vector<1x128xi32> to vector<64x128xi32>
    %12 = arith.cmpi eq, %9, %11 : vector<64x128xi32>
    %13 = vector.broadcast %8 : vector<1x128xi1> to vector<64x128xi1>
    %14 = arith.andi %12, %13 : vector<64x128xi1>
    %cst = arith.constant 1.000000e+00 : f32
    %cst_3 = arith.constant 0.000000e+00 : f32
    %15 = vector.broadcast %cst : f32 to vector<64x128xf32>
    %16 = vector.broadcast %cst_3 : f32 to vector<64x128xf32>
    %17 = arith.select %14, %15, %16 : vector<64x128xi1>, vector<64x128xf32>
    %18 = arith.truncf %17 : vector<64x128xf32> to vector<64x128xbf16>
    %c0_4 = arith.constant 0 : index
    %c0_5 = arith.constant 0 : index
    %19 = vector.load %arg2[%c0_4, %c0_5] : memref<1x128xi32, #tpu.memory_space<vmem>>, vector<1x128xi32>
    %20 = vector.broadcast %19 : vector<1x128xi32> to vector<64x128xi32>
    %21 = arith.cmpi eq, %9, %20 : vector<64x128xi32>
    %22 = vector.broadcast %8 : vector<1x128xi1> to vector<64x128xi1>
    %23 = arith.andi %21, %22 : vector<64x128xi1>
    %cst_6 = arith.constant 1.000000e+00 : f32
    %cst_7 = arith.constant 0.000000e+00 : f32
    %24 = vector.broadcast %cst_6 : f32 to vector<64x128xf32>
    %25 = vector.broadcast %cst_7 : f32 to vector<64x128xf32>
    %26 = arith.select %23, %24, %25 : vector<64x128xi1>, vector<64x128xf32>
    %27 = arith.truncf %26 : vector<64x128xf32> to vector<64x128xbf16>
    %c0_8 = arith.constant 0 : index
    %c0_9 = arith.constant 0 : index
    %28 = vector.load %arg4[%c0_8, %c0_9] : memref<64x64xbf16, #tpu.memory_space<vmem>>, vector<64x64xbf16>
    %cst_10 = arith.constant dense<0.000000e+00> : vector<128x64xf32>
    %29 = tpu.matmul %18, %28, %cst_10 {dimension_numbers = #tpu.dot_dimension_numbers<[0], [0], [1], [1], [0, 1, 1, 1], [], []>} : vector<64x128xbf16>, vector<64x64xbf16>, vector<128x64xf32> -> vector<128x64xf32>
    %30 = vector.extract_strided_slice %29 {offsets = [0, 0], sizes = [128, 32], strides = [1, 1]} : vector<128x64xf32> to vector<128x32xf32>
    %31 = vector.extract_strided_slice %29 {offsets = [0, 32], sizes = [128, 32], strides = [1, 1]} : vector<128x64xf32> to vector<128x32xf32>
    %c0_11 = arith.constant 0 : index
    %c0_12 = arith.constant 0 : index
    %32 = vector.load %arg5[%c0_11, %c0_12] : memref<32x96xf32, #tpu.memory_space<vmem>>, vector<32x96xf32>
    %cst_13 = arith.constant dense<0.000000e+00> : vector<128x96xf32>
    %33 = tpu.matmul %30, %32, %cst_13 {dimension_numbers = #tpu.dot_dimension_numbers<[1], [0], [0], [1], [0, 0, 1, 1], [], []>} : vector<128x32xf32>, vector<32x96xf32>, vector<128x96xf32> -> vector<128x96xf32>
    %c0_14 = arith.constant 0 : index
    %c0_15 = arith.constant 0 : index
    %34 = vector.load %arg3[%c0_14, %c0_15] : memref<128x3xf32, #tpu.memory_space<vmem>>, vector<128x1xf32>
    %35 = vector.extract_strided_slice %33 {offsets = [0, 0], sizes = [128, 32], strides = [1, 1]} : vector<128x96xf32> to vector<128x32xf32>
    %36 = vector.broadcast %34 : vector<128x1xf32> to vector<128x32xf32>
    %37 = arith.mulf %36, %35 : vector<128x32xf32>
    %c0_16 = arith.constant 0 : index
    %c1 = arith.constant 1 : index
    %38 = vector.load %arg3[%c0_16, %c1] : memref<128x3xf32, #tpu.memory_space<vmem>>, vector<128x1xf32>
    %39 = vector.extract_strided_slice %33 {offsets = [0, 32], sizes = [128, 32], strides = [1, 1]} : vector<128x96xf32> to vector<128x32xf32>
    %40 = vector.broadcast %38 : vector<128x1xf32> to vector<128x32xf32>
    %41 = arith.mulf %40, %39 : vector<128x32xf32>
    %42 = arith.addf %37, %41 : vector<128x32xf32>
    %c0_17 = arith.constant 0 : index
    %c2 = arith.constant 2 : index
    %43 = vector.load %arg3[%c0_17, %c2] : memref<128x3xf32, #tpu.memory_space<vmem>>, vector<128x1xf32>
    %44 = vector.extract_strided_slice %33 {offsets = [0, 64], sizes = [128, 32], strides = [1, 1]} : vector<128x96xf32> to vector<128x32xf32>
    %45 = vector.broadcast %43 : vector<128x1xf32> to vector<128x32xf32>
    %46 = arith.mulf %45, %44 : vector<128x32xf32>
    %47 = arith.addf %42, %46 : vector<128x32xf32>
    %c0_18 = arith.constant 0 : index
    %c0_19 = arith.constant 0 : index
    %48 = vector.load %arg7[%c0_18, %c0_19] : memref<1x32xf32, #tpu.memory_space<vmem>>, vector<1x32xf32>
    %cst_20 = arith.constant dense<0xFF800000> : vector<32xf32>
    %49 = vector.multi_reduction <maximumf>, %47, %cst_20 [0] : vector<128x32xf32> to vector<32xf32>
    %50 = vector.shape_cast %49 : vector<32xf32> to vector<1x32xf32>
    %51 = arith.maximumf %48, %50 : vector<1x32xf32>
    %52 = arith.subf %48, %51 : vector<1x32xf32>
    %53 = math.exp %52 : vector<1x32xf32>
    %54 = vector.broadcast %51 : vector<1x32xf32> to vector<128x32xf32>
    %55 = arith.subf %47, %54 : vector<128x32xf32>
    %56 = math.exp %55 : vector<128x32xf32>
    %c0_21 = arith.constant 0 : index
    %c0_22 = arith.constant 0 : index
    %57 = vector.load %arg7[%c0_21, %c0_22] : memref<1x32xf32, #tpu.memory_space<vmem>>, vector<1x32xf32>
    tpu.vector_store %arg7[%c0_21, %c0_22], %51 {strides = array<i32>} : memref<1x32xf32, #tpu.memory_space<vmem>>, vector<1x32xf32>,
    %58 = arith.mulf %47, %56 : vector<128x32xf32>
    %59 = tpu.concatenate %31, %58, %56 in 1 : vector<128x32xf32>, vector<128x32xf32>, vector<128x32xf32> -> vector<128x96xf32>
    %60 = arith.truncf %59 : vector<128x96xf32> to vector<128x96xbf16>
    %cst_23 = arith.constant dense<0.000000e+00> : vector<64x96xf32>
    %61 = tpu.matmul %27, %60, %cst_23 {dimension_numbers = #tpu.dot_dimension_numbers<[1], [0], [0], [1], [0, 0, 1, 1], [], []>} : vector<64x128xbf16>, vector<128x96xbf16>, vector<64x96xf32> -> vector<64x96xf32>
    %cst_24 = arith.constant 1.000000e+00 : f32
    %62 = vector.broadcast %cst_24 : f32 to vector<1x32xf32>
    %63 = tpu.concatenate %62, %53, %53 in 1 : vector<1x32xf32>, vector<1x32xf32>, vector<1x32xf32> -> vector<1x96xf32>
    %c0_25 = arith.constant 0 : index
    %c0_26 = arith.constant 0 : index
    %64 = vector.load %arg6[%c0_25, %c0_26] : memref<64x96xf32, #tpu.memory_space<vmem>>, vector<64x96xf32>
    %65 = vector.broadcast %63 : vector<1x96xf32> to vector<64x96xf32>
    %66 = arith.mulf %64, %65 : vector<64x96xf32>
    %67 = arith.addf %66, %61 : vector<64x96xf32>
    %c0_27 = arith.constant 0 : index
    %c0_28 = arith.constant 0 : index
    %68 = vector.load %arg6[%c0_27, %c0_28] : memref<64x96xf32, #tpu.memory_space<vmem>>, vector<64x96xf32>
    tpu.vector_store %arg6[%c0_27, %c0_28], %67 {strides = array<i32>} : memref<64x96xf32, #tpu.memory_space<vmem>>, vector<64x96xf32>,
    return
  }
  func.func @transform_0(%arg0: i32) -> (i32, i32) {
    %c0_i32 = arith.constant 0 : i32
    %c0_i32_0 = arith.constant 0 : i32
    return %c0_i32, %arg0 : i32, i32
  }
  func.func @transform_1(%arg0: i32) -> (i32, i32) {
    %c0_i32 = arith.constant 0 : i32
    %c0_i32_0 = arith.constant 0 : i32
    return %c0_i32, %arg0 : i32, i32
  }
  func.func @transform_2(%arg0: i32) -> (i32, i32) {
    %c0_i32 = arith.constant 0 : i32
    %c0_i32_0 = arith.constant 0 : i32
    return %arg0, %c0_i32 : i32, i32
  }
  func.func @transform_3(%arg0: i32) -> (i32, i32) {
    %c0_i32 = arith.constant 0 : i32
    %c0_i32_0 = arith.constant 0 : i32
    %c0_i32_1 = arith.constant 0 : i32
    return %c0_i32, %c0_i32_0 : i32, i32
  }
  func.func @transform_4(%arg0: i32) -> (i32, i32) {
    %c0_i32 = arith.constant 0 : i32
    %c0_i32_0 = arith.constant 0 : i32
    %c0_i32_1 = arith.constant 0 : i32
    return %c0_i32, %c0_i32_0 : i32, i32
  }
  func.func @transform_5(%arg0: i32) -> (i32, i32) {
    %c0_i32 = arith.constant 0 : i32
    %c0_i32_0 = arith.constant 0 : i32
    %c0_i32_1 = arith.constant 0 : i32
    return %c0_i32, %c0_i32_0 : i32, i32
  }
}

module attributes {stable_mosaic.version = 11 : i64} {
  func.func @_dan_final_kernel(%arg0: i32, %arg1: memref<64x32xf32, #tpu.memory_space<vmem>>, %arg2: memref<64x96xf32, #tpu.memory_space<vmem>>, %arg3: memref<64x1xf32, #tpu.memory_space<vmem>>, %arg4: memref<32x16xf32, #tpu.memory_space<vmem>>, %arg5: memref<1x16xf32, #tpu.memory_space<vmem>>, %arg6: memref<1x16xf32, #tpu.memory_space<vmem>>, %arg7: memref<1x16xf32, #tpu.memory_space<vmem>>, %arg8: memref<64x16xf32, #tpu.memory_space<vmem>>) attributes {dimension_semantics = [#tpu.dimension_semantics<parallel>], iteration_bounds = array<i64: 1>, scalar_prefetch = 0 : i64, scratch_operands = 0 : i64, tpu.core_type = #tpu.core_type<tc>, window_params = [{transform_indices = @transform_0, window_bounds = array<i64: 64, 32>}, {transform_indices = @transform_1, window_bounds = array<i64: 64, 96>}, {transform_indices = @transform_2, window_bounds = array<i64: 64, 1>}, {pipeline_mode = #tpu.pipeline_mode<synchronous>, transform_indices = @transform_3, window_bounds = array<i64: 32, 16>}, {pipeline_mode = #tpu.pipeline_mode<synchronous>, transform_indices = @transform_4, window_bounds = array<i64: 1, 16>}, {pipeline_mode = #tpu.pipeline_mode<synchronous>, transform_indices = @transform_5, window_bounds = array<i64: 1, 16>}, {pipeline_mode = #tpu.pipeline_mode<synchronous>, transform_indices = @transform_6, window_bounds = array<i64: 1, 16>}, {transform_indices = @transform_7, window_bounds = array<i64: 64, 16>}]} {
    %c0 = arith.constant 0 : index
    %c0_0 = arith.constant 0 : index
    %0 = vector.load %arg2[%c0, %c0_0] : memref<64x96xf32, #tpu.memory_space<vmem>>, vector<64x96xf32>
    %1 = vector.extract_strided_slice %0 {offsets = [0, 0], sizes = [64, 32], strides = [1, 1]} : vector<64x96xf32> to vector<64x32xf32>
    %2 = vector.extract_strided_slice %0 {offsets = [0, 32], sizes = [64, 32], strides = [1, 1]} : vector<64x96xf32> to vector<64x32xf32>
    %3 = vector.extract_strided_slice %0 {offsets = [0, 64], sizes = [64, 32], strides = [1, 1]} : vector<64x96xf32> to vector<64x32xf32>
    %c0_1 = arith.constant 0 : index
    %c0_2 = arith.constant 0 : index
    %4 = vector.load %arg1[%c0_1, %c0_2] : memref<64x32xf32, #tpu.memory_space<vmem>>, vector<64x32xf32>
    %c0_3 = arith.constant 0 : index
    %c0_4 = arith.constant 0 : index
    %5 = vector.load %arg3[%c0_3, %c0_4] : memref<64x1xf32, #tpu.memory_space<vmem>>, vector<64x1xf32>
    %6 = vector.broadcast %5 : vector<64x1xf32> to vector<64x32xf32>
    %7 = arith.mulf %6, %1 : vector<64x32xf32>
    %8 = arith.addf %4, %7 : vector<64x32xf32>
    %cst = arith.constant 1.000000e-16 : f32
    %9 = vector.broadcast %cst : f32 to vector<64x32xf32>
    %10 = arith.addf %3, %9 : vector<64x32xf32>
    %11 = tpu.reciprocal %10 {approx = true} : vector<64x32xf32> -> vector<64x32xf32>
    %12 = arith.mulf %2, %11 : vector<64x32xf32>
    %cst_5 = arith.constant 0.000000e+00 : f32
    %13 = vector.broadcast %cst_5 : f32 to vector<64x32xf32>
    %14 = arith.maximumf %12, %13 : vector<64x32xf32>
    %cst_6 = arith.constant 1.000000e-01 : f32
    %15 = vector.broadcast %cst_6 : f32 to vector<64x32xf32>
    %16 = arith.mulf %15, %14 : vector<64x32xf32>
    %17 = arith.addf %8, %16 : vector<64x32xf32>
    %c0_7 = arith.constant 0 : index
    %c0_8 = arith.constant 0 : index
    %18 = vector.load %arg4[%c0_7, %c0_8] : memref<32x16xf32, #tpu.memory_space<vmem>>, vector<32x16xf32>
    %cst_9 = arith.constant dense<0.000000e+00> : vector<64x16xf32>
    %19 = tpu.matmul %17, %18, %cst_9 {dimension_numbers = #tpu.dot_dimension_numbers<[1], [0], [0], [1], [0, 0, 1, 1], [], []>} : vector<64x32xf32>, vector<32x16xf32>, vector<64x16xf32> -> vector<64x16xf32>
    %c0_10 = arith.constant 0 : index
    %c0_11 = arith.constant 0 : index
    %20 = vector.load %arg5[%c0_10, %c0_11] : memref<1x16xf32, #tpu.memory_space<vmem>>, vector<1x16xf32>
    %21 = vector.broadcast %20 : vector<1x16xf32> to vector<64x16xf32>
    %22 = arith.addf %19, %21 : vector<64x16xf32>
    %cst_12 = arith.constant dense<0.000000e+00> : vector<64xf32>
    %23 = vector.multi_reduction <add>, %22, %cst_12 [1] : vector<64x16xf32> to vector<64xf32>
    %24 = vector.shape_cast %23 : vector<64xf32> to vector<64x1xf32>
    %cst_13 = arith.constant 1.600000e+01 : f32
    %25 = vector.broadcast %cst_13 : f32 to vector<64x1xf32>
    %26 = arith.divf %24, %25 : vector<64x1xf32>
    %27 = vector.broadcast %26 : vector<64x1xf32> to vector<64x16xf32>
    %28 = arith.subf %22, %27 : vector<64x16xf32>
    %29 = arith.mulf %28, %28 : vector<64x16xf32>
    %cst_14 = arith.constant dense<0.000000e+00> : vector<64xf32>
    %30 = vector.multi_reduction <add>, %29, %cst_14 [1] : vector<64x16xf32> to vector<64xf32>
    %31 = vector.shape_cast %30 : vector<64xf32> to vector<64x1xf32>
    %cst_15 = arith.constant 1.600000e+01 : f32
    %32 = vector.broadcast %cst_15 : f32 to vector<64x1xf32>
    %33 = arith.divf %31, %32 : vector<64x1xf32>
    %34 = vector.broadcast %26 : vector<64x1xf32> to vector<64x16xf32>
    %35 = arith.subf %22, %34 : vector<64x16xf32>
    %cst_16 = arith.constant 9.99999974E-6 : f32
    %36 = vector.broadcast %cst_16 : f32 to vector<64x1xf32>
    %37 = arith.addf %33, %36 : vector<64x1xf32>
    %38 = math.rsqrt %37 : vector<64x1xf32>
    %39 = vector.broadcast %38 : vector<64x1xf32> to vector<64x16xf32>
    %40 = arith.mulf %35, %39 : vector<64x16xf32>
    %c0_17 = arith.constant 0 : index
    %c0_18 = arith.constant 0 : index
    %41 = vector.load %arg6[%c0_17, %c0_18] : memref<1x16xf32, #tpu.memory_space<vmem>>, vector<1x16xf32>
    %42 = vector.broadcast %41 : vector<1x16xf32> to vector<64x16xf32>
    %43 = arith.mulf %40, %42 : vector<64x16xf32>
    %c0_19 = arith.constant 0 : index
    %c0_20 = arith.constant 0 : index
    %44 = vector.load %arg7[%c0_19, %c0_20] : memref<1x16xf32, #tpu.memory_space<vmem>>, vector<1x16xf32>
    %45 = vector.broadcast %44 : vector<1x16xf32> to vector<64x16xf32>
    %46 = arith.addf %43, %45 : vector<64x16xf32>
    %c0_21 = arith.constant 0 : index
    %c0_22 = arith.constant 0 : index
    %47 = vector.load %arg8[%c0_21, %c0_22] : memref<64x16xf32, #tpu.memory_space<vmem>>, vector<64x16xf32>
    tpu.vector_store %arg8[%c0_21, %c0_22], %46 {strides = array<i32>} : memref<64x16xf32, #tpu.memory_space<vmem>>, vector<64x16xf32>,
    return
  }
  func.func @transform_0(%arg0: i32) -> (i32, i32) {
    %c0_i32 = arith.constant 0 : i32
    %c0_i32_0 = arith.constant 0 : i32
    return %arg0, %c0_i32 : i32, i32
  }
  func.func @transform_1(%arg0: i32) -> (i32, i32) {
    %c0_i32 = arith.constant 0 : i32
    %c0_i32_0 = arith.constant 0 : i32
    return %arg0, %c0_i32 : i32, i32
  }
  func.func @transform_2(%arg0: i32) -> (i32, i32) {
    %c0_i32 = arith.constant 0 : i32
    %c0_i32_0 = arith.constant 0 : i32
    return %arg0, %c0_i32 : i32, i32
  }
  func.func @transform_3(%arg0: i32) -> (i32, i32) {
    %c0_i32 = arith.constant 0 : i32
    %c0_i32_0 = arith.constant 0 : i32
    %c0_i32_1 = arith.constant 0 : i32
    return %c0_i32, %c0_i32_0 : i32, i32
  }
  func.func @transform_4(%arg0: i32) -> (i32, i32) {
    %c0_i32 = arith.constant 0 : i32
    %c0_i32_0 = arith.constant 0 : i32
    %c0_i32_1 = arith.constant 0 : i32
    return %c0_i32, %c0_i32_0 : i32, i32
  }
  func.func @transform_5(%arg0: i32) -> (i32, i32) {
    %c0_i32 = arith.constant 0 : i32
    %c0_i32_0 = arith.constant 0 : i32
    %c0_i32_1 = arith.constant 0 : i32
    return %c0_i32, %c0_i32_0 : i32, i32
  }
  func.func @transform_6(%arg0: i32) -> (i32, i32) {
    %c0_i32 = arith.constant 0 : i32
    %c0_i32_0 = arith.constant 0 : i32
    %c0_i32_1 = arith.constant 0 : i32
    return %c0_i32, %c0_i32_0 : i32, i32
  }
  func.func @transform_7(%arg0: i32) -> (i32, i32) {
    %c0_i32 = arith.constant 0 : i32
    %c0_i32_0 = arith.constant 0 : i32
    return %arg0, %c0_i32 : i32, i32
  }
}

module attributes {stable_mosaic.version = 11 : i64} {
  func.func @_dan_node_kernel(%arg0: i32, %arg1: memref<64x16xf32, #tpu.memory_space<vmem>>, %arg2: memref<64x1xf32, #tpu.memory_space<vmem>>, %arg3: memref<16x16xf32, #tpu.memory_space<vmem>>, %arg4: memref<1x16xf32, #tpu.memory_space<vmem>>, %arg5: memref<16x16xf32, #tpu.memory_space<vmem>>, %arg6: memref<1x16xf32, #tpu.memory_space<vmem>>, %arg7: memref<1x16xf32, #tpu.memory_space<vmem>>, %arg8: memref<1x16xf32, #tpu.memory_space<vmem>>, %arg9: memref<64x32xbf16, #tpu.memory_space<vmem>>, %arg10: memref<64x16xf32, #tpu.memory_space<vmem>>) attributes {dimension_semantics = [#tpu.dimension_semantics<parallel>], iteration_bounds = array<i64: 1>, scalar_prefetch = 0 : i64, scratch_operands = 0 : i64, tpu.core_type = #tpu.core_type<tc>, window_params = [{transform_indices = @transform_0, window_bounds = array<i64: 64, 16>}, {transform_indices = @transform_1, window_bounds = array<i64: 64, 1>}, {pipeline_mode = #tpu.pipeline_mode<synchronous>, transform_indices = @transform_2, window_bounds = array<i64: 16, 16>}, {pipeline_mode = #tpu.pipeline_mode<synchronous>, transform_indices = @transform_3, window_bounds = array<i64: 1, 16>}, {pipeline_mode = #tpu.pipeline_mode<synchronous>, transform_indices = @transform_4, window_bounds = array<i64: 16, 16>}, {pipeline_mode = #tpu.pipeline_mode<synchronous>, transform_indices = @transform_5, window_bounds = array<i64: 1, 16>}, {pipeline_mode = #tpu.pipeline_mode<synchronous>, transform_indices = @transform_6, window_bounds = array<i64: 1, 16>}, {pipeline_mode = #tpu.pipeline_mode<synchronous>, transform_indices = @transform_7, window_bounds = array<i64: 1, 16>}, {transform_indices = @transform_8, window_bounds = array<i64: 64, 32>}, {transform_indices = @transform_9, window_bounds = array<i64: 64, 16>}]} {
    %c0 = arith.constant 0 : index
    %c0_0 = arith.constant 0 : index
    %0 = vector.load %arg1[%c0, %c0_0] : memref<64x16xf32, #tpu.memory_space<vmem>>, vector<64x16xf32>
    %c0_1 = arith.constant 0 : index
    %c0_2 = arith.constant 0 : index
    %1 = vector.load %arg3[%c0_1, %c0_2] : memref<16x16xf32, #tpu.memory_space<vmem>>, vector<16x16xf32>
    %cst = arith.constant dense<0.000000e+00> : vector<64x16xf32>
    %2 = tpu.matmul %0, %1, %cst {dimension_numbers = #tpu.dot_dimension_numbers<[1], [0], [0], [1], [0, 0, 1, 1], [], []>} : vector<64x16xf32>, vector<16x16xf32>, vector<64x16xf32> -> vector<64x16xf32>
    %c0_3 = arith.constant 0 : index
    %c0_4 = arith.constant 0 : index
    %3 = vector.load %arg4[%c0_3, %c0_4] : memref<1x16xf32, #tpu.memory_space<vmem>>, vector<1x16xf32>
    %4 = vector.broadcast %3 : vector<1x16xf32> to vector<64x16xf32>
    %5 = arith.addf %2, %4 : vector<64x16xf32>
    %c0_5 = arith.constant 0 : index
    %c0_6 = arith.constant 0 : index
    %6 = vector.load %arg2[%c0_5, %c0_6] : memref<64x1xf32, #tpu.memory_space<vmem>>, vector<64x1xf32>
    %7 = vector.broadcast %6 : vector<64x1xf32> to vector<64x16xf32>
    %8 = arith.mulf %5, %7 : vector<64x16xf32>
    %9 = tpu.concatenate %5, %8 in 1 : vector<64x16xf32>, vector<64x16xf32> -> vector<64x32xf32>
    %10 = arith.truncf %9 : vector<64x32xf32> to vector<64x32xbf16>
    %c0_7 = arith.constant 0 : index
    %c0_8 = arith.constant 0 : index
    %11 = vector.load %arg9[%c0_7, %c0_8] : memref<64x32xbf16, #tpu.memory_space<vmem>>, vector<64x32xbf16>
    tpu.vector_store %arg9[%c0_7, %c0_8], %10 {strides = array<i32>} : memref<64x32xbf16, #tpu.memory_space<vmem>>, vector<64x32xbf16>,
    %c0_9 = arith.constant 0 : index
    %c0_10 = arith.constant 0 : index
    %12 = vector.load %arg5[%c0_9, %c0_10] : memref<16x16xf32, #tpu.memory_space<vmem>>, vector<16x16xf32>
    %cst_11 = arith.constant dense<0.000000e+00> : vector<64x16xf32>
    %13 = tpu.matmul %5, %12, %cst_11 {dimension_numbers = #tpu.dot_dimension_numbers<[1], [0], [0], [1], [0, 0, 1, 1], [], []>} : vector<64x16xf32>, vector<16x16xf32>, vector<64x16xf32> -> vector<64x16xf32>
    %c0_12 = arith.constant 0 : index
    %c0_13 = arith.constant 0 : index
    %14 = vector.load %arg6[%c0_12, %c0_13] : memref<1x16xf32, #tpu.memory_space<vmem>>, vector<1x16xf32>
    %15 = vector.broadcast %14 : vector<1x16xf32> to vector<64x16xf32>
    %16 = arith.addf %13, %15 : vector<64x16xf32>
    %cst_14 = arith.constant 0.000000e+00 : f32
    %17 = vector.broadcast %cst_14 : f32 to vector<64x16xf32>
    %18 = arith.maximumf %16, %17 : vector<64x16xf32>
    %cst_15 = arith.constant dense<0.000000e+00> : vector<64xf32>
    %19 = vector.multi_reduction <add>, %18, %cst_15 [1] : vector<64x16xf32> to vector<64xf32>
    %20 = vector.shape_cast %19 : vector<64xf32> to vector<64x1xf32>
    %cst_16 = arith.constant 1.600000e+01 : f32
    %21 = vector.broadcast %cst_16 : f32 to vector<64x1xf32>
    %22 = arith.divf %20, %21 : vector<64x1xf32>
    %23 = vector.broadcast %22 : vector<64x1xf32> to vector<64x16xf32>
    %24 = arith.subf %18, %23 : vector<64x16xf32>
    %25 = arith.mulf %24, %24 : vector<64x16xf32>
    %cst_17 = arith.constant dense<0.000000e+00> : vector<64xf32>
    %26 = vector.multi_reduction <add>, %25, %cst_17 [1] : vector<64x16xf32> to vector<64xf32>
    %27 = vector.shape_cast %26 : vector<64xf32> to vector<64x1xf32>
    %cst_18 = arith.constant 1.600000e+01 : f32
    %28 = vector.broadcast %cst_18 : f32 to vector<64x1xf32>
    %29 = arith.divf %27, %28 : vector<64x1xf32>
    %30 = vector.broadcast %22 : vector<64x1xf32> to vector<64x16xf32>
    %31 = arith.subf %18, %30 : vector<64x16xf32>
    %cst_19 = arith.constant 9.99999974E-6 : f32
    %32 = vector.broadcast %cst_19 : f32 to vector<64x1xf32>
    %33 = arith.addf %29, %32 : vector<64x1xf32>
    %34 = math.rsqrt %33 : vector<64x1xf32>
    %35 = vector.broadcast %34 : vector<64x1xf32> to vector<64x16xf32>
    %36 = arith.mulf %31, %35 : vector<64x16xf32>
    %c0_20 = arith.constant 0 : index
    %c0_21 = arith.constant 0 : index
    %37 = vector.load %arg7[%c0_20, %c0_21] : memref<1x16xf32, #tpu.memory_space<vmem>>, vector<1x16xf32>
    %38 = vector.broadcast %37 : vector<1x16xf32> to vector<64x16xf32>
    %39 = arith.mulf %36, %38 : vector<64x16xf32>
    %c0_22 = arith.constant 0 : index
    %c0_23 = arith.constant 0 : index
    %40 = vector.load %arg8[%c0_22, %c0_23] : memref<1x16xf32, #tpu.memory_space<vmem>>, vector<1x16xf32>
    %41 = vector.broadcast %40 : vector<1x16xf32> to vector<64x16xf32>
    %42 = arith.addf %39, %41 : vector<64x16xf32>
    %c0_24 = arith.constant 0 : index
    %c0_25 = arith.constant 0 : index
    %43 = vector.load %arg10[%c0_24, %c0_25] : memref<64x16xf32, #tpu.memory_space<vmem>>, vector<64x16xf32>
    tpu.vector_store %arg10[%c0_24, %c0_25], %42 {strides = array<i32>} : memref<64x16xf32, #tpu.memory_space<vmem>>, vector<64x16xf32>,
    return
  }
  func.func @transform_0(%arg0: i32) -> (i32, i32) {
    %c0_i32 = arith.constant 0 : i32
    %c0_i32_0 = arith.constant 0 : i32
    return %arg0, %c0_i32 : i32, i32
  }
  func.func @transform_1(%arg0: i32) -> (i32, i32) {
    %c0_i32 = arith.constant 0 : i32
    %c0_i32_0 = arith.constant 0 : i32
    return %arg0, %c0_i32 : i32, i32
  }
  func.func @transform_2(%arg0: i32) -> (i32, i32) {
    %c0_i32 = arith.constant 0 : i32
    %c0_i32_0 = arith.constant 0 : i32
    %c0_i32_1 = arith.constant 0 : i32
    return %c0_i32, %c0_i32_0 : i32, i32
  }
  func.func @transform_3(%arg0: i32) -> (i32, i32) {
    %c0_i32 = arith.constant 0 : i32
    %c0_i32_0 = arith.constant 0 : i32
    %c0_i32_1 = arith.constant 0 : i32
    return %c0_i32, %c0_i32_0 : i32, i32
  }
  func.func @transform_4(%arg0: i32) -> (i32, i32) {
    %c0_i32 = arith.constant 0 : i32
    %c0_i32_0 = arith.constant 0 : i32
    %c0_i32_1 = arith.constant 0 : i32
    return %c0_i32, %c0_i32_0 : i32, i32
  }
  func.func @transform_5(%arg0: i32) -> (i32, i32) {
    %c0_i32 = arith.constant 0 : i32
    %c0_i32_0 = arith.constant 0 : i32
    %c0_i32_1 = arith.constant 0 : i32
    return %c0_i32, %c0_i32_0 : i32, i32
  }
  func.func @transform_6(%arg0: i32) -> (i32, i32) {
    %c0_i32 = arith.constant 0 : i32
    %c0_i32_0 = arith.constant 0 : i32
    %c0_i32_1 = arith.constant 0 : i32
    return %c0_i32, %c0_i32_0 : i32, i32
  }
  func.func @transform_7(%arg0: i32) -> (i32, i32) {
    %c0_i32 = arith.constant 0 : i32
    %c0_i32_0 = arith.constant 0 : i32
    %c0_i32_1 = arith.constant 0 : i32
    return %c0_i32, %c0_i32_0 : i32, i32
  }
  func.func @transform_8(%arg0: i32) -> (i32, i32) {
    %c0_i32 = arith.constant 0 : i32
    %c0_i32_0 = arith.constant 0 : i32
    return %arg0, %c0_i32 : i32, i32
  }
  func.func @transform_9(%arg0: i32) -> (i32, i32) {
    %c0_i32 = arith.constant 0 : i32
    %c0_i32_0 = arith.constant 0 : i32
    return %arg0, %c0_i32 : i32, i32
  }
}

module attributes {stable_mosaic.version = 11 : i64} {
  func.func @_dan_edge_kernel(%arg0: i32, %arg1: memref<1x128xi32, #tpu.memory_space<vmem>>, %arg2: memref<1x128xi32, #tpu.memory_space<vmem>>, %arg3: memref<128x3xf32, #tpu.memory_space<vmem>>, %arg4: memref<64x32xbf16, #tpu.memory_space<vmem>>, %arg5: memref<16x48xf32, #tpu.memory_space<vmem>>, %arg6: memref<64x48xf32, #tpu.memory_space<vmem>>, %arg7: memref<1x16xf32, #tpu.memory_space<vmem>>) attributes {dimension_semantics = [#tpu.dimension_semantics<arbitrary>], iteration_bounds = array<i64: 1>, scalar_prefetch = 0 : i64, scratch_operands = 1 : i64, tpu.core_type = #tpu.core_type<tc>, window_params = [{transform_indices = @transform_0, window_bounds = array<i64: 1, 128>}, {transform_indices = @transform_1, window_bounds = array<i64: 1, 128>}, {transform_indices = @transform_2, window_bounds = array<i64: 128, 3>}, {pipeline_mode = #tpu.pipeline_mode<synchronous>, transform_indices = @transform_3, window_bounds = array<i64: 64, 32>}, {pipeline_mode = #tpu.pipeline_mode<synchronous>, transform_indices = @transform_4, window_bounds = array<i64: 16, 48>}, {pipeline_mode = #tpu.pipeline_mode<synchronous>, transform_indices = @transform_5, window_bounds = array<i64: 64, 48>}]} {
    %c0_i32 = arith.constant 0 : i32
    %0 = arith.cmpi eq, %arg0, %c0_i32 : i32
    %1 = arith.extui %0 : i1 to i32
    %c0_i32_0 = arith.constant 0 : i32
    %2 = arith.cmpi ne, %1, %c0_i32_0 : i32
    scf.if %2 {
      %cst_29 = arith.constant 0.000000e+00 : f32
      %69 = vector.broadcast %cst_29 : f32 to vector<64x48xf32>
      %c0_30 = arith.constant 0 : index
      %c0_31 = arith.constant 0 : index
      %70 = vector.load %arg6[%c0_30, %c0_31] : memref<64x48xf32, #tpu.memory_space<vmem>>, vector<64x48xf32>
      tpu.vector_store %arg6[%c0_30, %c0_31], %69 {strides = array<i32>} : memref<64x48xf32, #tpu.memory_space<vmem>>, vector<64x48xf32>,
      %cst_32 = arith.constant -1.000000e+30 : f32
      %71 = vector.broadcast %cst_32 : f32 to vector<1x16xf32>
      %c0_33 = arith.constant 0 : index
      %c0_34 = arith.constant 0 : index
      %72 = vector.load %arg7[%c0_33, %c0_34] : memref<1x16xf32, #tpu.memory_space<vmem>>, vector<1x16xf32>
      tpu.vector_store %arg7[%c0_33, %c0_34], %71 {strides = array<i32>} : memref<1x16xf32, #tpu.memory_space<vmem>>, vector<1x16xf32>,
    } else {
    }
    %3 = tpu.iota {dimensions = array<i32: 1>} : vector<1x128xi32>
    %c128_i32 = arith.constant 128 : i32
    %4 = arith.muli %arg0, %c128_i32 : i32
    %5 = vector.broadcast %4 : i32 to vector<1x128xi32>
    %6 = arith.addi %5, %3 : vector<1x128xi32>
    %c128_i32_1 = arith.constant 128 : i32
    %7 = vector.broadcast %c128_i32_1 : i32 to vector<1x128xi32>
    %8 = arith.cmpi slt, %6, %7 : vector<1x128xi32>
    %9 = tpu.iota {dimensions = array<i32: 0>} : vector<64x128xi32>
    %c0 = arith.constant 0 : index
    %c0_2 = arith.constant 0 : index
    %10 = vector.load %arg1[%c0, %c0_2] : memref<1x128xi32, #tpu.memory_space<vmem>>, vector<1x128xi32>
    %11 = vector.broadcast %10 : vector<1x128xi32> to vector<64x128xi32>
    %12 = arith.cmpi eq, %9, %11 : vector<64x128xi32>
    %13 = vector.broadcast %8 : vector<1x128xi1> to vector<64x128xi1>
    %14 = arith.andi %12, %13 : vector<64x128xi1>
    %cst = arith.constant 1.000000e+00 : f32
    %cst_3 = arith.constant 0.000000e+00 : f32
    %15 = vector.broadcast %cst : f32 to vector<64x128xf32>
    %16 = vector.broadcast %cst_3 : f32 to vector<64x128xf32>
    %17 = arith.select %14, %15, %16 : vector<64x128xi1>, vector<64x128xf32>
    %18 = arith.truncf %17 : vector<64x128xf32> to vector<64x128xbf16>
    %c0_4 = arith.constant 0 : index
    %c0_5 = arith.constant 0 : index
    %19 = vector.load %arg2[%c0_4, %c0_5] : memref<1x128xi32, #tpu.memory_space<vmem>>, vector<1x128xi32>
    %20 = vector.broadcast %19 : vector<1x128xi32> to vector<64x128xi32>
    %21 = arith.cmpi eq, %9, %20 : vector<64x128xi32>
    %22 = vector.broadcast %8 : vector<1x128xi1> to vector<64x128xi1>
    %23 = arith.andi %21, %22 : vector<64x128xi1>
    %cst_6 = arith.constant 1.000000e+00 : f32
    %cst_7 = arith.constant 0.000000e+00 : f32
    %24 = vector.broadcast %cst_6 : f32 to vector<64x128xf32>
    %25 = vector.broadcast %cst_7 : f32 to vector<64x128xf32>
    %26 = arith.select %23, %24, %25 : vector<64x128xi1>, vector<64x128xf32>
    %27 = arith.truncf %26 : vector<64x128xf32> to vector<64x128xbf16>
    %c0_8 = arith.constant 0 : index
    %c0_9 = arith.constant 0 : index
    %28 = vector.load %arg4[%c0_8, %c0_9] : memref<64x32xbf16, #tpu.memory_space<vmem>>, vector<64x32xbf16>
    %cst_10 = arith.constant dense<0.000000e+00> : vector<128x32xf32>
    %29 = tpu.matmul %18, %28, %cst_10 {dimension_numbers = #tpu.dot_dimension_numbers<[0], [0], [1], [1], [0, 1, 1, 1], [], []>} : vector<64x128xbf16>, vector<64x32xbf16>, vector<128x32xf32> -> vector<128x32xf32>
    %30 = vector.extract_strided_slice %29 {offsets = [0, 0], sizes = [128, 16], strides = [1, 1]} : vector<128x32xf32> to vector<128x16xf32>
    %31 = vector.extract_strided_slice %29 {offsets = [0, 16], sizes = [128, 16], strides = [1, 1]} : vector<128x32xf32> to vector<128x16xf32>
    %c0_11 = arith.constant 0 : index
    %c0_12 = arith.constant 0 : index
    %32 = vector.load %arg5[%c0_11, %c0_12] : memref<16x48xf32, #tpu.memory_space<vmem>>, vector<16x48xf32>
    %cst_13 = arith.constant dense<0.000000e+00> : vector<128x48xf32>
    %33 = tpu.matmul %30, %32, %cst_13 {dimension_numbers = #tpu.dot_dimension_numbers<[1], [0], [0], [1], [0, 0, 1, 1], [], []>} : vector<128x16xf32>, vector<16x48xf32>, vector<128x48xf32> -> vector<128x48xf32>
    %c0_14 = arith.constant 0 : index
    %c0_15 = arith.constant 0 : index
    %34 = vector.load %arg3[%c0_14, %c0_15] : memref<128x3xf32, #tpu.memory_space<vmem>>, vector<128x1xf32>
    %35 = vector.extract_strided_slice %33 {offsets = [0, 0], sizes = [128, 16], strides = [1, 1]} : vector<128x48xf32> to vector<128x16xf32>
    %36 = vector.broadcast %34 : vector<128x1xf32> to vector<128x16xf32>
    %37 = arith.mulf %36, %35 : vector<128x16xf32>
    %c0_16 = arith.constant 0 : index
    %c1 = arith.constant 1 : index
    %38 = vector.load %arg3[%c0_16, %c1] : memref<128x3xf32, #tpu.memory_space<vmem>>, vector<128x1xf32>
    %39 = vector.extract_strided_slice %33 {offsets = [0, 16], sizes = [128, 16], strides = [1, 1]} : vector<128x48xf32> to vector<128x16xf32>
    %40 = vector.broadcast %38 : vector<128x1xf32> to vector<128x16xf32>
    %41 = arith.mulf %40, %39 : vector<128x16xf32>
    %42 = arith.addf %37, %41 : vector<128x16xf32>
    %c0_17 = arith.constant 0 : index
    %c2 = arith.constant 2 : index
    %43 = vector.load %arg3[%c0_17, %c2] : memref<128x3xf32, #tpu.memory_space<vmem>>, vector<128x1xf32>
    %44 = vector.extract_strided_slice %33 {offsets = [0, 32], sizes = [128, 16], strides = [1, 1]} : vector<128x48xf32> to vector<128x16xf32>
    %45 = vector.broadcast %43 : vector<128x1xf32> to vector<128x16xf32>
    %46 = arith.mulf %45, %44 : vector<128x16xf32>
    %47 = arith.addf %42, %46 : vector<128x16xf32>
    %c0_18 = arith.constant 0 : index
    %c0_19 = arith.constant 0 : index
    %48 = vector.load %arg7[%c0_18, %c0_19] : memref<1x16xf32, #tpu.memory_space<vmem>>, vector<1x16xf32>
    %cst_20 = arith.constant dense<0xFF800000> : vector<16xf32>
    %49 = vector.multi_reduction <maximumf>, %47, %cst_20 [0] : vector<128x16xf32> to vector<16xf32>
    %50 = vector.shape_cast %49 : vector<16xf32> to vector<1x16xf32>
    %51 = arith.maximumf %48, %50 : vector<1x16xf32>
    %52 = arith.subf %48, %51 : vector<1x16xf32>
    %53 = math.exp %52 : vector<1x16xf32>
    %54 = vector.broadcast %51 : vector<1x16xf32> to vector<128x16xf32>
    %55 = arith.subf %47, %54 : vector<128x16xf32>
    %56 = math.exp %55 : vector<128x16xf32>
    %c0_21 = arith.constant 0 : index
    %c0_22 = arith.constant 0 : index
    %57 = vector.load %arg7[%c0_21, %c0_22] : memref<1x16xf32, #tpu.memory_space<vmem>>, vector<1x16xf32>
    tpu.vector_store %arg7[%c0_21, %c0_22], %51 {strides = array<i32>} : memref<1x16xf32, #tpu.memory_space<vmem>>, vector<1x16xf32>,
    %58 = arith.mulf %47, %56 : vector<128x16xf32>
    %59 = tpu.concatenate %31, %58, %56 in 1 : vector<128x16xf32>, vector<128x16xf32>, vector<128x16xf32> -> vector<128x48xf32>
    %60 = arith.truncf %59 : vector<128x48xf32> to vector<128x48xbf16>
    %cst_23 = arith.constant dense<0.000000e+00> : vector<64x48xf32>
    %61 = tpu.matmul %27, %60, %cst_23 {dimension_numbers = #tpu.dot_dimension_numbers<[1], [0], [0], [1], [0, 0, 1, 1], [], []>} : vector<64x128xbf16>, vector<128x48xbf16>, vector<64x48xf32> -> vector<64x48xf32>
    %cst_24 = arith.constant 1.000000e+00 : f32
    %62 = vector.broadcast %cst_24 : f32 to vector<1x16xf32>
    %63 = tpu.concatenate %62, %53, %53 in 1 : vector<1x16xf32>, vector<1x16xf32>, vector<1x16xf32> -> vector<1x48xf32>
    %c0_25 = arith.constant 0 : index
    %c0_26 = arith.constant 0 : index
    %64 = vector.load %arg6[%c0_25, %c0_26] : memref<64x48xf32, #tpu.memory_space<vmem>>, vector<64x48xf32>
    %65 = vector.broadcast %63 : vector<1x48xf32> to vector<64x48xf32>
    %66 = arith.mulf %64, %65 : vector<64x48xf32>
    %67 = arith.addf %66, %61 : vector<64x48xf32>
    %c0_27 = arith.constant 0 : index
    %c0_28 = arith.constant 0 : index
    %68 = vector.load %arg6[%c0_27, %c0_28] : memref<64x48xf32, #tpu.memory_space<vmem>>, vector<64x48xf32>
    tpu.vector_store %arg6[%c0_27, %c0_28], %67 {strides = array<i32>} : memref<64x48xf32, #tpu.memory_space<vmem>>, vector<64x48xf32>,
    return
  }
  func.func @transform_0(%arg0: i32) -> (i32, i32) {
    %c0_i32 = arith.constant 0 : i32
    %c0_i32_0 = arith.constant 0 : i32
    return %c0_i32, %arg0 : i32, i32
  }
  func.func @transform_1(%arg0: i32) -> (i32, i32) {
    %c0_i32 = arith.constant 0 : i32
    %c0_i32_0 = arith.constant 0 : i32
    return %c0_i32, %arg0 : i32, i32
  }
  func.func @transform_2(%arg0: i32) -> (i32, i32) {
    %c0_i32 = arith.constant 0 : i32
    %c0_i32_0 = arith.constant 0 : i32
    return %arg0, %c0_i32 : i32, i32
  }
  func.func @transform_3(%arg0: i32) -> (i32, i32) {
    %c0_i32 = arith.constant 0 : i32
    %c0_i32_0 = arith.constant 0 : i32
    %c0_i32_1 = arith.constant 0 : i32
    return %c0_i32, %c0_i32_0 : i32, i32
  }
  func.func @transform_4(%arg0: i32) -> (i32, i32) {
    %c0_i32 = arith.constant 0 : i32
    %c0_i32_0 = arith.constant 0 : i32
    %c0_i32_1 = arith.constant 0 : i32
    return %c0_i32, %c0_i32_0 : i32, i32
  }
  func.func @transform_5(%arg0: i32) -> (i32, i32) {
    %c0_i32 = arith.constant 0 : i32
    %c0_i32_0 = arith.constant 0 : i32
    %c0_i32_1 = arith.constant 0 : i32
    return %c0_i32, %c0_i32_0 : i32, i32
  }
}

module attributes {stable_mosaic.version = 11 : i64} {
  func.func @_dan_final_kernel(%arg0: i32, %arg1: memref<64x16xf32, #tpu.memory_space<vmem>>, %arg2: memref<64x48xf32, #tpu.memory_space<vmem>>, %arg3: memref<64x1xf32, #tpu.memory_space<vmem>>, %arg4: memref<16x16xf32, #tpu.memory_space<vmem>>, %arg5: memref<1x16xf32, #tpu.memory_space<vmem>>, %arg6: memref<1x16xf32, #tpu.memory_space<vmem>>, %arg7: memref<1x16xf32, #tpu.memory_space<vmem>>, %arg8: memref<64x16xf32, #tpu.memory_space<vmem>>) attributes {dimension_semantics = [#tpu.dimension_semantics<parallel>], iteration_bounds = array<i64: 1>, scalar_prefetch = 0 : i64, scratch_operands = 0 : i64, tpu.core_type = #tpu.core_type<tc>, window_params = [{transform_indices = @transform_0, window_bounds = array<i64: 64, 16>}, {transform_indices = @transform_1, window_bounds = array<i64: 64, 48>}, {transform_indices = @transform_2, window_bounds = array<i64: 64, 1>}, {pipeline_mode = #tpu.pipeline_mode<synchronous>, transform_indices = @transform_3, window_bounds = array<i64: 16, 16>}, {pipeline_mode = #tpu.pipeline_mode<synchronous>, transform_indices = @transform_4, window_bounds = array<i64: 1, 16>}, {pipeline_mode = #tpu.pipeline_mode<synchronous>, transform_indices = @transform_5, window_bounds = array<i64: 1, 16>}, {pipeline_mode = #tpu.pipeline_mode<synchronous>, transform_indices = @transform_6, window_bounds = array<i64: 1, 16>}, {transform_indices = @transform_7, window_bounds = array<i64: 64, 16>}]} {
    %c0 = arith.constant 0 : index
    %c0_0 = arith.constant 0 : index
    %0 = vector.load %arg2[%c0, %c0_0] : memref<64x48xf32, #tpu.memory_space<vmem>>, vector<64x48xf32>
    %1 = vector.extract_strided_slice %0 {offsets = [0, 0], sizes = [64, 16], strides = [1, 1]} : vector<64x48xf32> to vector<64x16xf32>
    %2 = vector.extract_strided_slice %0 {offsets = [0, 16], sizes = [64, 16], strides = [1, 1]} : vector<64x48xf32> to vector<64x16xf32>
    %3 = vector.extract_strided_slice %0 {offsets = [0, 32], sizes = [64, 16], strides = [1, 1]} : vector<64x48xf32> to vector<64x16xf32>
    %c0_1 = arith.constant 0 : index
    %c0_2 = arith.constant 0 : index
    %4 = vector.load %arg1[%c0_1, %c0_2] : memref<64x16xf32, #tpu.memory_space<vmem>>, vector<64x16xf32>
    %c0_3 = arith.constant 0 : index
    %c0_4 = arith.constant 0 : index
    %5 = vector.load %arg3[%c0_3, %c0_4] : memref<64x1xf32, #tpu.memory_space<vmem>>, vector<64x1xf32>
    %6 = vector.broadcast %5 : vector<64x1xf32> to vector<64x16xf32>
    %7 = arith.mulf %6, %1 : vector<64x16xf32>
    %8 = arith.addf %4, %7 : vector<64x16xf32>
    %cst = arith.constant 1.000000e-16 : f32
    %9 = vector.broadcast %cst : f32 to vector<64x16xf32>
    %10 = arith.addf %3, %9 : vector<64x16xf32>
    %11 = tpu.reciprocal %10 {approx = true} : vector<64x16xf32> -> vector<64x16xf32>
    %12 = arith.mulf %2, %11 : vector<64x16xf32>
    %cst_5 = arith.constant 0.000000e+00 : f32
    %13 = vector.broadcast %cst_5 : f32 to vector<64x16xf32>
    %14 = arith.maximumf %12, %13 : vector<64x16xf32>
    %cst_6 = arith.constant 1.000000e-01 : f32
    %15 = vector.broadcast %cst_6 : f32 to vector<64x16xf32>
    %16 = arith.mulf %15, %14 : vector<64x16xf32>
    %17 = arith.addf %8, %16 : vector<64x16xf32>
    %c0_7 = arith.constant 0 : index
    %c0_8 = arith.constant 0 : index
    %18 = vector.load %arg4[%c0_7, %c0_8] : memref<16x16xf32, #tpu.memory_space<vmem>>, vector<16x16xf32>
    %cst_9 = arith.constant dense<0.000000e+00> : vector<64x16xf32>
    %19 = tpu.matmul %17, %18, %cst_9 {dimension_numbers = #tpu.dot_dimension_numbers<[1], [0], [0], [1], [0, 0, 1, 1], [], []>} : vector<64x16xf32>, vector<16x16xf32>, vector<64x16xf32> -> vector<64x16xf32>
    %c0_10 = arith.constant 0 : index
    %c0_11 = arith.constant 0 : index
    %20 = vector.load %arg5[%c0_10, %c0_11] : memref<1x16xf32, #tpu.memory_space<vmem>>, vector<1x16xf32>
    %21 = vector.broadcast %20 : vector<1x16xf32> to vector<64x16xf32>
    %22 = arith.addf %19, %21 : vector<64x16xf32>
    %cst_12 = arith.constant dense<0.000000e+00> : vector<64xf32>
    %23 = vector.multi_reduction <add>, %22, %cst_12 [1] : vector<64x16xf32> to vector<64xf32>
    %24 = vector.shape_cast %23 : vector<64xf32> to vector<64x1xf32>
    %cst_13 = arith.constant 1.600000e+01 : f32
    %25 = vector.broadcast %cst_13 : f32 to vector<64x1xf32>
    %26 = arith.divf %24, %25 : vector<64x1xf32>
    %27 = vector.broadcast %26 : vector<64x1xf32> to vector<64x16xf32>
    %28 = arith.subf %22, %27 : vector<64x16xf32>
    %29 = arith.mulf %28, %28 : vector<64x16xf32>
    %cst_14 = arith.constant dense<0.000000e+00> : vector<64xf32>
    %30 = vector.multi_reduction <add>, %29, %cst_14 [1] : vector<64x16xf32> to vector<64xf32>
    %31 = vector.shape_cast %30 : vector<64xf32> to vector<64x1xf32>
    %cst_15 = arith.constant 1.600000e+01 : f32
    %32 = vector.broadcast %cst_15 : f32 to vector<64x1xf32>
    %33 = arith.divf %31, %32 : vector<64x1xf32>
    %34 = vector.broadcast %26 : vector<64x1xf32> to vector<64x16xf32>
    %35 = arith.subf %22, %34 : vector<64x16xf32>
    %cst_16 = arith.constant 9.99999974E-6 : f32
    %36 = vector.broadcast %cst_16 : f32 to vector<64x1xf32>
    %37 = arith.addf %33, %36 : vector<64x1xf32>
    %38 = math.rsqrt %37 : vector<64x1xf32>
    %39 = vector.broadcast %38 : vector<64x1xf32> to vector<64x16xf32>
    %40 = arith.mulf %35, %39 : vector<64x16xf32>
    %c0_17 = arith.constant 0 : index
    %c0_18 = arith.constant 0 : index
    %41 = vector.load %arg6[%c0_17, %c0_18] : memref<1x16xf32, #tpu.memory_space<vmem>>, vector<1x16xf32>
    %42 = vector.broadcast %41 : vector<1x16xf32> to vector<64x16xf32>
    %43 = arith.mulf %40, %42 : vector<64x16xf32>
    %c0_19 = arith.constant 0 : index
    %c0_20 = arith.constant 0 : index
    %44 = vector.load %arg7[%c0_19, %c0_20] : memref<1x16xf32, #tpu.memory_space<vmem>>, vector<1x16xf32>
    %45 = vector.broadcast %44 : vector<1x16xf32> to vector<64x16xf32>
    %46 = arith.addf %43, %45 : vector<64x16xf32>
    %c0_21 = arith.constant 0 : index
    %c0_22 = arith.constant 0 : index
    %47 = vector.load %arg8[%c0_21, %c0_22] : memref<64x16xf32, #tpu.memory_space<vmem>>, vector<64x16xf32>
    tpu.vector_store %arg8[%c0_21, %c0_22], %46 {strides = array<i32>} : memref<64x16xf32, #tpu.memory_space<vmem>>, vector<64x16xf32>,
    return
  }
  func.func @transform_0(%arg0: i32) -> (i32, i32) {
    %c0_i32 = arith.constant 0 : i32
    %c0_i32_0 = arith.constant 0 : i32
    return %arg0, %c0_i32 : i32, i32
  }
  func.func @transform_1(%arg0: i32) -> (i32, i32) {
    %c0_i32 = arith.constant 0 : i32
    %c0_i32_0 = arith.constant 0 : i32
    return %arg0, %c0_i32 : i32, i32
  }
  func.func @transform_2(%arg0: i32) -> (i32, i32) {
    %c0_i32 = arith.constant 0 : i32
    %c0_i32_0 = arith.constant 0 : i32
    return %arg0, %c0_i32 : i32, i32
  }
  func.func @transform_3(%arg0: i32) -> (i32, i32) {
    %c0_i32 = arith.constant 0 : i32
    %c0_i32_0 = arith.constant 0 : i32
    %c0_i32_1 = arith.constant 0 : i32
    return %c0_i32, %c0_i32_0 : i32, i32
  }
  func.func @transform_4(%arg0: i32) -> (i32, i32) {
    %c0_i32 = arith.constant 0 : i32
    %c0_i32_0 = arith.constant 0 : i32
    %c0_i32_1 = arith.constant 0 : i32
    return %c0_i32, %c0_i32_0 : i32, i32
  }
  func.func @transform_5(%arg0: i32) -> (i32, i32) {
    %c0_i32 = arith.constant 0 : i32
    %c0_i32_0 = arith.constant 0 : i32
    %c0_i32_1 = arith.constant 0 : i32
    return %c0_i32, %c0_i32_0 : i32, i32
  }
  func.func @transform_6(%arg0: i32) -> (i32, i32) {
    %c0_i32 = arith.constant 0 : i32
    %c0_i32_0 = arith.constant 0 : i32
    %c0_i32_1 = arith.constant 0 : i32
    return %c0_i32, %c0_i32_0 : i32, i32
  }
  func.func @transform_7(%arg0: i32) -> (i32, i32) {
    %c0_i32 = arith.constant 0 : i32
    %c0_i32_0 = arith.constant 0 : i32
    return %arg0, %c0_i32 : i32, i32
  }
}

</mosaic_0001>

<llo_original>
// kernel: _lambda_.9
$region0: #{_lambda_.9}
  #allocation0 [shape = 'u32[]', space=smem, size = 0x4, offset = 0x4, fixed_abs, tag = 'smem constant byte address 0x4 - core index']
  #allocation1 [shape = 'u32[144,128]{1,0:T(1,128)}', space=vmem, size = 0x12000, scoped, tag = 'internal scratch']
  %s0 = inlined_call_operand.vmem [shape: f32[64,16], index: 0, kind: input, shape index: {}]
  %s1 = inlined_call_operand.vmem [shape: f32[16,32], index: 1, kind: input, shape index: {}]
  %s2 = inlined_call_operand.vmem [shape: f32[1,32], index: 2, kind: input, shape index: {}]
  %s3 = inlined_call_operand.vmem [shape: f32[64,32], index: 3, kind: output, shape index: {}]
  %s4 = sld [smem:[#allocation0]]
  $region22: #{_lambda_.9} parent=0
    _
  %s6 = ssub.s32 1, %s4
  %s7 = scalar_select 0, %s6, %s4
  // Predicated region
  $region2: #{_lambda_.9} parent=0 // pred_check
    _
  $region3: #{_lambda_.9} parent=0 // pred_check_branch
    %9 = sbr.rel (0) target = $region5
  $region4: #{_lambda_.9} parent=0 // pred_region
    _
  $region5: #{_lambda_.9} parent=0 // pred_fallthru
    _
  // Predicated region
  $region6: #{_lambda_.9} parent=0 // pred_check
    _
  $region7: #{_lambda_.9} parent=0 // pred_check_branch
    %11 = sbr.rel (0) target = $region9
  $region8: #{_lambda_.9} parent=0 // pred_region
    _
  $region9: #{_lambda_.9} parent=0 // pred_fallthru
    _
  // Predicated region
  $region10: #{_lambda_.9} parent=0 // pred_check
    _
  $region11: #{_lambda_.9} parent=0 // pred_check_branch
    %13 = sbr.rel (0) target = $region13
  $region12: #{_lambda_.9} parent=0 // pred_region
    _
  $region13: #{_lambda_.9} parent=0 // pred_fallthru
    _
  %v14 = vld [vmem:[%s0] sm:$0xff]
  %v15 = vld [vmem:[%s0 + $0x8] sm:$0xff]
  %v16 = vld [vmem:[%s0 + $0x10] sm:$0xff]
  %v17 = vld [vmem:[%s0 + $0x18] sm:$0xff]
  %v18 = vld [vmem:[%s0 + $0x20] sm:$0xff]
  %v19 = vld [vmem:[%s0 + $0x28] sm:$0xff]
  %v20 = vld [vmem:[%s0 + $0x30] sm:$0xff]
  %v21 = vld [vmem:[%s0 + $0x38] sm:$0xff]
  %v22 = vld [vmem:[%s1] sm:$0xff]
  %v23 = vld [vmem:[%s1 + $0x8] sm:$0xff]
  %v24 = vld [vmem:[%s2] sm:$0x1]
  %v26 = vlaneseq
  %v27 = vshrl.u32 %v26, 7
  %v28 = vsub.s32 0, %v27
  %v29 = vrot.slane %v24, %v28
  %vm31 = vcmask 130048
  %v33 = vsel %vm31, %v14, 0
  %v36 = vsel %vm31, %v15, 0
  %v39 = vsel %vm31, %v16, 0
  %v42 = vsel %vm31, %v17, 0
  %v45 = vsel %vm31, %v18, 0
  %v48 = vsel %vm31, %v19, 0
  %v51 = vsel %vm31, %v20, 0
  %v54 = vsel %vm31, %v21, 0
  %56 = vmatprep.subr.mxu0 0.0
  %57 = vmatpush1.msra.mxu0 0.0
  %58 = vmatprep.subr.mxu0 0.0
  %59 = vmatpush1.msra.mxu0 0.0
  %60 = vmatprep.subr.mxu0 0.0
  %61 = vmatpush1.msra.mxu0 0.0
  %62 = vmatprep.subr.mxu0 0.0
  %63 = vmatpush1.msra.mxu0 0.0
  %64 = vmatprep.subr.mxu0 0.0
  %65 = vmatpush1.msra.mxu0 0.0
  %66 = vmatprep.subr.mxu0 0.0
  %67 = vmatpush1.msra.mxu0 0.0
  %68 = vmatprep.subr.mxu0 0.0
  %69 = vmatpush1.msra.mxu0 0.0
  %70 = vmatprep.subr.mxu0 0.0
  %71 = vmatpush1.msra.mxu0 0.0
  %72 = vmatprep.subr.mxu0 0.0
  %73 = vmatpush1.msra.mxu0 0.0
  %74 = vmatprep.subr.mxu0 0.0
  %75 = vmatpush1.msra.mxu0 0.0
  %76 = vmatprep.subr.mxu0 0.0
  %77 = vmatpush1.msra.mxu0 0.0
  %78 = vmatprep.subr.mxu0 0.0
  %79 = vmatpush1.msra.mxu0 0.0
  %80 = vmatprep.subr.mxu0 0.0
  %81 = vmatpush1.msra.mxu0 0.0
  %82 = vmatprep.subr.mxu0 0.0
  %83 = vmatpush1.msra.mxu0 0.0
  %84 = vmatprep.subr.mxu0 0.0
  %85 = vmatpush1.msra.mxu0 %v23
  %86 = vmatprep.subr.mxu0 0.0
  %87 = vmatpush1.msra.mxu0 %v22
  %88 = vmatprep.subr.mxu0 0.0
  %89 = vmatpush2.msra.mxu0 0.0
  %90 = vmatprep.subr.mxu0 0.0
  %91 = vmatpush2.msra.mxu0 0.0
  %92 = vmatprep.subr.mxu0 0.0
  %93 = vmatpush2.msra.mxu0 0.0
  %94 = vmatprep.subr.mxu0 0.0
  %95 = vmatpush2.msra.mxu0 0.0
  %96 = vmatprep.subr.mxu0 0.0
  %97 = vmatpush2.msra.mxu0 0.0
  %98 = vmatprep.subr.mxu0 0.0
  %99 = vmatpush2.msra.mxu0 0.0
  %100 = vmatprep.subr.mxu0 0.0
  %101 = vmatpush2.msra.mxu0 0.0
  %102 = vmatprep.subr.mxu0 0.0
  %103 = vmatpush2.msra.mxu0 0.0
  %104 = vmatprep.subr.mxu0 0.0
  %105 = vmatpush2.msra.mxu0 0.0
  %106 = vmatprep.subr.mxu0 0.0
  %107 = vmatpush2.msra.mxu0 0.0
  %108 = vmatprep.subr.mxu0 0.0
  %109 = vmatpush2.msra.mxu0 0.0
  %110 = vmatprep.subr.mxu0 0.0
  %111 = vmatpush2.msra.mxu0 0.0
  %112 = vmatprep.subr.mxu0 0.0
  %113 = vmatpush2.msra.mxu0 0.0
  %114 = vmatprep.subr.mxu0 0.0
  %115 = vmatpush2.msra.mxu0 0.0
  %116 = vmatprep.subr.mxu0 0.0
  %117 = vmatpush2.msra.mxu0 0.0
  %118 = vmatprep.subr.mxu0 0.0
  %119 = vmatpush2.msra.mxu0 0.0
  %120 = vmatprep.mubr.f32.mxu0 0.0
  %121 = vmatmul.mubr.f32.gmra.mxu0 %v33
  %v122 = vpop.f32.mrf.mxu0
  %v123 = vadd.f32 %v29, %v122
  %v124 = vpop.f32.mrf.mxu0
  %125 = vmatprep.mubr.f32.mxu0 0.0
  %126 = vmatmul.mubr.f32.gmra.mxu0 %v36
  %v127 = vpop.f32.mrf.mxu0
  %v128 = vadd.f32 %v29, %v127
  %v129 = vpop.f32.mrf.mxu0
  %130 = vmatprep.mubr.f32.mxu0 0.0
  %131 = vmatmul.mubr.f32.gmra.mxu0 %v39
  %v132 = vpop.f32.mrf.mxu0
  %v133 = vadd.f32 %v29, %v132
  %v134 = vpop.f32.mrf.mxu0
  %135 = vmatprep.mubr.f32.mxu0 0.0
  %136 = vmatmul.mubr.f32.gmra.mxu0 %v42
  %v137 = vpop.f32.mrf.mxu0
  %v138 = vadd.f32 %v29, %v137
  %v139 = vpop.f32.mrf.mxu0
  %140 = vmatprep.mubr.f32.mxu0 0.0
  %141 = vmatmul.mubr.f32.gmra.mxu0 %v45
  %v142 = vpop.f32.mrf.mxu0
  %v143 = vadd.f32 %v29, %v142
  %v144 = vpop.f32.mrf.mxu0
  %145 = vmatprep.mubr.f32.mxu0 0.0
  %146 = vmatmul.mubr.f32.gmra.mxu0 %v48
  %v147 = vpop.f32.mrf.mxu0
  %v148 = vadd.f32 %v29, %v147
  %v149 = vpop.f32.mrf.mxu0
  %150 = vmatprep.mubr.f32.mxu0 0.0
  %151 = vmatmul.mubr.f32.gmra.mxu0 %v51
  %v152 = vpop.f32.mrf.mxu0
  %v153 = vadd.f32 %v29, %v152
  %v154 = vpop.f32.mrf.mxu0
  %155 = vmatprep.mubr.f32.mxu0 0.0
  %156 = vmatmul.mubr.f32.gmra.mxu0 %v54
  %v157 = vpop.f32.mrf.mxu0
  %v158 = vadd.f32 %v29, %v157
  %v159 = vpop.f32.mrf.mxu0
  %160 = vdwg.mxu0
  %v161 = vmax.f32 %v123, 0.0
  %v162 = vmax.f32 %v128, 0.0
  %v163 = vmax.f32 %v133, 0.0
  %v164 = vmax.f32 %v138, 0.0
  %v165 = vmax.f32 %v143, 0.0
  %v166 = vmax.f32 %v148, 0.0
  %v167 = vmax.f32 %v153, 0.0
  %v168 = vmax.f32 %v158, 0.0
  %vm169 = vcmask 261120
  %170 = vst.msk [vmem:[%s3] sm:$0xff] %vm169, %v161
  %171 = vst.msk [vmem:[%s3 + $0x8] sm:$0xff] %vm169, %v162
  %172 = vst.msk [vmem:[%s3 + $0x10] sm:$0xff] %vm169, %v163
  %173 = vst.msk [vmem:[%s3 + $0x18] sm:$0xff] %vm169, %v164
  %174 = vst.msk [vmem:[%s3 + $0x20] sm:$0xff] %vm169, %v165
  %175 = vst.msk [vmem:[%s3 + $0x28] sm:$0xff] %vm169, %v166
  %176 = vst.msk [vmem:[%s3 + $0x30] sm:$0xff] %vm169, %v167
  %177 = vst.msk [vmem:[%s3 + $0x38] sm:$0xff] %vm169, %v168
  // Predicated region
  $region14: #{_lambda_.9} parent=0 // pred_check
    _
  $region15: #{_lambda_.9} parent=0 // pred_check_branch
    %179 = sbr.rel (0) target = $region17
  $region16: #{_lambda_.9} parent=0 // pred_region
    _
  $region17: #{_lambda_.9} parent=0 // pred_fallthru
    _
  // Predicated region
  $region18: #{_lambda_.9} parent=0 // pred_check
    _
  $region19: #{_lambda_.9} parent=0 // pred_check_branch
    %181 = sbr.rel (0) target = $region21
  $region20: #{_lambda_.9} parent=0 // pred_region
    _
  $region21: #{_lambda_.9} parent=0 // pred_fallthru
    _

// kernel: _lambda_.8
$region0: #{_lambda_.8}
  #allocation0 [shape = 'u32[]', space=smem, size = 0x4, offset = 0x4, fixed_abs, tag = 'smem constant byte address 0x4 - core index']
  #allocation1 [shape = 'u32[144,128]{1,0:T(1,128)}', space=vmem, size = 0x12000, scoped, tag = 'internal scratch']
  %s0 = inlined_call_operand.vmem [shape: s32[1,128], index: 0, kind: input, shape index: {}]
  %s1 = inlined_call_operand.vmem [shape: f32[64,1], index: 1, kind: output, shape index: {}]
  %s2 = sld [smem:[#allocation0]]
  $region22: #{_lambda_.8} parent=0
    _
  %s4 = ssub.s32 1, %s2
  %s5 = scalar_select 0, %s4, %s2
  // Predicated region
  $region2: #{_lambda_.8} parent=0 // pred_check
    _
  $region3: #{_lambda_.8} parent=0 // pred_check_branch
    %7 = sbr.rel (0) target = $region5
  $region4: #{_lambda_.8} parent=0 // pred_region
    _
  $region5: #{_lambda_.8} parent=0 // pred_fallthru
    _
  %p8 = scmp.eq.s32.totalorder 0, 0
  // Predicated region
  $region6: #{_lambda_.8} parent=0 // pred_check
    %p9 = pneg %p8
  $region7: #{_lambda_.8} parent=0 // pred_check_branch
    %11 = sbr.rel (%p9) target = $region9
  $region8: #{_lambda_.8} parent=0 // pred_region
    %vm12 = vcmask 7168
    %13 = vst.msk [vmem:[%s1] sm:$0xff] %vm12, 0.0
    %14 = vst.msk [vmem:[%s1 + $0x8] sm:$0xff] %vm12, 0.0
    %15 = vst.msk [vmem:[%s1 + $0x10] sm:$0xff] %vm12, 0.0
    %16 = vst.msk [vmem:[%s1 + $0x18] sm:$0xff] %vm12, 0.0
    %17 = vst.msk [vmem:[%s1 + $0x20] sm:$0xff] %vm12, 0.0
    %18 = vst.msk [vmem:[%s1 + $0x28] sm:$0xff] %vm12, 0.0
    %19 = vst.msk [vmem:[%s1 + $0x30] sm:$0xff] %vm12, 0.0
    %20 = vst.msk [vmem:[%s1 + $0x38] sm:$0xff] %vm12, 0.0
  $region9: #{_lambda_.8} parent=0 // pred_fallthru
    _
  %v21 = vlaneseq
  %v22 = vand.u32 %v21, 127
  %s23 = smul.u32 0, 128
  %v24 = vstv %s23
  %v25 = vadd.s32 %v24, %v22
  %vm26 = vcmp.lt.s32.totalorder %v25, 128
  %v27 = vlaneseq
  %v28 = vshrl.u32 %v27, 7
  %v29 = vadd.s32 %v28, 8
  %v30 = vadd.s32 %v28, 16
  %v31 = vadd.s32 %v28, 24
  %v32 = vadd.s32 %v28, 32
  %v33 = vadd.s32 %v28, 40
  %v34 = vadd.s32 %v28, 48
  %v35 = vadd.s32 %v28, 56
  %v36 = vld [vmem:[%s0] sm:$0x1]
  %v37 = vlaneseq
  %v38 = vshrl.u32 %v37, 7
  %v39 = vsub.s32 0, %v38
  %v40 = vrot.slane %v36, %v39
  %vm41 = vcmp.eq.s32.totalorder %v28, %v40
  %vm42 = vcmp.eq.s32.totalorder %v29, %v40
  %vm43 = vcmp.eq.s32.totalorder %v30, %v40
  %vm44 = vcmp.eq.s32.totalorder %v31, %v40
  %vm45 = vcmp.eq.s32.totalorder %v32, %v40
  %vm46 = vcmp.eq.s32.totalorder %v33, %v40
  %vm47 = vcmp.eq.s32.totalorder %v34, %v40
  %vm48 = vcmp.eq.s32.totalorder %v35, %v40
  %v49 = vsel %vm26, 1, 0
  %vm50 = vcmp.eq.s32.totalorder %v49, 1
  %vm51 = vmand %vm41, %vm50
  %vm52 = vmand %vm42, %vm50
  %vm53 = vmand %vm43, %vm50
  %vm54 = vmand %vm44, %vm50
  %vm55 = vmand %vm45, %vm50
  %vm56 = vmand %vm46, %vm50
  %vm57 = vmand %vm47, %vm50
  %vm58 = vmand %vm48, %vm50
  %v59 = vsel %vm51, 1.0, 0.0
  %v60 = vsel %vm52, 1.0, 0.0
  %v61 = vsel %vm53, 1.0, 0.0
  %v62 = vsel %vm54, 1.0, 0.0
  %v63 = vsel %vm55, 1.0, 0.0
  %v64 = vsel %vm56, 1.0, 0.0
  %v65 = vsel %vm57, 1.0, 0.0
  %v66 = vsel %vm58, 1.0, 0.0
  %v67 = vld [vmem:[%s1] sm:$0xff]
  %v68 = vld [vmem:[%s1 + $0x8] sm:$0xff]
  %v69 = vld [vmem:[%s1 + $0x10] sm:$0xff]
  %v70 = vld [vmem:[%s1 + $0x18] sm:$0xff]
  %v71 = vld [vmem:[%s1 + $0x20] sm:$0xff]
  %v72 = vld [vmem:[%s1 + $0x28] sm:$0xff]
  %v73 = vld [vmem:[%s1 + $0x30] sm:$0xff]
  %v74 = vld [vmem:[%s1 + $0x38] sm:$0xff]
  %75 = vadd.xlane.f32.xlu0 %v59
  %v76 = vpop.xlane.xlu0 %75
  %77 = vadd.xlane.f32.xlu0 %v60
  %v78 = vpop.xlane.xlu0 %77
  %79 = vadd.xlane.f32.xlu0 %v61
  %v80 = vpop.xlane.xlu0 %79
  %81 = vadd.xlane.f32.xlu0 %v62
  %v82 = vpop.xlane.xlu0 %81
  %83 = vadd.xlane.f32.xlu0 %v63
  %v84 = vpop.xlane.xlu0 %83
  %85 = vadd.xlane.f32.xlu0 %v64
  %v86 = vpop.xlane.xlu0 %85
  %87 = vadd.xlane.f32.xlu0 %v65
  %v88 = vpop.xlane.xlu0 %87
  %89 = vadd.xlane.f32.xlu0 %v66
  %v90 = vpop.xlane.xlu0 %89
  %v91 = vadd.f32 %v67, %v76
  %v92 = vadd.f32 %v68, %v78
  %v93 = vadd.f32 %v69, %v80
  %v94 = vadd.f32 %v70, %v82
  %v95 = vadd.f32 %v71, %v84
  %v96 = vadd.f32 %v72, %v86
  %v97 = vadd.f32 %v73, %v88
  %v98 = vadd.f32 %v74, %v90
  %vm99 = vcmask 7168
  %100 = vst.msk [vmem:[%s1] sm:$0xff] %vm99, %v91
  %101 = vst.msk [vmem:[%s1 + $0x8] sm:$0xff] %vm99, %v92
  %102 = vst.msk [vmem:[%s1 + $0x10] sm:$0xff] %vm99, %v93
  %103 = vst.msk [vmem:[%s1 + $0x18] sm:$0xff] %vm99, %v94
  %104 = vst.msk [vmem:[%s1 + $0x20] sm:$0xff] %vm99, %v95
  %105 = vst.msk [vmem:[%s1 + $0x28] sm:$0xff] %vm99, %v96
  %106 = vst.msk [vmem:[%s1 + $0x30] sm:$0xff] %vm99, %v97
  %107 = vst.msk [vmem:[%s1 + $0x38] sm:$0xff] %vm99, %v98
  // Predicated region
  $region10: #{_lambda_.8} parent=0 // pred_check
    %p108 = pneg %p8
  $region11: #{_lambda_.8} parent=0 // pred_check_branch
    %110 = sbr.rel (%p108) target = $region13
  $region12: #{_lambda_.8} parent=0 // pred_region
    %v111 = vld [vmem:[%s1] sm:$0xff]
    %v112 = vld [vmem:[%s1 + $0x8] sm:$0xff]
    %v113 = vld [vmem:[%s1 + $0x10] sm:$0xff]
    %v114 = vld [vmem:[%s1 + $0x18] sm:$0xff]
    %v115 = vld [vmem:[%s1 + $0x20] sm:$0xff]
    %v116 = vld [vmem:[%s1 + $0x28] sm:$0xff]
    %v117 = vld [vmem:[%s1 + $0x30] sm:$0xff]
    %v118 = vld [vmem:[%s1 + $0x38] sm:$0xff]
    %vm119 = vcmp.gt.f32.partialorder %v111, 0.0
    %vm120 = vcmp.gt.f32.partialorder %v112, 0.0
    %vm121 = vcmp.gt.f32.partialorder %v113, 0.0
    %vm122 = vcmp.gt.f32.partialorder %v114, 0.0
    %vm123 = vcmp.gt.f32.partialorder %v115, 0.0
    %vm124 = vcmp.gt.f32.partialorder %v116, 0.0
    %vm125 = vcmp.gt.f32.partialorder %v117, 0.0
    %vm126 = vcmp.gt.f32.partialorder %v118, 0.0
    %v127 = vrsqrt.pop %v111
    %v128 = vrsqrt.pop %v112
    %v129 = vrsqrt.pop %v113
    %v130 = vrsqrt.pop %v114
    %v131 = vrsqrt.pop %v115
    %v132 = vrsqrt.pop %v116
    %v133 = vrsqrt.pop %v117
    %v134 = vrsqrt.pop %v118
    %v135 = vsel %vm119, %v127, 0.0
    %v136 = vsel %vm120, %v128, 0.0
    %v137 = vsel %vm121, %v129, 0.0
    %v138 = vsel %vm122, %v130, 0.0
    %v139 = vsel %vm123, %v131, 0.0
    %v140 = vsel %vm124, %v132, 0.0
    %v141 = vsel %vm125, %v133, 0.0
    %v142 = vsel %vm126, %v134, 0.0
    %143 = vst.msk [vmem:[%s1] sm:$0xff] %vm99, %v135
    %144 = vst.msk [vmem:[%s1 + $0x8] sm:$0xff] %vm99, %v136
    %145 = vst.msk [vmem:[%s1 + $0x10] sm:$0xff] %vm99, %v137
    %146 = vst.msk [vmem:[%s1 + $0x18] sm:$0xff] %vm99, %v138
    %147 = vst.msk [vmem:[%s1 + $0x20] sm:$0xff] %vm99, %v139
    %148 = vst.msk [vmem:[%s1 + $0x28] sm:$0xff] %vm99, %v140
    %149 = vst.msk [vmem:[%s1 + $0x30] sm:$0xff] %vm99, %v141
    %150 = vst.msk [vmem:[%s1 + $0x38] sm:$0xff] %vm99, %v142
  $region13: #{_lambda_.8} parent=0 // pred_fallthru
    _
  // Predicated region
  $region14: #{_lambda_.8} parent=0 // pred_check
    _
  $region15: #{_lambda_.8} parent=0 // pred_check_branch
    %152 = sbr.rel (0) target = $region17
  $region16: #{_lambda_.8} parent=0 // pred_region
    _
  $region17: #{_lambda_.8} parent=0 // pred_fallthru
    _
  // Predicated region
  $region18: #{_lambda_.8} parent=0 // pred_check
    _
  $region19: #{_lambda_.8} parent=0 // pred_check_branch
    %154 = sbr.rel (0) target = $region21
  $region20: #{_lambda_.8} parent=0 // pred_region
    _
  $region21: #{_lambda_.8} parent=0 // pred_fallthru
    _

// kernel: _lambda_.10
$region0: #{_lambda_.10}
  #allocation0 [shape = 'u32[]', space=smem, size = 0x4, offset = 0x4, fixed_abs, tag = 'smem constant byte address 0x4 - core index']
  #allocation1 [shape = 'u32[144,128]{1,0:T(1,128)}', space=vmem, size = 0x12000, scoped, tag = 'internal scratch']
  %s0 = inlined_call_operand.vmem [shape: f32[64,32], index: 0, kind: input, shape index: {}]
  %s1 = inlined_call_operand.vmem [shape: f32[64,1], index: 1, kind: input, shape index: {}]
  %s2 = inlined_call_operand.vmem [shape: f32[32,32], index: 2, kind: input, shape index: {}]
  %s3 = inlined_call_operand.vmem [shape: f32[1,32], index: 3, kind: input, shape index: {}]
  %s4 = inlined_call_operand.vmem [shape: f32[32,32], index: 4, kind: input, shape index: {}]
  %s5 = inlined_call_operand.vmem [shape: f32[1,32], index: 5, kind: input, shape index: {}]
  %s6 = inlined_call_operand.vmem [shape: f32[1,32], index: 6, kind: input, shape index: {}]
  %s7 = inlined_call_operand.vmem [shape: f32[1,32], index: 7, kind: input, shape index: {}]
  %s8 = inlined_call_operand.vmem [shape: bf16[64,64], index: 8, kind: output, shape index: {0}]
  %s9 = inlined_call_operand.vmem [shape: f32[64,32], index: 9, kind: output, shape index: {1}]
  %10 = xla_tuple %s8, %s9
  %s11 = sld [smem:[#allocation0]]
  $region50: #{_lambda_.10} parent=0
    _
  %s13 = ssub.s32 1, %s11
  %s14 = scalar_select 0, %s13, %s11
  // Predicated region
  $region2: #{_lambda_.10} parent=0 // pred_check
    _
  $region3: #{_lambda_.10} parent=0 // pred_check_branch
    %16 = sbr.rel (0) target = $region5
  $region4: #{_lambda_.10} parent=0 // pred_region
    _
  $region5: #{_lambda_.10} parent=0 // pred_fallthru
    _
  // Predicated region
  $region6: #{_lambda_.10} parent=0 // pred_check
    _
  $region7: #{_lambda_.10} parent=0 // pred_check_branch
    %18 = sbr.rel (0) target = $region9
  $region8: #{_lambda_.10} parent=0 // pred_region
    _
  $region9: #{_lambda_.10} parent=0 // pred_fallthru
    _
  // Predicated region
  $region10: #{_lambda_.10} parent=0 // pred_check
    _
  $region11: #{_lambda_.10} parent=0 // pred_check_branch
    %20 = sbr.rel (0) target = $region13
  $region12: #{_lambda_.10} parent=0 // pred_region
    _
  $region13: #{_lambda_.10} parent=0 // pred_fallthru
    _
  // Predicated region
  $region14: #{_lambda_.10} parent=0 // pred_check
    _
  $region15: #{_lambda_.10} parent=0 // pred_check_branch
    %22 = sbr.rel (0) target = $region17
  $region16: #{_lambda_.10} parent=0 // pred_region
    _
  $region17: #{_lambda_.10} parent=0 // pred_fallthru
    _
  // Predicated region
  $region18: #{_lambda_.10} parent=0 // pred_check
    _
  $region19: #{_lambda_.10} parent=0 // pred_check_branch
    %24 = sbr.rel (0) target = $region21
  $region20: #{_lambda_.10} parent=0 // pred_region
    _
  $region21: #{_lambda_.10} parent=0 // pred_fallthru
    _
  // Predicated region
  $region22: #{_lambda_.10} parent=0 // pred_check
    _
  $region23: #{_lambda_.10} parent=0 // pred_check_branch
    %26 = sbr.rel (0) target = $region25
  $region24: #{_lambda_.10} parent=0 // pred_region
    _
  $region25: #{_lambda_.10} parent=0 // pred_fallthru
    _
  // Predicated region
  $region26: #{_lambda_.10} parent=0 // pred_check
    _
  $region27: #{_lambda_.10} parent=0 // pred_check_branch
    %28 = sbr.rel (0) target = $region29
  $region28: #{_lambda_.10} parent=0 // pred_region
    _
  $region29: #{_lambda_.10} parent=0 // pred_fallthru
    _
  // Predicated region
  $region30: #{_lambda_.10} parent=0 // pred_check
    _
  $region31: #{_lambda_.10} parent=0 // pred_check_branch
    %30 = sbr.rel (0) target = $region33
  $region32: #{_lambda_.10} parent=0 // pred_region
    _
  $region33: #{_lambda_.10} parent=0 // pred_fallthru
    _
  %v31 = vld [vmem:[%s0] sm:$0xff]
  %v32 = vld [vmem:[%s0 + $0x8] sm:$0xff]
  %v33 = vld [vmem:[%s0 + $0x10] sm:$0xff]
  %v34 = vld [vmem:[%s0 + $0x18] sm:$0xff]
  %v35 = vld [vmem:[%s0 + $0x20] sm:$0xff]
  %v36 = vld [vmem:[%s0 + $0x28] sm:$0xff]
  %v37 = vld [vmem:[%s0 + $0x30] sm:$0xff]
  %v38 = vld [vmem:[%s0 + $0x38] sm:$0xff]
  %v39 = vld [vmem:[%s2] sm:$0xff]
  %v40 = vld [vmem:[%s2 + $0x8] sm:$0xff]
  %v41 = vld [vmem:[%s2 + $0x10] sm:$0xff]
  %v42 = vld [vmem:[%s2 + $0x18] sm:$0xff]
  %v43 = vld [vmem:[%s3] sm:$0x1]
  %v45 = vlaneseq
  %v46 = vshrl.u32 %v45, 7
  %v47 = vsub.s32 0, %v46
  %v48 = vrot.slane %v43, %v47
  %vm50 = vcmask 261120
  %v52 = vsel %vm50, %v31, 0
  %v55 = vsel %vm50, %v32, 0
  %v58 = vsel %vm50, %v33, 0
  %v61 = vsel %vm50, %v34, 0
  %v64 = vsel %vm50, %v35, 0
  %v67 = vsel %vm50, %v36, 0
  %v70 = vsel %vm50, %v37, 0
  %v73 = vsel %vm50, %v38, 0
  %75 = vmatprep.subr.mxu0 0.0
  %76 = vmatpush1.msra.mxu0 0.0
  %77 = vmatprep.subr.mxu0 0.0
  %78 = vmatpush1.msra.mxu0 0.0
  %79 = vmatprep.subr.mxu0 0.0
  %80 = vmatpush1.msra.mxu0 0.0
  %81 = vmatprep.subr.mxu0 0.0
  %82 = vmatpush1.msra.mxu0 0.0
  %83 = vmatprep.subr.mxu0 0.0
  %84 = vmatpush1.msra.mxu0 0.0
  %85 = vmatprep.subr.mxu0 0.0
  %86 = vmatpush1.msra.mxu0 0.0
  %87 = vmatprep.subr.mxu0 0.0
  %88 = vmatpush1.msra.mxu0 0.0
  %89 = vmatprep.subr.mxu0 0.0
  %90 = vmatpush1.msra.mxu0 0.0
  %91 = vmatprep.subr.mxu0 0.0
  %92 = vmatpush1.msra.mxu0 0.0
  %93 = vmatprep.subr.mxu0 0.0
  %94 = vmatpush1.msra.mxu0 0.0
  %95 = vmatprep.subr.mxu0 0.0
  %96 = vmatpush1.msra.mxu0 0.0
  %97 = vmatprep.subr.mxu0 0.0
  %98 = vmatpush1.msra.mxu0 0.0
  %99 = vmatprep.subr.mxu0 0.0
  %100 = vmatpush1.msra.mxu0 %v42
  %101 = vmatprep.subr.mxu0 0.0
  %102 = vmatpush1.msra.mxu0 %v41
  %103 = vmatprep.subr.mxu0 0.0
  %104 = vmatpush1.msra.mxu0 %v40
  %105 = vmatprep.subr.mxu0 0.0
  %106 = vmatpush1.msra.mxu0 %v39
  %107 = vmatprep.subr.mxu0 0.0
  %108 = vmatpush2.msra.mxu0 0.0
  %109 = vmatprep.subr.mxu0 0.0
  %110 = vmatpush2.msra.mxu0 0.0
  %111 = vmatprep.subr.mxu0 0.0
  %112 = vmatpush2.msra.mxu0 0.0
  %113 = vmatprep.subr.mxu0 0.0
  %114 = vmatpush2.msra.mxu0 0.0
  %115 = vmatprep.subr.mxu0 0.0
  %116 = vmatpush2.msra.mxu0 0.0
  %117 = vmatprep.subr.mxu0 0.0
  %118 = vmatpush2.msra.mxu0 0.0
  %119 = vmatprep.subr.mxu0 0.0
  %120 = vmatpush2.msra.mxu0 0.0
  %121 = vmatprep.subr.mxu0 0.0
  %122 = vmatpush2.msra.mxu0 0.0
  %123 = vmatprep.subr.mxu0 0.0
  %124 = vmatpush2.msra.mxu0 0.0
  %125 = vmatprep.subr.mxu0 0.0
  %126 = vmatpush2.msra.mxu0 0.0
  %127 = vmatprep.subr.mxu0 0.0
  %128 = vmatpush2.msra.mxu0 0.0
  %129 = vmatprep.subr.mxu0 0.0
  %130 = vmatpush2.msra.mxu0 0.0
  %131 = vmatprep.subr.mxu0 0.0
  %132 = vmatpush2.msra.mxu0 0.0
  %133 = vmatprep.subr.mxu0 0.0
  %134 = vmatpush2.msra.mxu0 0.0
  %135 = vmatprep.subr.mxu0 0.0
  %136 = vmatpush2.msra.mxu0 0.0
  %137 = vmatprep.subr.mxu0 0.0
  %138 = vmatpush2.msra.mxu0 0.0
  %139 = vmatprep.mubr.f32.mxu0 0.0
  %140 = vmatmul.mubr.f32.gmra.mxu0 %v52
  %v141 = vpop.f32.mrf.mxu0
  %v142 = vadd.f32 %v48, %v141
  %v143 = vpop.f32.mrf.mxu0
  %144 = vmatprep.mubr.f32.mxu0 0.0
  %145 = vmatmul.mubr.f32.gmra.mxu0 %v55
  %v146 = vpop.f32.mrf.mxu0
  %v147 = vadd.f32 %v48, %v146
  %v148 = vpop.f32.mrf.mxu0
  %149 = vmatprep.mubr.f32.mxu0 0.0
  %150 = vmatmul.mubr.f32.gmra.mxu0 %v58
  %v151 = vpop.f32.mrf.mxu0
  %v152 = vadd.f32 %v48, %v151
  %v153 = vpop.f32.mrf.mxu0
  %154 = vmatprep.mubr.f32.mxu0 0.0
  %155 = vmatmul.mubr.f32.gmra.mxu0 %v61
  %v156 = vpop.f32.mrf.mxu0
  %v157 = vadd.f32 %v48, %v156
  %v158 = vpop.f32.mrf.mxu0
  %159 = vmatprep.mubr.f32.mxu0 0.0
  %160 = vmatmul.mubr.f32.gmra.mxu0 %v64
  %v161 = vpop.f32.mrf.mxu0
  %v162 = vadd.f32 %v48, %v161
  %v163 = vpop.f32.mrf.mxu0
  %164 = vmatprep.mubr.f32.mxu0 0.0
  %165 = vmatmul.mubr.f32.gmra.mxu0 %v67
  %v166 = vpop.f32.mrf.mxu0
  %v167 = vadd.f32 %v48, %v166
  %v168 = vpop.f32.mrf.mxu0
  %169 = vmatprep.mubr.f32.mxu0 0.0
  %170 = vmatmul.mubr.f32.gmra.mxu0 %v70
  %v171 = vpop.f32.mrf.mxu0
  %v172 = vadd.f32 %v48, %v171
  %v173 = vpop.f32.mrf.mxu0
  %174 = vmatprep.mubr.f32.mxu0 0.0
  %175 = vmatmul.mubr.f32.gmra.mxu0 %v73
  %v176 = vpop.f32.mrf.mxu0
  %v177 = vadd.f32 %v48, %v176
  %v178 = vpop.f32.mrf.mxu0
  %179 = vdwg.mxu0
  %v180 = vld [vmem:[%s1] sm:$0xff]
  %v181 = vld [vmem:[%s1 + $0x8] sm:$0xff]
  %v182 = vld [vmem:[%s1 + $0x10] sm:$0xff]
  %v183 = vld [vmem:[%s1 + $0x18] sm:$0xff]
  %v184 = vld [vmem:[%s1 + $0x20] sm:$0xff]
  %v185 = vld [vmem:[%s1 + $0x28] sm:$0xff]
  %v186 = vld [vmem:[%s1 + $0x30] sm:$0xff]
  %v187 = vld [vmem:[%s1 + $0x38] sm:$0xff]
  %189 = vset.pattern.permute.xlu0 0
  %190 = vperm.xlu0 %189, %v180
  %v191 = vpop.permute.xlu0 %190
  %194 = vset.pattern.permute.xlu0 0
  %195 = vperm.xlu0 %194, %v181
  %v196 = vpop.permute.xlu0 %195
  %199 = vset.pattern.permute.xlu0 0
  %200 = vperm.xlu0 %199, %v182
  %v201 = vpop.permute.xlu0 %200
  %204 = vset.pattern.permute.xlu0 0
  %205 = vperm.xlu0 %204, %v183
  %v206 = vpop.permute.xlu0 %205
  %209 = vset.pattern.permute.xlu0 0
  %210 = vperm.xlu0 %209, %v184
  %v211 = vpop.permute.xlu0 %210
  %214 = vset.pattern.permute.xlu0 0
  %215 = vperm.xlu0 %214, %v185
  %v216 = vpop.permute.xlu0 %215
  %219 = vset.pattern.permute.xlu0 0
  %220 = vperm.xlu0 %219, %v186
  %v221 = vpop.permute.xlu0 %220
  %224 = vset.pattern.permute.xlu0 0
  %225 = vperm.xlu0 %224, %v187
  %v226 = vpop.permute.xlu0 %225
  %v228 = vmul.f32 %v142, %v191
  %v229 = vmul.f32 %v147, %v196
  %v230 = vmul.f32 %v152, %v201
  %v231 = vmul.f32 %v157, %v206
  %v232 = vmul.f32 %v162, %v211
  %v233 = vmul.f32 %v167, %v216
  %v234 = vmul.f32 %v172, %v221
  %v235 = vmul.f32 %v177, %v226
  %244 = vrot.lane.b32.xlu0 %v228, 32
  %v245 = vpop.permute.xlu0 %244
  %246 = vrot.lane.b32.xlu0 %v229, 32
  %v247 = vpop.permute.xlu0 %246
  %248 = vrot.lane.b32.xlu0 %v230, 32
  %v249 = vpop.permute.xlu0 %248
  %250 = vrot.lane.b32.xlu0 %v231, 32
  %v251 = vpop.permute.xlu0 %250
  %252 = vrot.lane.b32.xlu0 %v232, 32
  %v253 = vpop.permute.xlu0 %252
  %254 = vrot.lane.b32.xlu0 %v233, 32
  %v255 = vpop.permute.xlu0 %254
  %256 = vrot.lane.b32.xlu0 %v234, 32
  %v257 = vpop.permute.xlu0 %256
  %258 = vrot.lane.b32.xlu0 %v235, 32
  %v259 = vpop.permute.xlu0 %258
  %v268 = vsel %vm50, %v142, %v245
  %v269 = vsel %vm50, %v147, %v247
  %v270 = vsel %vm50, %v152, %v249
  %v271 = vsel %vm50, %v157, %v251
  %v272 = vsel %vm50, %v162, %v253
  %v273 = vsel %vm50, %v167, %v255
  %v274 = vsel %vm50, %v172, %v257
  %v275 = vsel %vm50, %v177, %v259
  %v276 = vpack.c.bf16 %v269, %v268
  %v277 = vpack.c.bf16 %v271, %v270
  %v278 = vpack.c.bf16 %v273, %v272
  %v279 = vpack.c.bf16 %v275, %v274
  %v284 = vunpack.c.l.b16 %v276
  %v285 = vunpack.c.h.b16 %v276
  %v286 = vunpack.c.l.b16 %v277
  %v287 = vunpack.c.h.b16 %v277
  %v288 = vunpack.c.l.b16 %v278
  %v289 = vunpack.c.h.b16 %v278
  %v290 = vunpack.c.l.b16 %v279
  %v291 = vunpack.c.h.b16 %v279
  %v292 = vpack.c.b16 %v284, %v284
  %v293 = vpack.c.b16 %v285, %v285
  %v294 = vpack.c.b16 %v286, %v286
  %v295 = vpack.c.b16 %v287, %v287
  %v296 = vpack.c.b16 %v288, %v288
  %v297 = vpack.c.b16 %v289, %v289
  %v298 = vpack.c.b16 %v290, %v290
  %v299 = vpack.c.b16 %v291, %v291
  %vm308 = vcmask 519168
  %309 = vst.msk [vmem:[%s8] sm:$0xf] %vm308, %v292
  %310 = vst.msk [vmem:[%s8 + $0x4] sm:$0xf] %vm308, %v293
  %311 = vst.msk [vmem:[%s8 + $0x8] sm:$0xf] %vm308, %v294
  %312 = vst.msk [vmem:[%s8 + $0xc] sm:$0xf] %vm308, %v295
  %313 = vst.msk [vmem:[%s8 + $0x10] sm:$0xf] %vm308, %v296
  %314 = vst.msk [vmem:[%s8 + $0x14] sm:$0xf] %vm308, %v297
  %315 = vst.msk [vmem:[%s8 + $0x18] sm:$0xf] %vm308, %v298
  %316 = vst.msk [vmem:[%s8 + $0x1c] sm:$0xf] %vm308, %v299
  %v317 = vld [vmem:[%s4] sm:$0xff]
  %v318 = vld [vmem:[%s4 + $0x8] sm:$0xff]
  %v319 = vld [vmem:[%s4 + $0x10] sm:$0xff]
  %v320 = vld [vmem:[%s4 + $0x18] sm:$0xff]
  %v321 = vld [vmem:[%s5] sm:$0x1]
  %v323 = vlaneseq
  %v324 = vshrl.u32 %v323, 7
  %v325 = vsub.s32 0, %v324
  %v326 = vrot.slane %v321, %v325
  %v329 = vsel %vm50, %v142, 0
  %v332 = vsel %vm50, %v147, 0
  %v335 = vsel %vm50, %v152, 0
  %v338 = vsel %vm50, %v157, 0
  %v341 = vsel %vm50, %v162, 0
  %v344 = vsel %vm50, %v167, 0
  %v347 = vsel %vm50, %v172, 0
  %v350 = vsel %vm50, %v177, 0
  %352 = vmatprep.subr.mxu0 0.0
  %353 = vmatpush1.msra.mxu0 0.0
  %354 = vmatprep.subr.mxu0 0.0
  %355 = vmatpush1.msra.mxu0 0.0
  %356 = vmatprep.subr.mxu0 0.0
  %357 = vmatpush1.msra.mxu0 0.0
  %358 = vmatprep.subr.mxu0 0.0
  %359 = vmatpush1.msra.mxu0 0.0
  %360 = vmatprep.subr.mxu0 0.0
  %361 = vmatpush1.msra.mxu0 0.0
  %362 = vmatprep.subr.mxu0 0.0
  %363 = vmatpush1.msra.mxu0 0.0
  %364 = vmatprep.subr.mxu0 0.0
  %365 = vmatpush1.msra.mxu0 0.0
  %366 = vmatprep.subr.mxu0 0.0
  %367 = vmatpush1.msra.mxu0 0.0
  %368 = vmatprep.subr.mxu0 0.0
  %369 = vmatpush1.msra.mxu0 0.0
  %370 = vmatprep.subr.mxu0 0.0
  %371 = vmatpush1.msra.mxu0 0.0
  %372 = vmatprep.subr.mxu0 0.0
  %373 = vmatpush1.msra.mxu0 0.0
  %374 = vmatprep.subr.mxu0 0.0
  %375 = vmatpush1.msra.mxu0 0.0
  %376 = vmatprep.subr.mxu0 0.0
  %377 = vmatpush1.msra.mxu0 %v320
  %378 = vmatprep.subr.mxu0 0.0
  %379 = vmatpush1.msra.mxu0 %v319
  %380 = vmatprep.subr.mxu0 0.0
  %381 = vmatpush1.msra.mxu0 %v318
  %382 = vmatprep.subr.mxu0 0.0
  %383 = vmatpush1.msra.mxu0 %v317
  %384 = vmatprep.subr.mxu0 0.0
  %385 = vmatpush2.msra.mxu0 0.0
  %386 = vmatprep.subr.mxu0 0.0
  %387 = vmatpush2.msra.mxu0 0.0
  %388 = vmatprep.subr.mxu0 0.0
  %389 = vmatpush2.msra.mxu0 0.0
  %390 = vmatprep.subr.mxu0 0.0
  %391 = vmatpush2.msra.mxu0 0.0
  %392 = vmatprep.subr.mxu0 0.0
  %393 = vmatpush2.msra.mxu0 0.0
  %394 = vmatprep.subr.mxu0 0.0
  %395 = vmatpush2.msra.mxu0 0.0
  %396 = vmatprep.subr.mxu0 0.0
  %397 = vmatpush2.msra.mxu0 0.0
  %398 = vmatprep.subr.mxu0 0.0
  %399 = vmatpush2.msra.mxu0 0.0
  %400 = vmatprep.subr.mxu0 0.0
  %401 = vmatpush2.msra.mxu0 0.0
  %402 = vmatprep.subr.mxu0 0.0
  %403 = vmatpush2.msra.mxu0 0.0
  %404 = vmatprep.subr.mxu0 0.0
  %405 = vmatpush2.msra.mxu0 0.0
  %406 = vmatprep.subr.mxu0 0.0
  %407 = vmatpush2.msra.mxu0 0.0
  %408 = vmatprep.subr.mxu0 0.0
  %409 = vmatpush2.msra.mxu0 0.0
  %410 = vmatprep.subr.mxu0 0.0
  %411 = vmatpush2.msra.mxu0 0.0
  %412 = vmatprep.subr.mxu0 0.0
  %413 = vmatpush2.msra.mxu0 0.0
  %414 = vmatprep.subr.mxu0 0.0
  %415 = vmatpush2.msra.mxu0 0.0
  %416 = vmatprep.mubr.f32.mxu0 0.0
  %417 = vmatmul.mubr.f32.gmra.mxu0 %v329
  %v418 = vpop.f32.mrf.mxu0
  %v419 = vadd.f32 %v326, %v418
  %v420 = vpop.f32.mrf.mxu0
  %421 = vmatprep.mubr.f32.mxu0 0.0
  %422 = vmatmul.mubr.f32.gmra.mxu0 %v332
  %v423 = vpop.f32.mrf.mxu0
  %v424 = vadd.f32 %v326, %v423
  %v425 = vpop.f32.mrf.mxu0
  %426 = vmatprep.mubr.f32.mxu0 0.0
  %427 = vmatmul.mubr.f32.gmra.mxu0 %v335
  %v428 = vpop.f32.mrf.mxu0
  %v429 = vadd.f32 %v326, %v428
  %v430 = vpop.f32.mrf.mxu0
  %431 = vmatprep.mubr.f32.mxu0 0.0
  %432 = vmatmul.mubr.f32.gmra.mxu0 %v338
  %v433 = vpop.f32.mrf.mxu0
  %v434 = vadd.f32 %v326, %v433
  %v435 = vpop.f32.mrf.mxu0
  %436 = vmatprep.mubr.f32.mxu0 0.0
  %437 = vmatmul.mubr.f32.gmra.mxu0 %v341
  %v438 = vpop.f32.mrf.mxu0
  %v439 = vadd.f32 %v326, %v438
  %v440 = vpop.f32.mrf.mxu0
  %441 = vmatprep.mubr.f32.mxu0 0.0
  %442 = vmatmul.mubr.f32.gmra.mxu0 %v344
  %v443 = vpop.f32.mrf.mxu0
  %v444 = vadd.f32 %v326, %v443
  %v445 = vpop.f32.mrf.mxu0
  %446 = vmatprep.mubr.f32.mxu0 0.0
  %447 = vmatmul.mubr.f32.gmra.mxu0 %v347
  %v448 = vpop.f32.mrf.mxu0
  %v449 = vadd.f32 %v326, %v448
  %v450 = vpop.f32.mrf.mxu0
  %451 = vmatprep.mubr.f32.mxu0 0.0
  %452 = vmatmul.mubr.f32.gmra.mxu0 %v350
  %v453 = vpop.f32.mrf.mxu0
  %v454 = vadd.f32 %v326, %v453
  %v455 = vpop.f32.mrf.mxu0
  %456 = vdwg.mxu0
  %v457 = vmax.f32 %v419, 0.0
  %v458 = vmax.f32 %v424, 0.0
  %v459 = vmax.f32 %v429, 0.0
  %v460 = vmax.f32 %v434, 0.0
  %v461 = vmax.f32 %v439, 0.0
  %v462 = vmax.f32 %v444, 0.0
  %v463 = vmax.f32 %v449, 0.0
  %v464 = vmax.f32 %v454, 0.0
  %v465 = vsel %vm50, %v457, 0.0
  %466 = vadd.xlane.f32.xlu0 %v465
  %v467 = vpop.xlane.xlu0 %466
  %v468 = vsel %vm50, %v458, 0.0
  %469 = vadd.xlane.f32.xlu0 %v468
  %v470 = vpop.xlane.xlu0 %469
  %v471 = vsel %vm50, %v459, 0.0
  %472 = vadd.xlane.f32.xlu0 %v471
  %v473 = vpop.xlane.xlu0 %472
  %v474 = vsel %vm50, %v460, 0.0
  %475 = vadd.xlane.f32.xlu0 %v474
  %v476 = vpop.xlane.xlu0 %475
  %v477 = vsel %vm50, %v461, 0.0
  %478 = vadd.xlane.f32.xlu0 %v477
  %v479 = vpop.xlane.xlu0 %478
  %v480 = vsel %vm50, %v462, 0.0
  %481 = vadd.xlane.f32.xlu0 %v480
  %v482 = vpop.xlane.xlu0 %481
  %v483 = vsel %vm50, %v463, 0.0
  %484 = vadd.xlane.f32.xlu0 %v483
  %v485 = vpop.xlane.xlu0 %484
  %v486 = vsel %vm50, %v464, 0.0
  %487 = vadd.xlane.f32.xlu0 %v486
  %v488 = vpop.xlane.xlu0 %487
  %v489 = vrcp.pop 32.0
  %v490 = vmul.f32 %v467, %v489
  %v491 = vmul.f32 %v470, %v489
  %v492 = vmul.f32 %v473, %v489
  %v493 = vmul.f32 %v476, %v489
  %v494 = vmul.f32 %v479, %v489
  %v495 = vmul.f32 %v482, %v489
  %v496 = vmul.f32 %v485, %v489
  %v497 = vmul.f32 %v488, %v489
  %v498 = vsub.f32 %v457, %v490
  %v499 = vsub.f32 %v458, %v491
  %v500 = vsub.f32 %v459, %v492
  %v501 = vsub.f32 %v460, %v493
  %v502 = vsub.f32 %v461, %v494
  %v503 = vsub.f32 %v462, %v495
  %v504 = vsub.f32 %v463, %v496
  %v505 = vsub.f32 %v464, %v497
  %v506 = vmul.f32 %v498, %v498
  %v507 = vmul.f32 %v499, %v499
  %v508 = vmul.f32 %v500, %v500
  %v509 = vmul.f32 %v501, %v501
  %v510 = vmul.f32 %v502, %v502
  %v511 = vmul.f32 %v503, %v503
  %v512 = vmul.f32 %v504, %v504
  %v513 = vmul.f32 %v505, %v505
  %v514 = vsel %vm50, %v506, 0.0
  %515 = vadd.xlane.f32.xlu0 %v514
  %v516 = vpop.xlane.xlu0 %515
  %v517 = vsel %vm50, %v507, 0.0
  %518 = vadd.xlane.f32.xlu0 %v517
  %v519 = vpop.xlane.xlu0 %518
  %v520 = vsel %vm50, %v508, 0.0
  %521 = vadd.xlane.f32.xlu0 %v520
  %v522 = vpop.xlane.xlu0 %521
  %v523 = vsel %vm50, %v509, 0.0
  %524 = vadd.xlane.f32.xlu0 %v523
  %v525 = vpop.xlane.xlu0 %524
  %v526 = vsel %vm50, %v510, 0.0
  %527 = vadd.xlane.f32.xlu0 %v526
  %v528 = vpop.xlane.xlu0 %527
  %v529 = vsel %vm50, %v511, 0.0
  %530 = vadd.xlane.f32.xlu0 %v529
  %v531 = vpop.xlane.xlu0 %530
  %v532 = vsel %vm50, %v512, 0.0
  %533 = vadd.xlane.f32.xlu0 %v532
  %v534 = vpop.xlane.xlu0 %533
  %v535 = vsel %vm50, %v513, 0.0
  %536 = vadd.xlane.f32.xlu0 %v535
  %v537 = vpop.xlane.xlu0 %536
  %v538 = vmul.f32 %v516, %v489
  %v539 = vmul.f32 %v519, %v489
  %v540 = vmul.f32 %v522, %v489
  %v541 = vmul.f32 %v525, %v489
  %v542 = vmul.f32 %v528, %v489
  %v543 = vmul.f32 %v531, %v489
  %v544 = vmul.f32 %v534, %v489
  %v545 = vmul.f32 %v537, %v489
  %v546 = vadd.f32 %v538, 1e-05
  %v547 = vadd.f32 %v539, 1e-05
  %v548 = vadd.f32 %v540, 1e-05
  %v549 = vadd.f32 %v541, 1e-05
  %v550 = vadd.f32 %v542, 1e-05
  %v551 = vadd.f32 %v543, 1e-05
  %v552 = vadd.f32 %v544, 1e-05
  %v553 = vadd.f32 %v545, 1e-05
  %v554 = vrsqrt.pop %v546
  %v555 = vrsqrt.pop %v547
  %v556 = vrsqrt.pop %v548
  %v557 = vrsqrt.pop %v549
  %v558 = vrsqrt.pop %v550
  %v559 = vrsqrt.pop %v551
  %v560 = vrsqrt.pop %v552
  %v561 = vrsqrt.pop %v553
  %v562 = vmul.f32 %v498, %v554
  %v563 = vmul.f32 %v499, %v555
  %v564 = vmul.f32 %v500, %v556
  %v565 = vmul.f32 %v501, %v557
  %v566 = vmul.f32 %v502, %v558
  %v567 = vmul.f32 %v503, %v559
  %v568 = vmul.f32 %v504, %v560
  %v569 = vmul.f32 %v505, %v561
  %v570 = vld [vmem:[%s6] sm:$0x1]
  %v572 = vlaneseq
  %v573 = vshrl.u32 %v572, 7
  %v574 = vsub.s32 0, %v573
  %v575 = vrot.slane %v570, %v574
  %v577 = vmul.f32 %v562, %v575
  %v578 = vmul.f32 %v563, %v575
  %v579 = vmul.f32 %v564, %v575
  %v580 = vmul.f32 %v565, %v575
  %v581 = vmul.f32 %v566, %v575
  %v582 = vmul.f32 %v567, %v575
  %v583 = vmul.f32 %v568, %v575
  %v584 = vmul.f32 %v569, %v575
  %v585 = vld [vmem:[%s7] sm:$0x1]
  %v587 = vlaneseq
  %v588 = vshrl.u32 %v587, 7
  %v589 = vsub.s32 0, %v588
  %v590 = vrot.slane %v585, %v589
  %v592 = vadd.f32 %v577, %v590
  %v593 = vadd.f32 %v578, %v590
  %v594 = vadd.f32 %v579, %v590
  %v595 = vadd.f32 %v580, %v590
  %v596 = vadd.f32 %v581, %v590
  %v597 = vadd.f32 %v582, %v590
  %v598 = vadd.f32 %v583, %v590
  %v599 = vadd.f32 %v584, %v590
  %600 = vst.msk [vmem:[%s9] sm:$0xff] %vm50, %v592
  %601 = vst.msk [vmem:[%s9 + $0x8] sm:$0xff] %vm50, %v593
  %602 = vst.msk [vmem:[%s9 + $0x10] sm:$0xff] %vm50, %v594
  %603 = vst.msk [vmem:[%s9 + $0x18] sm:$0xff] %vm50, %v595
  %604 = vst.msk [vmem:[%s9 + $0x20] sm:$0xff] %vm50, %v596
  %605 = vst.msk [vmem:[%s9 + $0x28] sm:$0xff] %vm50, %v597
  %606 = vst.msk [vmem:[%s9 + $0x30] sm:$0xff] %vm50, %v598
  %607 = vst.msk [vmem:[%s9 + $0x38] sm:$0xff] %vm50, %v599
  // Predicated region
  $region34: #{_lambda_.10} parent=0 // pred_check
    _
  $region35: #{_lambda_.10} parent=0 // pred_check_branch
    %609 = sbr.rel (0) target = $region37
  $region36: #{_lambda_.10} parent=0 // pred_region
    _
  $region37: #{_lambda_.10} parent=0 // pred_fallthru
    _
  // Predicated region
  $region38: #{_lambda_.10} parent=0 // pred_check
    _
  $region39: #{_lambda_.10} parent=0 // pred_check_branch
    %611 = sbr.rel (0) target = $region41
  $region40: #{_lambda_.10} parent=0 // pred_region
    _
  $region41: #{_lambda_.10} parent=0 // pred_fallthru
    _
  // Predicated region
  $region42: #{_lambda_.10} parent=0 // pred_check
    _
  $region43: #{_lambda_.10} parent=0 // pred_check_branch
    %613 = sbr.rel (0) target = $region45
  $region44: #{_lambda_.10} parent=0 // pred_region
    _
  $region45: #{_lambda_.10} parent=0 // pred_fallthru
    _
  // Predicated region
  $region46: #{_lambda_.10} parent=0 // pred_check
    _
  $region47: #{_lambda_.10} parent=0 // pred_check_branch
    %615 = sbr.rel (0) target = $region49
  $region48: #{_lambda_.10} parent=0 // pred_region
    _
  $region49: #{_lambda_.10} parent=0 // pred_fallthru
    _

// kernel: _lambda_.12
$region0: #{_lambda_.12}
  #allocation0 [shape = 'u32[]', space=smem, size = 0x4, offset = 0x4, fixed_abs, tag = 'smem constant byte address 0x4 - core index']
  #allocation1 [shape = 'u32[144,128]{1,0:T(1,128)}', space=vmem, size = 0x12000, scoped, tag = 'internal scratch']
  %s0 = inlined_call_operand.vmem [shape: f32[64,32], index: 0, kind: input, shape index: {}]
  %s1 = inlined_call_operand.vmem [shape: f32[64,96], index: 1, kind: input, shape index: {}]
  %s2 = inlined_call_operand.vmem [shape: f32[64,1], index: 2, kind: input, shape index: {}]
  %s3 = inlined_call_operand.vmem [shape: f32[32,16], index: 3, kind: input, shape index: {}]
  %s4 = inlined_call_operand.vmem [shape: f32[1,16], index: 4, kind: input, shape index: {}]
  %s5 = inlined_call_operand.vmem [shape: f32[1,16], index: 5, kind: input, shape index: {}]
  %s6 = inlined_call_operand.vmem [shape: f32[1,16], index: 6, kind: input, shape index: {}]
  %s7 = inlined_call_operand.vmem [shape: f32[64,16], index: 7, kind: output, shape index: {}]
  %s8 = sld [smem:[#allocation0]]
  $region38: #{_lambda_.12} parent=0
    _
  %s10 = ssub.s32 1, %s8
  %s11 = scalar_select 0, %s10, %s8
  // Predicated region
  $region2: #{_lambda_.12} parent=0 // pred_check
    _
  $region3: #{_lambda_.12} parent=0 // pred_check_branch
    %13 = sbr.rel (0) target = $region5
  $region4: #{_lambda_.12} parent=0 // pred_region
    _
  $region5: #{_lambda_.12} parent=0 // pred_fallthru
    _
  // Predicated region
  $region6: #{_lambda_.12} parent=0 // pred_check
    _
  $region7: #{_lambda_.12} parent=0 // pred_check_branch
    %15 = sbr.rel (0) target = $region9
  $region8: #{_lambda_.12} parent=0 // pred_region
    _
  $region9: #{_lambda_.12} parent=0 // pred_fallthru
    _
  // Predicated region
  $region10: #{_lambda_.12} parent=0 // pred_check
    _
  $region11: #{_lambda_.12} parent=0 // pred_check_branch
    %17 = sbr.rel (0) target = $region13
  $region12: #{_lambda_.12} parent=0 // pred_region
    _
  $region13: #{_lambda_.12} parent=0 // pred_fallthru
    _
  // Predicated region
  $region14: #{_lambda_.12} parent=0 // pred_check
    _
  $region15: #{_lambda_.12} parent=0 // pred_check_branch
    %19 = sbr.rel (0) target = $region17
  $region16: #{_lambda_.12} parent=0 // pred_region
    _
  $region17: #{_lambda_.12} parent=0 // pred_fallthru
    _
  // Predicated region
  $region18: #{_lambda_.12} parent=0 // pred_check
    _
  $region19: #{_lambda_.12} parent=0 // pred_check_branch
    %21 = sbr.rel (0) target = $region21
  $region20: #{_lambda_.12} parent=0 // pred_region
    _
  $region21: #{_lambda_.12} parent=0 // pred_fallthru
    _
  // Predicated region
  $region22: #{_lambda_.12} parent=0 // pred_check
    _
  $region23: #{_lambda_.12} parent=0 // pred_check_branch
    %23 = sbr.rel (0) target = $region25
  $region24: #{_lambda_.12} parent=0 // pred_region
    _
  $region25: #{_lambda_.12} parent=0 // pred_fallthru
    _
  // Predicated region
  $region26: #{_lambda_.12} parent=0 // pred_check
    _
  $region27: #{_lambda_.12} parent=0 // pred_check_branch
    %25 = sbr.rel (0) target = $region29
  $region28: #{_lambda_.12} parent=0 // pred_region
    _
  $region29: #{_lambda_.12} parent=0 // pred_fallthru
    _
  %v26 = vld [vmem:[%s1] sm:$0xff]
  %v27 = vld [vmem:[%s1 + $0x8] sm:$0xff]
  %v28 = vld [vmem:[%s1 + $0x10] sm:$0xff]
  %v29 = vld [vmem:[%s1 + $0x18] sm:$0xff]
  %v30 = vld [vmem:[%s1 + $0x20] sm:$0xff]
  %v31 = vld [vmem:[%s1 + $0x28] sm:$0xff]
  %v32 = vld [vmem:[%s1 + $0x30] sm:$0xff]
  %v33 = vld [vmem:[%s1 + $0x38] sm:$0xff]
  %v34 = vld [vmem:[%s0] sm:$0xff]
  %v35 = vld [vmem:[%s0 + $0x8] sm:$0xff]
  %v36 = vld [vmem:[%s0 + $0x10] sm:$0xff]
  %v37 = vld [vmem:[%s0 + $0x18] sm:$0xff]
  %v38 = vld [vmem:[%s0 + $0x20] sm:$0xff]
  %v39 = vld [vmem:[%s0 + $0x28] sm:$0xff]
  %v40 = vld [vmem:[%s0 + $0x30] sm:$0xff]
  %v41 = vld [vmem:[%s0 + $0x38] sm:$0xff]
  %v42 = vld [vmem:[%s2] sm:$0xff]
  %v43 = vld [vmem:[%s2 + $0x8] sm:$0xff]
  %v44 = vld [vmem:[%s2 + $0x10] sm:$0xff]
  %v45 = vld [vmem:[%s2 + $0x18] sm:$0xff]
  %v46 = vld [vmem:[%s2 + $0x20] sm:$0xff]
  %v47 = vld [vmem:[%s2 + $0x28] sm:$0xff]
  %v48 = vld [vmem:[%s2 + $0x30] sm:$0xff]
  %v49 = vld [vmem:[%s2 + $0x38] sm:$0xff]
  %51 = vset.pattern.permute.xlu0 0
  %52 = vperm.xlu0 %51, %v42
  %v53 = vpop.permute.xlu0 %52
  %56 = vset.pattern.permute.xlu0 0
  %57 = vperm.xlu0 %56, %v43
  %v58 = vpop.permute.xlu0 %57
  %61 = vset.pattern.permute.xlu0 0
  %62 = vperm.xlu0 %61, %v44
  %v63 = vpop.permute.xlu0 %62
  %66 = vset.pattern.permute.xlu0 0
  %67 = vperm.xlu0 %66, %v45
  %v68 = vpop.permute.xlu0 %67
  %71 = vset.pattern.permute.xlu0 0
  %72 = vperm.xlu0 %71, %v46
  %v73 = vpop.permute.xlu0 %72
  %76 = vset.pattern.permute.xlu0 0
  %77 = vperm.xlu0 %76, %v47
  %v78 = vpop.permute.xlu0 %77
  %81 = vset.pattern.permute.xlu0 0
  %82 = vperm.xlu0 %81, %v48
  %v83 = vpop.permute.xlu0 %82
  %86 = vset.pattern.permute.xlu0 0
  %87 = vperm.xlu0 %86, %v49
  %v88 = vpop.permute.xlu0 %87
  %v90 = vmul.f32 %v53, %v26
  %v91 = vmul.f32 %v58, %v27
  %v92 = vmul.f32 %v63, %v28
  %v93 = vmul.f32 %v68, %v29
  %v94 = vmul.f32 %v73, %v30
  %v95 = vmul.f32 %v78, %v31
  %v96 = vmul.f32 %v83, %v32
  %v97 = vmul.f32 %v88, %v33
  %v98 = vadd.f32 %v34, %v90
  %v99 = vadd.f32 %v35, %v91
  %v100 = vadd.f32 %v36, %v92
  %v101 = vadd.f32 %v37, %v93
  %v102 = vadd.f32 %v38, %v94
  %v103 = vadd.f32 %v39, %v95
  %v104 = vadd.f32 %v40, %v96
  %v105 = vadd.f32 %v41, %v97
  %v106 = vadd.f32 %v26, 1e-16
  %v107 = vadd.f32 %v27, 1e-16
  %v108 = vadd.f32 %v28, 1e-16
  %v109 = vadd.f32 %v29, 1e-16
  %v110 = vadd.f32 %v30, 1e-16
  %v111 = vadd.f32 %v31, 1e-16
  %v112 = vadd.f32 %v32, 1e-16
  %v113 = vadd.f32 %v33, 1e-16
  %v114 = vrcp.pop %v106
  %v115 = vrcp.pop %v107
  %v116 = vrcp.pop %v108
  %v117 = vrcp.pop %v109
  %v118 = vrcp.pop %v110
  %v119 = vrcp.pop %v111
  %v120 = vrcp.pop %v112
  %v121 = vrcp.pop %v113
  %130 = vrot.lane.b32.xlu0 %v114, 96
  %v131 = vpop.permute.xlu0 %130
  %132 = vrot.lane.b32.xlu0 %v115, 96
  %v133 = vpop.permute.xlu0 %132
  %134 = vrot.lane.b32.xlu0 %v116, 96
  %v135 = vpop.permute.xlu0 %134
  %136 = vrot.lane.b32.xlu0 %v117, 96
  %v137 = vpop.permute.xlu0 %136
  %138 = vrot.lane.b32.xlu0 %v118, 96
  %v139 = vpop.permute.xlu0 %138
  %140 = vrot.lane.b32.xlu0 %v119, 96
  %v141 = vpop.permute.xlu0 %140
  %142 = vrot.lane.b32.xlu0 %v120, 96
  %v143 = vpop.permute.xlu0 %142
  %144 = vrot.lane.b32.xlu0 %v121, 96
  %v145 = vpop.permute.xlu0 %144
  %v154 = vmul.f32 %v26, %v131
  %v155 = vmul.f32 %v27, %v133
  %v156 = vmul.f32 %v28, %v135
  %v157 = vmul.f32 %v29, %v137
  %v158 = vmul.f32 %v30, %v139
  %v159 = vmul.f32 %v31, %v141
  %v160 = vmul.f32 %v32, %v143
  %v161 = vmul.f32 %v33, %v145
  %v162 = vmax.f32 %v154, 0.0
  %v163 = vmax.f32 %v155, 0.0
  %v164 = vmax.f32 %v156, 0.0
  %v165 = vmax.f32 %v157, 0.0
  %v166 = vmax.f32 %v158, 0.0
  %v167 = vmax.f32 %v159, 0.0
  %v168 = vmax.f32 %v160, 0.0
  %v169 = vmax.f32 %v161, 0.0
  %v170 = vmul.f32 %v162, 0.1
  %v171 = vmul.f32 %v163, 0.1
  %v172 = vmul.f32 %v164, 0.1
  %v173 = vmul.f32 %v165, 0.1
  %v174 = vmul.f32 %v166, 0.1
  %v175 = vmul.f32 %v167, 0.1
  %v176 = vmul.f32 %v168, 0.1
  %v177 = vmul.f32 %v169, 0.1
  %186 = vrot.lane.b32.xlu0 %v170, 96
  %v187 = vpop.permute.xlu0 %186
  %188 = vrot.lane.b32.xlu0 %v171, 96
  %v189 = vpop.permute.xlu0 %188
  %190 = vrot.lane.b32.xlu0 %v172, 96
  %v191 = vpop.permute.xlu0 %190
  %192 = vrot.lane.b32.xlu0 %v173, 96
  %v193 = vpop.permute.xlu0 %192
  %194 = vrot.lane.b32.xlu0 %v174, 96
  %v195 = vpop.permute.xlu0 %194
  %196 = vrot.lane.b32.xlu0 %v175, 96
  %v197 = vpop.permute.xlu0 %196
  %198 = vrot.lane.b32.xlu0 %v176, 96
  %v199 = vpop.permute.xlu0 %198
  %200 = vrot.lane.b32.xlu0 %v177, 96
  %v201 = vpop.permute.xlu0 %200
  %v210 = vadd.f32 %v98, %v187
  %v211 = vadd.f32 %v99, %v189
  %v212 = vadd.f32 %v100, %v191
  %v213 = vadd.f32 %v101, %v193
  %v214 = vadd.f32 %v102, %v195
  %v215 = vadd.f32 %v103, %v197
  %v216 = vadd.f32 %v104, %v199
  %v217 = vadd.f32 %v105, %v201
  %v218 = vld [vmem:[%s3] sm:$0xff]
  %v219 = vld [vmem:[%s3 + $0x8] sm:$0xff]
  %v220 = vld [vmem:[%s3 + $0x10] sm:$0xff]
  %v221 = vld [vmem:[%s3 + $0x18] sm:$0xff]
  %v222 = vld [vmem:[%s4] sm:$0x1]
  %v224 = vlaneseq
  %v225 = vshrl.u32 %v224, 7
  %v226 = vsub.s32 0, %v225
  %v227 = vrot.slane %v222, %v226
  %vm229 = vcmask 261120
  %v231 = vsel %vm229, %v210, 0
  %v234 = vsel %vm229, %v211, 0
  %v237 = vsel %vm229, %v212, 0
  %v240 = vsel %vm229, %v213, 0
  %v243 = vsel %vm229, %v214, 0
  %v246 = vsel %vm229, %v215, 0
  %v249 = vsel %vm229, %v216, 0
  %v252 = vsel %vm229, %v217, 0
  %254 = vmatprep.subr.mxu0 0.0
  %255 = vmatpush1.msra.mxu0 0.0
  %256 = vmatprep.subr.mxu0 0.0
  %257 = vmatpush1.msra.mxu0 0.0
  %258 = vmatprep.subr.mxu0 0.0
  %259 = vmatpush1.msra.mxu0 0.0
  %260 = vmatprep.subr.mxu0 0.0
  %261 = vmatpush1.msra.mxu0 0.0
  %262 = vmatprep.subr.mxu0 0.0
  %263 = vmatpush1.msra.mxu0 0.0
  %264 = vmatprep.subr.mxu0 0.0
  %265 = vmatpush1.msra.mxu0 0.0
  %266 = vmatprep.subr.mxu0 0.0
  %267 = vmatpush1.msra.mxu0 0.0
  %268 = vmatprep.subr.mxu0 0.0
  %269 = vmatpush1.msra.mxu0 0.0
  %270 = vmatprep.subr.mxu0 0.0
  %271 = vmatpush1.msra.mxu0 0.0
  %272 = vmatprep.subr.mxu0 0.0
  %273 = vmatpush1.msra.mxu0 0.0
  %274 = vmatprep.subr.mxu0 0.0
  %275 = vmatpush1.msra.mxu0 0.0
  %276 = vmatprep.subr.mxu0 0.0
  %277 = vmatpush1.msra.mxu0 0.0
  %278 = vmatprep.subr.mxu0 0.0
  %279 = vmatpush1.msra.mxu0 %v221
  %280 = vmatprep.subr.mxu0 0.0
  %281 = vmatpush1.msra.mxu0 %v220
  %282 = vmatprep.subr.mxu0 0.0
  %283 = vmatpush1.msra.mxu0 %v219
  %284 = vmatprep.subr.mxu0 0.0
  %285 = vmatpush1.msra.mxu0 %v218
  %286 = vmatprep.subr.mxu0 0.0
  %287 = vmatpush2.msra.mxu0 0.0
  %288 = vmatprep.subr.mxu0 0.0
  %289 = vmatpush2.msra.mxu0 0.0
  %290 = vmatprep.subr.mxu0 0.0
  %291 = vmatpush2.msra.mxu0 0.0
  %292 = vmatprep.subr.mxu0 0.0
  %293 = vmatpush2.msra.mxu0 0.0
  %294 = vmatprep.subr.mxu0 0.0
  %295 = vmatpush2.msra.mxu0 0.0
  %296 = vmatprep.subr.mxu0 0.0
  %297 = vmatpush2.msra.mxu0 0.0
  %298 = vmatprep.subr.mxu0 0.0
  %299 = vmatpush2.msra.mxu0 0.0
  %300 = vmatprep.subr.mxu0 0.0
  %301 = vmatpush2.msra.mxu0 0.0
  %302 = vmatprep.subr.mxu0 0.0
  %303 = vmatpush2.msra.mxu0 0.0
  %304 = vmatprep.subr.mxu0 0.0
  %305 = vmatpush2.msra.mxu0 0.0
  %306 = vmatprep.subr.mxu0 0.0
  %307 = vmatpush2.msra.mxu0 0.0
  %308 = vmatprep.subr.mxu0 0.0
  %309 = vmatpush2.msra.mxu0 0.0
  %310 = vmatprep.subr.mxu0 0.0
  %311 = vmatpush2.msra.mxu0 0.0
  %312 = vmatprep.subr.mxu0 0.0
  %313 = vmatpush2.msra.mxu0 0.0
  %314 = vmatprep.subr.mxu0 0.0
  %315 = vmatpush2.msra.mxu0 0.0
  %316 = vmatprep.subr.mxu0 0.0
  %317 = vmatpush2.msra.mxu0 0.0
  %318 = vmatprep.mubr.f32.mxu0 0.0
  %319 = vmatmul.mubr.f32.gmra.mxu0 %v231
  %v320 = vpop.f32.mrf.mxu0
  %v321 = vadd.f32 %v227, %v320
  %v322 = vpop.f32.mrf.mxu0
  %323 = vmatprep.mubr.f32.mxu0 0.0
  %324 = vmatmul.mubr.f32.gmra.mxu0 %v234
  %v325 = vpop.f32.mrf.mxu0
  %v326 = vadd.f32 %v227, %v325
  %v327 = vpop.f32.mrf.mxu0
  %328 = vmatprep.mubr.f32.mxu0 0.0
  %329 = vmatmul.mubr.f32.gmra.mxu0 %v237
  %v330 = vpop.f32.mrf.mxu0
  %v331 = vadd.f32 %v227, %v330
  %v332 = vpop.f32.mrf.mxu0
  %333 = vmatprep.mubr.f32.mxu0 0.0
  %334 = vmatmul.mubr.f32.gmra.mxu0 %v240
  %v335 = vpop.f32.mrf.mxu0
  %v336 = vadd.f32 %v227, %v335
  %v337 = vpop.f32.mrf.mxu0
  %338 = vmatprep.mubr.f32.mxu0 0.0
  %339 = vmatmul.mubr.f32.gmra.mxu0 %v243
  %v340 = vpop.f32.mrf.mxu0
  %v341 = vadd.f32 %v227, %v340
  %v342 = vpop.f32.mrf.mxu0
  %343 = vmatprep.mubr.f32.mxu0 0.0
  %344 = vmatmul.mubr.f32.gmra.mxu0 %v246
  %v345 = vpop.f32.mrf.mxu0
  %v346 = vadd.f32 %v227, %v345
  %v347 = vpop.f32.mrf.mxu0
  %348 = vmatprep.mubr.f32.mxu0 0.0
  %349 = vmatmul.mubr.f32.gmra.mxu0 %v249
  %v350 = vpop.f32.mrf.mxu0
  %v351 = vadd.f32 %v227, %v350
  %v352 = vpop.f32.mrf.mxu0
  %353 = vmatprep.mubr.f32.mxu0 0.0
  %354 = vmatmul.mubr.f32.gmra.mxu0 %v252
  %v355 = vpop.f32.mrf.mxu0
  %v356 = vadd.f32 %v227, %v355
  %v357 = vpop.f32.mrf.mxu0
  %358 = vdwg.mxu0
  %vm359 = vcmask 130048
  %v360 = vsel %vm359, %v321, 0.0
  %361 = vadd.xlane.f32.xlu0 %v360
  %v362 = vpop.xlane.xlu0 %361
  %v363 = vsel %vm359, %v326, 0.0
  %364 = vadd.xlane.f32.xlu0 %v363
  %v365 = vpop.xlane.xlu0 %364
  %v366 = vsel %vm359, %v331, 0.0
  %367 = vadd.xlane.f32.xlu0 %v366
  %v368 = vpop.xlane.xlu0 %367
  %v369 = vsel %vm359, %v336, 0.0
  %370 = vadd.xlane.f32.xlu0 %v369
  %v371 = vpop.xlane.xlu0 %370
  %v372 = vsel %vm359, %v341, 0.0
  %373 = vadd.xlane.f32.xlu0 %v372
  %v374 = vpop.xlane.xlu0 %373
  %v375 = vsel %vm359, %v346, 0.0
  %376 = vadd.xlane.f32.xlu0 %v375
  %v377 = vpop.xlane.xlu0 %376
  %v378 = vsel %vm359, %v351, 0.0
  %379 = vadd.xlane.f32.xlu0 %v378
  %v380 = vpop.xlane.xlu0 %379
  %v381 = vsel %vm359, %v356, 0.0
  %382 = vadd.xlane.f32.xlu0 %v381
  %v383 = vpop.xlane.xlu0 %382
  %v384 = vrcp.pop 16.0
  %v385 = vmul.f32 %v362, %v384
  %v386 = vmul.f32 %v365, %v384
  %v387 = vmul.f32 %v368, %v384
  %v388 = vmul.f32 %v371, %v384
  %v389 = vmul.f32 %v374, %v384
  %v390 = vmul.f32 %v377, %v384
  %v391 = vmul.f32 %v380, %v384
  %v392 = vmul.f32 %v383, %v384
  %v393 = vsub.f32 %v321, %v385
  %v394 = vsub.f32 %v326, %v386
  %v395 = vsub.f32 %v331, %v387
  %v396 = vsub.f32 %v336, %v388
  %v397 = vsub.f32 %v341, %v389
  %v398 = vsub.f32 %v346, %v390
  %v399 = vsub.f32 %v351, %v391
  %v400 = vsub.f32 %v356, %v392
  %v401 = vmul.f32 %v393, %v393
  %v402 = vmul.f32 %v394, %v394
  %v403 = vmul.f32 %v395, %v395
  %v404 = vmul.f32 %v396, %v396
  %v405 = vmul.f32 %v397, %v397
  %v406 = vmul.f32 %v398, %v398
  %v407 = vmul.f32 %v399, %v399
  %v408 = vmul.f32 %v400, %v400
  %v409 = vsel %vm359, %v401, 0.0
  %410 = vadd.xlane.f32.xlu0 %v409
  %v411 = vpop.xlane.xlu0 %410
  %v412 = vsel %vm359, %v402, 0.0
  %413 = vadd.xlane.f32.xlu0 %v412
  %v414 = vpop.xlane.xlu0 %413
  %v415 = vsel %vm359, %v403, 0.0
  %416 = vadd.xlane.f32.xlu0 %v415
  %v417 = vpop.xlane.xlu0 %416
  %v418 = vsel %vm359, %v404, 0.0
  %419 = vadd.xlane.f32.xlu0 %v418
  %v420 = vpop.xlane.xlu0 %419
  %v421 = vsel %vm359, %v405, 0.0
  %422 = vadd.xlane.f32.xlu0 %v421
  %v423 = vpop.xlane.xlu0 %422
  %v424 = vsel %vm359, %v406, 0.0
  %425 = vadd.xlane.f32.xlu0 %v424
  %v426 = vpop.xlane.xlu0 %425
  %v427 = vsel %vm359, %v407, 0.0
  %428 = vadd.xlane.f32.xlu0 %v427
  %v429 = vpop.xlane.xlu0 %428
  %v430 = vsel %vm359, %v408, 0.0
  %431 = vadd.xlane.f32.xlu0 %v430
  %v432 = vpop.xlane.xlu0 %431
  %v433 = vmul.f32 %v411, %v384
  %v434 = vmul.f32 %v414, %v384
  %v435 = vmul.f32 %v417, %v384
  %v436 = vmul.f32 %v420, %v384
  %v437 = vmul.f32 %v423, %v384
  %v438 = vmul.f32 %v426, %v384
  %v439 = vmul.f32 %v429, %v384
  %v440 = vmul.f32 %v432, %v384
  %v441 = vadd.f32 %v433, 1e-05
  %v442 = vadd.f32 %v434, 1e-05
  %v443 = vadd.f32 %v435, 1e-05
  %v444 = vadd.f32 %v436, 1e-05
  %v445 = vadd.f32 %v437, 1e-05
  %v446 = vadd.f32 %v438, 1e-05
  %v447 = vadd.f32 %v439, 1e-05
  %v448 = vadd.f32 %v440, 1e-05
  %v449 = vrsqrt.pop %v441
  %v450 = vrsqrt.pop %v442
  %v451 = vrsqrt.pop %v443
  %v452 = vrsqrt.pop %v444
  %v453 = vrsqrt.pop %v445
  %v454 = vrsqrt.pop %v446
  %v455 = vrsqrt.pop %v447
  %v456 = vrsqrt.pop %v448
  %v457 = vmul.f32 %v393, %v449
  %v458 = vmul.f32 %v394, %v450
  %v459 = vmul.f32 %v395, %v451
  %v460 = vmul.f32 %v396, %v452
  %v461 = vmul.f32 %v397, %v453
  %v462 = vmul.f32 %v398, %v454
  %v463 = vmul.f32 %v399, %v455
  %v464 = vmul.f32 %v400, %v456
  %v465 = vld [vmem:[%s5] sm:$0x1]
  %v467 = vlaneseq
  %v468 = vshrl.u32 %v467, 7
  %v469 = vsub.s32 0, %v468
  %v470 = vrot.slane %v465, %v469
  %v472 = vmul.f32 %v457, %v470
  %v473 = vmul.f32 %v458, %v470
  %v474 = vmul.f32 %v459, %v470
  %v475 = vmul.f32 %v460, %v470
  %v476 = vmul.f32 %v461, %v470
  %v477 = vmul.f32 %v462, %v470
  %v478 = vmul.f32 %v463, %v470
  %v479 = vmul.f32 %v464, %v470
  %v480 = vld [vmem:[%s6] sm:$0x1]
  %v482 = vlaneseq
  %v483 = vshrl.u32 %v482, 7
  %v484 = vsub.s32 0, %v483
  %v485 = vrot.slane %v480, %v484
  %v487 = vadd.f32 %v472, %v485
  %v488 = vadd.f32 %v473, %v485
  %v489 = vadd.f32 %v474, %v485
  %v490 = vadd.f32 %v475, %v485
  %v491 = vadd.f32 %v476, %v485
  %v492 = vadd.f32 %v477, %v485
  %v493 = vadd.f32 %v478, %v485
  %v494 = vadd.f32 %v479, %v485
  %495 = vst.msk [vmem:[%s7] sm:$0xff] %vm359, %v487
  %496 = vst.msk [vmem:[%s7 + $0x8] sm:$0xff] %vm359, %v488
  %497 = vst.msk [vmem:[%s7 + $0x10] sm:$0xff] %vm359, %v489
  %498 = vst.msk [vmem:[%s7 + $0x18] sm:$0xff] %vm359, %v490
  %499 = vst.msk [vmem:[%s7 + $0x20] sm:$0xff] %vm359, %v491
  %500 = vst.msk [vmem:[%s7 + $0x28] sm:$0xff] %vm359, %v492
  %501 = vst.msk [vmem:[%s7 + $0x30] sm:$0xff] %vm359, %v493
  %502 = vst.msk [vmem:[%s7 + $0x38] sm:$0xff] %vm359, %v494
  // Predicated region
  $region30: #{_lambda_.12} parent=0 // pred_check
    _
  $region31: #{_lambda_.12} parent=0 // pred_check_branch
    %504 = sbr.rel (0) target = $region33
  $region32: #{_lambda_.12} parent=0 // pred_region
    _
  $region33: #{_lambda_.12} parent=0 // pred_fallthru
    _
  // Predicated region
  $region34: #{_lambda_.12} parent=0 // pred_check
    _
  $region35: #{_lambda_.12} parent=0 // pred_check_branch
    %506 = sbr.rel (0) target = $region37
  $region36: #{_lambda_.12} parent=0 // pred_region
    _
  $region37: #{_lambda_.12} parent=0 // pred_fallthru
    _

// kernel: _lambda_.13
$region0: #{_lambda_.13}
  #allocation0 [shape = 'u32[]', space=smem, size = 0x4, offset = 0x4, fixed_abs, tag = 'smem constant byte address 0x4 - core index']
  #allocation1 [shape = 'u32[144,128]{1,0:T(1,128)}', space=vmem, size = 0x12000, scoped, tag = 'internal scratch']
  %s0 = inlined_call_operand.vmem [shape: f32[64,16], index: 0, kind: input, shape index: {}]
  %s1 = inlined_call_operand.vmem [shape: f32[64,1], index: 1, kind: input, shape index: {}]
  %s2 = inlined_call_operand.vmem [shape: f32[16,16], index: 2, kind: input, shape index: {}]
  %s3 = inlined_call_operand.vmem [shape: f32[1,16], index: 3, kind: input, shape index: {}]
  %s4 = inlined_call_operand.vmem [shape: f32[16,16], index: 4, kind: input, shape index: {}]
  %s5 = inlined_call_operand.vmem [shape: f32[1,16], index: 5, kind: input, shape index: {}]
  %s6 = inlined_call_operand.vmem [shape: f32[1,16], index: 6, kind: input, shape index: {}]
  %s7 = inlined_call_operand.vmem [shape: f32[1,16], index: 7, kind: input, shape index: {}]
  %s8 = inlined_call_operand.vmem [shape: bf16[64,32], index: 8, kind: output, shape index: {0}]
  %s9 = inlined_call_operand.vmem [shape: f32[64,16], index: 9, kind: output, shape index: {1}]
  %10 = xla_tuple %s8, %s9
  %s11 = sld [smem:[#allocation0]]
  $region50: #{_lambda_.13} parent=0
    _
  %s13 = ssub.s32 1, %s11
  %s14 = scalar_select 0, %s13, %s11
  // Predicated region
  $region2: #{_lambda_.13} parent=0 // pred_check
    _
  $region3: #{_lambda_.13} parent=0 // pred_check_branch
    %16 = sbr.rel (0) target = $region5
  $region4: #{_lambda_.13} parent=0 // pred_region
    _
  $region5: #{_lambda_.13} parent=0 // pred_fallthru
    _
  // Predicated region
  $region6: #{_lambda_.13} parent=0 // pred_check
    _
  $region7: #{_lambda_.13} parent=0 // pred_check_branch
    %18 = sbr.rel (0) target = $region9
  $region8: #{_lambda_.13} parent=0 // pred_region
    _
  $region9: #{_lambda_.13} parent=0 // pred_fallthru
    _
  // Predicated region
  $region10: #{_lambda_.13} parent=0 // pred_check
    _
  $region11: #{_lambda_.13} parent=0 // pred_check_branch
    %20 = sbr.rel (0) target = $region13
  $region12: #{_lambda_.13} parent=0 // pred_region
    _
  $region13: #{_lambda_.13} parent=0 // pred_fallthru
    _
  // Predicated region
  $region14: #{_lambda_.13} parent=0 // pred_check
    _
  $region15: #{_lambda_.13} parent=0 // pred_check_branch
    %22 = sbr.rel (0) target = $region17
  $region16: #{_lambda_.13} parent=0 // pred_region
    _
  $region17: #{_lambda_.13} parent=0 // pred_fallthru
    _
  // Predicated region
  $region18: #{_lambda_.13} parent=0 // pred_check
    _
  $region19: #{_lambda_.13} parent=0 // pred_check_branch
    %24 = sbr.rel (0) target = $region21
  $region20: #{_lambda_.13} parent=0 // pred_region
    _
  $region21: #{_lambda_.13} parent=0 // pred_fallthru
    _
  // Predicated region
  $region22: #{_lambda_.13} parent=0 // pred_check
    _
  $region23: #{_lambda_.13} parent=0 // pred_check_branch
    %26 = sbr.rel (0) target = $region25
  $region24: #{_lambda_.13} parent=0 // pred_region
    _
  $region25: #{_lambda_.13} parent=0 // pred_fallthru
    _
  // Predicated region
  $region26: #{_lambda_.13} parent=0 // pred_check
    _
  $region27: #{_lambda_.13} parent=0 // pred_check_branch
    %28 = sbr.rel (0) target = $region29
  $region28: #{_lambda_.13} parent=0 // pred_region
    _
  $region29: #{_lambda_.13} parent=0 // pred_fallthru
    _
  // Predicated region
  $region30: #{_lambda_.13} parent=0 // pred_check
    _
  $region31: #{_lambda_.13} parent=0 // pred_check_branch
    %30 = sbr.rel (0) target = $region33
  $region32: #{_lambda_.13} parent=0 // pred_region
    _
  $region33: #{_lambda_.13} parent=0 // pred_fallthru
    _
  %v31 = vld [vmem:[%s0] sm:$0xff]
  %v32 = vld [vmem:[%s0 + $0x8] sm:$0xff]
  %v33 = vld [vmem:[%s0 + $0x10] sm:$0xff]
  %v34 = vld [vmem:[%s0 + $0x18] sm:$0xff]
  %v35 = vld [vmem:[%s0 + $0x20] sm:$0xff]
  %v36 = vld [vmem:[%s0 + $0x28] sm:$0xff]
  %v37 = vld [vmem:[%s0 + $0x30] sm:$0xff]
  %v38 = vld [vmem:[%s0 + $0x38] sm:$0xff]
  %v39 = vld [vmem:[%s2] sm:$0xff]
  %v40 = vld [vmem:[%s2 + $0x8] sm:$0xff]
  %v41 = vld [vmem:[%s3] sm:$0x1]
  %v43 = vlaneseq
  %v44 = vshrl.u32 %v43, 7
  %v45 = vsub.s32 0, %v44
  %v46 = vrot.slane %v41, %v45
  %vm48 = vcmask 130048
  %v50 = vsel %vm48, %v31, 0
  %v53 = vsel %vm48, %v32, 0
  %v56 = vsel %vm48, %v33, 0
  %v59 = vsel %vm48, %v34, 0
  %v62 = vsel %vm48, %v35, 0
  %v65 = vsel %vm48, %v36, 0
  %v68 = vsel %vm48, %v37, 0
  %v71 = vsel %vm48, %v38, 0
  %73 = vmatprep.subr.mxu0 0.0
  %74 = vmatpush1.msra.mxu0 0.0
  %75 = vmatprep.subr.mxu0 0.0
  %76 = vmatpush1.msra.mxu0 0.0
  %77 = vmatprep.subr.mxu0 0.0
  %78 = vmatpush1.msra.mxu0 0.0
  %79 = vmatprep.subr.mxu0 0.0
  %80 = vmatpush1.msra.mxu0 0.0
  %81 = vmatprep.subr.mxu0 0.0
  %82 = vmatpush1.msra.mxu0 0.0
  %83 = vmatprep.subr.mxu0 0.0
  %84 = vmatpush1.msra.mxu0 0.0
  %85 = vmatprep.subr.mxu0 0.0
  %86 = vmatpush1.msra.mxu0 0.0
  %87 = vmatprep.subr.mxu0 0.0
  %88 = vmatpush1.msra.mxu0 0.0
  %89 = vmatprep.subr.mxu0 0.0
  %90 = vmatpush1.msra.mxu0 0.0
  %91 = vmatprep.subr.mxu0 0.0
  %92 = vmatpush1.msra.mxu0 0.0
  %93 = vmatprep.subr.mxu0 0.0
  %94 = vmatpush1.msra.mxu0 0.0
  %95 = vmatprep.subr.mxu0 0.0
  %96 = vmatpush1.msra.mxu0 0.0
  %97 = vmatprep.subr.mxu0 0.0
  %98 = vmatpush1.msra.mxu0 0.0
  %99 = vmatprep.subr.mxu0 0.0
  %100 = vmatpush1.msra.mxu0 0.0
  %101 = vmatprep.subr.mxu0 0.0
  %102 = vmatpush1.msra.mxu0 %v40
  %103 = vmatprep.subr.mxu0 0.0
  %104 = vmatpush1.msra.mxu0 %v39
  %105 = vmatprep.subr.mxu0 0.0
  %106 = vmatpush2.msra.mxu0 0.0
  %107 = vmatprep.subr.mxu0 0.0
  %108 = vmatpush2.msra.mxu0 0.0
  %109 = vmatprep.subr.mxu0 0.0
  %110 = vmatpush2.msra.mxu0 0.0
  %111 = vmatprep.subr.mxu0 0.0
  %112 = vmatpush2.msra.mxu0 0.0
  %113 = vmatprep.subr.mxu0 0.0
  %114 = vmatpush2.msra.mxu0 0.0
  %115 = vmatprep.subr.mxu0 0.0
  %116 = vmatpush2.msra.mxu0 0.0
  %117 = vmatprep.subr.mxu0 0.0
  %118 = vmatpush2.msra.mxu0 0.0
  %119 = vmatprep.subr.mxu0 0.0
  %120 = vmatpush2.msra.mxu0 0.0
  %121 = vmatprep.subr.mxu0 0.0
  %122 = vmatpush2.msra.mxu0 0.0
  %123 = vmatprep.subr.mxu0 0.0
  %124 = vmatpush2.msra.mxu0 0.0
  %125 = vmatprep.subr.mxu0 0.0
  %126 = vmatpush2.msra.mxu0 0.0
  %127 = vmatprep.subr.mxu0 0.0
  %128 = vmatpush2.msra.mxu0 0.0
  %129 = vmatprep.subr.mxu0 0.0
  %130 = vmatpush2.msra.mxu0 0.0
  %131 = vmatprep.subr.mxu0 0.0
  %132 = vmatpush2.msra.mxu0 0.0
  %133 = vmatprep.subr.mxu0 0.0
  %134 = vmatpush2.msra.mxu0 0.0
  %135 = vmatprep.subr.mxu0 0.0
  %136 = vmatpush2.msra.mxu0 0.0
  %137 = vmatprep.mubr.f32.mxu0 0.0
  %138 = vmatmul.mubr.f32.gmra.mxu0 %v50
  %v139 = vpop.f32.mrf.mxu0
  %v140 = vadd.f32 %v46, %v139
  %v141 = vpop.f32.mrf.mxu0
  %142 = vmatprep.mubr.f32.mxu0 0.0
  %143 = vmatmul.mubr.f32.gmra.mxu0 %v53
  %v144 = vpop.f32.mrf.mxu0
  %v145 = vadd.f32 %v46, %v144
  %v146 = vpop.f32.mrf.mxu0
  %147 = vmatprep.mubr.f32.mxu0 0.0
  %148 = vmatmul.mubr.f32.gmra.mxu0 %v56
  %v149 = vpop.f32.mrf.mxu0
  %v150 = vadd.f32 %v46, %v149
  %v151 = vpop.f32.mrf.mxu0
  %152 = vmatprep.mubr.f32.mxu0 0.0
  %153 = vmatmul.mubr.f32.gmra.mxu0 %v59
  %v154 = vpop.f32.mrf.mxu0
  %v155 = vadd.f32 %v46, %v154
  %v156 = vpop.f32.mrf.mxu0
  %157 = vmatprep.mubr.f32.mxu0 0.0
  %158 = vmatmul.mubr.f32.gmra.mxu0 %v62
  %v159 = vpop.f32.mrf.mxu0
  %v160 = vadd.f32 %v46, %v159
  %v161 = vpop.f32.mrf.mxu0
  %162 = vmatprep.mubr.f32.mxu0 0.0
  %163 = vmatmul.mubr.f32.gmra.mxu0 %v65
  %v164 = vpop.f32.mrf.mxu0
  %v165 = vadd.f32 %v46, %v164
  %v166 = vpop.f32.mrf.mxu0
  %167 = vmatprep.mubr.f32.mxu0 0.0
  %168 = vmatmul.mubr.f32.gmra.mxu0 %v68
  %v169 = vpop.f32.mrf.mxu0
  %v170 = vadd.f32 %v46, %v169
  %v171 = vpop.f32.mrf.mxu0
  %172 = vmatprep.mubr.f32.mxu0 0.0
  %173 = vmatmul.mubr.f32.gmra.mxu0 %v71
  %v174 = vpop.f32.mrf.mxu0
  %v175 = vadd.f32 %v46, %v174
  %v176 = vpop.f32.mrf.mxu0
  %177 = vdwg.mxu0
  %v178 = vld [vmem:[%s1] sm:$0xff]
  %v179 = vld [vmem:[%s1 + $0x8] sm:$0xff]
  %v180 = vld [vmem:[%s1 + $0x10] sm:$0xff]
  %v181 = vld [vmem:[%s1 + $0x18] sm:$0xff]
  %v182 = vld [vmem:[%s1 + $0x20] sm:$0xff]
  %v183 = vld [vmem:[%s1 + $0x28] sm:$0xff]
  %v184 = vld [vmem:[%s1 + $0x30] sm:$0xff]
  %v185 = vld [vmem:[%s1 + $0x38] sm:$0xff]
  %187 = vset.pattern.permute.xlu0 0
  %188 = vperm.xlu0 %187, %v178
  %v189 = vpop.permute.xlu0 %188
  %192 = vset.pattern.permute.xlu0 0
  %193 = vperm.xlu0 %192, %v179
  %v194 = vpop.permute.xlu0 %193
  %197 = vset.pattern.permute.xlu0 0
  %198 = vperm.xlu0 %197, %v180
  %v199 = vpop.permute.xlu0 %198
  %202 = vset.pattern.permute.xlu0 0
  %203 = vperm.xlu0 %202, %v181
  %v204 = vpop.permute.xlu0 %203
  %207 = vset.pattern.permute.xlu0 0
  %208 = vperm.xlu0 %207, %v182
  %v209 = vpop.permute.xlu0 %208
  %212 = vset.pattern.permute.xlu0 0
  %213 = vperm.xlu0 %212, %v183
  %v214 = vpop.permute.xlu0 %213
  %217 = vset.pattern.permute.xlu0 0
  %218 = vperm.xlu0 %217, %v184
  %v219 = vpop.permute.xlu0 %218
  %222 = vset.pattern.permute.xlu0 0
  %223 = vperm.xlu0 %222, %v185
  %v224 = vpop.permute.xlu0 %223
  %v226 = vmul.f32 %v140, %v189
  %v227 = vmul.f32 %v145, %v194
  %v228 = vmul.f32 %v150, %v199
  %v229 = vmul.f32 %v155, %v204
  %v230 = vmul.f32 %v160, %v209
  %v231 = vmul.f32 %v165, %v214
  %v232 = vmul.f32 %v170, %v219
  %v233 = vmul.f32 %v175, %v224
  %242 = vrot.lane.b32.xlu0 %v226, 16
  %v243 = vpop.permute.xlu0 %242
  %244 = vrot.lane.b32.xlu0 %v227, 16
  %v245 = vpop.permute.xlu0 %244
  %246 = vrot.lane.b32.xlu0 %v228, 16
  %v247 = vpop.permute.xlu0 %246
  %248 = vrot.lane.b32.xlu0 %v229, 16
  %v249 = vpop.permute.xlu0 %248
  %250 = vrot.lane.b32.xlu0 %v230, 16
  %v251 = vpop.permute.xlu0 %250
  %252 = vrot.lane.b32.xlu0 %v231, 16
  %v253 = vpop.permute.xlu0 %252
  %254 = vrot.lane.b32.xlu0 %v232, 16
  %v255 = vpop.permute.xlu0 %254
  %256 = vrot.lane.b32.xlu0 %v233, 16
  %v257 = vpop.permute.xlu0 %256
  %v266 = vsel %vm48, %v140, %v243
  %v267 = vsel %vm48, %v145, %v245
  %v268 = vsel %vm48, %v150, %v247
  %v269 = vsel %vm48, %v155, %v249
  %v270 = vsel %vm48, %v160, %v251
  %v271 = vsel %vm48, %v165, %v253
  %v272 = vsel %vm48, %v170, %v255
  %v273 = vsel %vm48, %v175, %v257
  %v274 = vpack.c.bf16 %v267, %v266
  %v275 = vpack.c.bf16 %v269, %v268
  %v276 = vpack.c.bf16 %v271, %v270
  %v277 = vpack.c.bf16 %v273, %v272
  %v282 = vunpack.c.l.b16 %v274
  %v283 = vunpack.c.h.b16 %v274
  %v284 = vunpack.c.l.b16 %v275
  %v285 = vunpack.c.h.b16 %v275
  %v286 = vunpack.c.l.b16 %v276
  %v287 = vunpack.c.h.b16 %v276
  %v288 = vunpack.c.l.b16 %v277
  %v289 = vunpack.c.h.b16 %v277
  %v290 = vpack.c.b16 %v282, %v282
  %v291 = vpack.c.b16 %v283, %v283
  %v292 = vpack.c.b16 %v284, %v284
  %v293 = vpack.c.b16 %v285, %v285
  %v294 = vpack.c.b16 %v286, %v286
  %v295 = vpack.c.b16 %v287, %v287
  %v296 = vpack.c.b16 %v288, %v288
  %v297 = vpack.c.b16 %v289, %v289
  %vm306 = vcmask 257024
  %307 = vst.msk [vmem:[%s8] sm:$0xf] %vm306, %v290
  %308 = vst.msk [vmem:[%s8 + $0x4] sm:$0xf] %vm306, %v291
  %309 = vst.msk [vmem:[%s8 + $0x8] sm:$0xf] %vm306, %v292
  %310 = vst.msk [vmem:[%s8 + $0xc] sm:$0xf] %vm306, %v293
  %311 = vst.msk [vmem:[%s8 + $0x10] sm:$0xf] %vm306, %v294
  %312 = vst.msk [vmem:[%s8 + $0x14] sm:$0xf] %vm306, %v295
  %313 = vst.msk [vmem:[%s8 + $0x18] sm:$0xf] %vm306, %v296
  %314 = vst.msk [vmem:[%s8 + $0x1c] sm:$0xf] %vm306, %v297
  %v315 = vld [vmem:[%s4] sm:$0xff]
  %v316 = vld [vmem:[%s4 + $0x8] sm:$0xff]
  %v317 = vld [vmem:[%s5] sm:$0x1]
  %v319 = vlaneseq
  %v320 = vshrl.u32 %v319, 7
  %v321 = vsub.s32 0, %v320
  %v322 = vrot.slane %v317, %v321
  %v325 = vsel %vm48, %v140, 0
  %v328 = vsel %vm48, %v145, 0
  %v331 = vsel %vm48, %v150, 0
  %v334 = vsel %vm48, %v155, 0
  %v337 = vsel %vm48, %v160, 0
  %v340 = vsel %vm48, %v165, 0
  %v343 = vsel %vm48, %v170, 0
  %v346 = vsel %vm48, %v175, 0
  %348 = vmatprep.subr.mxu0 0.0
  %349 = vmatpush1.msra.mxu0 0.0
  %350 = vmatprep.subr.mxu0 0.0
  %351 = vmatpush1.msra.mxu0 0.0
  %352 = vmatprep.subr.mxu0 0.0
  %353 = vmatpush1.msra.mxu0 0.0
  %354 = vmatprep.subr.mxu0 0.0
  %355 = vmatpush1.msra.mxu0 0.0
  %356 = vmatprep.subr.mxu0 0.0
  %357 = vmatpush1.msra.mxu0 0.0
  %358 = vmatprep.subr.mxu0 0.0
  %359 = vmatpush1.msra.mxu0 0.0
  %360 = vmatprep.subr.mxu0 0.0
  %361 = vmatpush1.msra.mxu0 0.0
  %362 = vmatprep.subr.mxu0 0.0
  %363 = vmatpush1.msra.mxu0 0.0
  %364 = vmatprep.subr.mxu0 0.0
  %365 = vmatpush1.msra.mxu0 0.0
  %366 = vmatprep.subr.mxu0 0.0
  %367 = vmatpush1.msra.mxu0 0.0
  %368 = vmatprep.subr.mxu0 0.0
  %369 = vmatpush1.msra.mxu0 0.0
  %370 = vmatprep.subr.mxu0 0.0
  %371 = vmatpush1.msra.mxu0 0.0
  %372 = vmatprep.subr.mxu0 0.0
  %373 = vmatpush1.msra.mxu0 0.0
  %374 = vmatprep.subr.mxu0 0.0
  %375 = vmatpush1.msra.mxu0 0.0
  %376 = vmatprep.subr.mxu0 0.0
  %377 = vmatpush1.msra.mxu0 %v316
  %378 = vmatprep.subr.mxu0 0.0
  %379 = vmatpush1.msra.mxu0 %v315
  %380 = vmatprep.subr.mxu0 0.0
  %381 = vmatpush2.msra.mxu0 0.0
  %382 = vmatprep.subr.mxu0 0.0
  %383 = vmatpush2.msra.mxu0 0.0
  %384 = vmatprep.subr.mxu0 0.0
  %385 = vmatpush2.msra.mxu0 0.0
  %386 = vmatprep.subr.mxu0 0.0
  %387 = vmatpush2.msra.mxu0 0.0
  %388 = vmatprep.subr.mxu0 0.0
  %389 = vmatpush2.msra.mxu0 0.0
  %390 = vmatprep.subr.mxu0 0.0
  %391 = vmatpush2.msra.mxu0 0.0
  %392 = vmatprep.subr.mxu0 0.0
  %393 = vmatpush2.msra.mxu0 0.0
  %394 = vmatprep.subr.mxu0 0.0
  %395 = vmatpush2.msra.mxu0 0.0
  %396 = vmatprep.subr.mxu0 0.0
  %397 = vmatpush2.msra.mxu0 0.0
  %398 = vmatprep.subr.mxu0 0.0
  %399 = vmatpush2.msra.mxu0 0.0
  %400 = vmatprep.subr.mxu0 0.0
  %401 = vmatpush2.msra.mxu0 0.0
  %402 = vmatprep.subr.mxu0 0.0
  %403 = vmatpush2.msra.mxu0 0.0
  %404 = vmatprep.subr.mxu0 0.0
  %405 = vmatpush2.msra.mxu0 0.0
  %406 = vmatprep.subr.mxu0 0.0
  %407 = vmatpush2.msra.mxu0 0.0
  %408 = vmatprep.subr.mxu0 0.0
  %409 = vmatpush2.msra.mxu0 0.0
  %410 = vmatprep.subr.mxu0 0.0
  %411 = vmatpush2.msra.mxu0 0.0
  %412 = vmatprep.mubr.f32.mxu0 0.0
  %413 = vmatmul.mubr.f32.gmra.mxu0 %v325
  %v414 = vpop.f32.mrf.mxu0
  %v415 = vadd.f32 %v322, %v414
  %v416 = vpop.f32.mrf.mxu0
  %417 = vmatprep.mubr.f32.mxu0 0.0
  %418 = vmatmul.mubr.f32.gmra.mxu0 %v328
  %v419 = vpop.f32.mrf.mxu0
  %v420 = vadd.f32 %v322, %v419
  %v421 = vpop.f32.mrf.mxu0
  %422 = vmatprep.mubr.f32.mxu0 0.0
  %423 = vmatmul.mubr.f32.gmra.mxu0 %v331
  %v424 = vpop.f32.mrf.mxu0
  %v425 = vadd.f32 %v322, %v424
  %v426 = vpop.f32.mrf.mxu0
  %427 = vmatprep.mubr.f32.mxu0 0.0
  %428 = vmatmul.mubr.f32.gmra.mxu0 %v334
  %v429 = vpop.f32.mrf.mxu0
  %v430 = vadd.f32 %v322, %v429
  %v431 = vpop.f32.mrf.mxu0
  %432 = vmatprep.mubr.f32.mxu0 0.0
  %433 = vmatmul.mubr.f32.gmra.mxu0 %v337
  %v434 = vpop.f32.mrf.mxu0
  %v435 = vadd.f32 %v322, %v434
  %v436 = vpop.f32.mrf.mxu0
  %437 = vmatprep.mubr.f32.mxu0 0.0
  %438 = vmatmul.mubr.f32.gmra.mxu0 %v340
  %v439 = vpop.f32.mrf.mxu0
  %v440 = vadd.f32 %v322, %v439
  %v441 = vpop.f32.mrf.mxu0
  %442 = vmatprep.mubr.f32.mxu0 0.0
  %443 = vmatmul.mubr.f32.gmra.mxu0 %v343
  %v444 = vpop.f32.mrf.mxu0
  %v445 = vadd.f32 %v322, %v444
  %v446 = vpop.f32.mrf.mxu0
  %447 = vmatprep.mubr.f32.mxu0 0.0
  %448 = vmatmul.mubr.f32.gmra.mxu0 %v346
  %v449 = vpop.f32.mrf.mxu0
  %v450 = vadd.f32 %v322, %v449
  %v451 = vpop.f32.mrf.mxu0
  %452 = vdwg.mxu0
  %v453 = vmax.f32 %v415, 0.0
  %v454 = vmax.f32 %v420, 0.0
  %v455 = vmax.f32 %v425, 0.0
  %v456 = vmax.f32 %v430, 0.0
  %v457 = vmax.f32 %v435, 0.0
  %v458 = vmax.f32 %v440, 0.0
  %v459 = vmax.f32 %v445, 0.0
  %v460 = vmax.f32 %v450, 0.0
  %v461 = vsel %vm48, %v453, 0.0
  %462 = vadd.xlane.f32.xlu0 %v461
  %v463 = vpop.xlane.xlu0 %462
  %v464 = vsel %vm48, %v454, 0.0
  %465 = vadd.xlane.f32.xlu0 %v464
  %v466 = vpop.xlane.xlu0 %465
  %v467 = vsel %vm48, %v455, 0.0
  %468 = vadd.xlane.f32.xlu0 %v467
  %v469 = vpop.xlane.xlu0 %468
  %v470 = vsel %vm48, %v456, 0.0
  %471 = vadd.xlane.f32.xlu0 %v470
  %v472 = vpop.xlane.xlu0 %471
  %v473 = vsel %vm48, %v457, 0.0
  %474 = vadd.xlane.f32.xlu0 %v473
  %v475 = vpop.xlane.xlu0 %474
  %v476 = vsel %vm48, %v458, 0.0
  %477 = vadd.xlane.f32.xlu0 %v476
  %v478 = vpop.xlane.xlu0 %477
  %v479 = vsel %vm48, %v459, 0.0
  %480 = vadd.xlane.f32.xlu0 %v479
  %v481 = vpop.xlane.xlu0 %480
  %v482 = vsel %vm48, %v460, 0.0
  %483 = vadd.xlane.f32.xlu0 %v482
  %v484 = vpop.xlane.xlu0 %483
  %v485 = vrcp.pop 16.0
  %v486 = vmul.f32 %v463, %v485
  %v487 = vmul.f32 %v466, %v485
  %v488 = vmul.f32 %v469, %v485
  %v489 = vmul.f32 %v472, %v485
  %v490 = vmul.f32 %v475, %v485
  %v491 = vmul.f32 %v478, %v485
  %v492 = vmul.f32 %v481, %v485
  %v493 = vmul.f32 %v484, %v485
  %v494 = vsub.f32 %v453, %v486
  %v495 = vsub.f32 %v454, %v487
  %v496 = vsub.f32 %v455, %v488
  %v497 = vsub.f32 %v456, %v489
  %v498 = vsub.f32 %v457, %v490
  %v499 = vsub.f32 %v458, %v491
  %v500 = vsub.f32 %v459, %v492
  %v501 = vsub.f32 %v460, %v493
  %v502 = vmul.f32 %v494, %v494
  %v503 = vmul.f32 %v495, %v495
  %v504 = vmul.f32 %v496, %v496
  %v505 = vmul.f32 %v497, %v497
  %v506 = vmul.f32 %v498, %v498
  %v507 = vmul.f32 %v499, %v499
  %v508 = vmul.f32 %v500, %v500
  %v509 = vmul.f32 %v501, %v501
  %v510 = vsel %vm48, %v502, 0.0
  %511 = vadd.xlane.f32.xlu0 %v510
  %v512 = vpop.xlane.xlu0 %511
  %v513 = vsel %vm48, %v503, 0.0
  %514 = vadd.xlane.f32.xlu0 %v513
  %v515 = vpop.xlane.xlu0 %514
  %v516 = vsel %vm48, %v504, 0.0
  %517 = vadd.xlane.f32.xlu0 %v516
  %v518 = vpop.xlane.xlu0 %517
  %v519 = vsel %vm48, %v505, 0.0
  %520 = vadd.xlane.f32.xlu0 %v519
  %v521 = vpop.xlane.xlu0 %520
  %v522 = vsel %vm48, %v506, 0.0
  %523 = vadd.xlane.f32.xlu0 %v522
  %v524 = vpop.xlane.xlu0 %523
  %v525 = vsel %vm48, %v507, 0.0
  %526 = vadd.xlane.f32.xlu0 %v525
  %v527 = vpop.xlane.xlu0 %526
  %v528 = vsel %vm48, %v508, 0.0
  %529 = vadd.xlane.f32.xlu0 %v528
  %v530 = vpop.xlane.xlu0 %529
  %v531 = vsel %vm48, %v509, 0.0
  %532 = vadd.xlane.f32.xlu0 %v531
  %v533 = vpop.xlane.xlu0 %532
  %v534 = vmul.f32 %v512, %v485
  %v535 = vmul.f32 %v515, %v485
  %v536 = vmul.f32 %v518, %v485
  %v537 = vmul.f32 %v521, %v485
  %v538 = vmul.f32 %v524, %v485
  %v539 = vmul.f32 %v527, %v485
  %v540 = vmul.f32 %v530, %v485
  %v541 = vmul.f32 %v533, %v485
  %v542 = vadd.f32 %v534, 1e-05
  %v543 = vadd.f32 %v535, 1e-05
  %v544 = vadd.f32 %v536, 1e-05
  %v545 = vadd.f32 %v537, 1e-05
  %v546 = vadd.f32 %v538, 1e-05
  %v547 = vadd.f32 %v539, 1e-05
  %v548 = vadd.f32 %v540, 1e-05
  %v549 = vadd.f32 %v541, 1e-05
  %v550 = vrsqrt.pop %v542
  %v551 = vrsqrt.pop %v543
  %v552 = vrsqrt.pop %v544
  %v553 = vrsqrt.pop %v545
  %v554 = vrsqrt.pop %v546
  %v555 = vrsqrt.pop %v547
  %v556 = vrsqrt.pop %v548
  %v557 = vrsqrt.pop %v549
  %v558 = vmul.f32 %v494, %v550
  %v559 = vmul.f32 %v495, %v551
  %v560 = vmul.f32 %v496, %v552
  %v561 = vmul.f32 %v497, %v553
  %v562 = vmul.f32 %v498, %v554
  %v563 = vmul.f32 %v499, %v555
  %v564 = vmul.f32 %v500, %v556
  %v565 = vmul.f32 %v501, %v557
  %v566 = vld [vmem:[%s6] sm:$0x1]
  %v568 = vlaneseq
  %v569 = vshrl.u32 %v568, 7
  %v570 = vsub.s32 0, %v569
  %v571 = vrot.slane %v566, %v570
  %v573 = vmul.f32 %v558, %v571
  %v574 = vmul.f32 %v559, %v571
  %v575 = vmul.f32 %v560, %v571
  %v576 = vmul.f32 %v561, %v571
  %v577 = vmul.f32 %v562, %v571
  %v578 = vmul.f32 %v563, %v571
  %v579 = vmul.f32 %v564, %v571
  %v580 = vmul.f32 %v565, %v571
  %v581 = vld [vmem:[%s7] sm:$0x1]
  %v583 = vlaneseq
  %v584 = vshrl.u32 %v583, 7
  %v585 = vsub.s32 0, %v584
  %v586 = vrot.slane %v581, %v585
  %v588 = vadd.f32 %v573, %v586
  %v589 = vadd.f32 %v574, %v586
  %v590 = vadd.f32 %v575, %v586
  %v591 = vadd.f32 %v576, %v586
  %v592 = vadd.f32 %v577, %v586
  %v593 = vadd.f32 %v578, %v586
  %v594 = vadd.f32 %v579, %v586
  %v595 = vadd.f32 %v580, %v586
  %596 = vst.msk [vmem:[%s9] sm:$0xff] %vm48, %v588
  %597 = vst.msk [vmem:[%s9 + $0x8] sm:$0xff] %vm48, %v589
  %598 = vst.msk [vmem:[%s9 + $0x10] sm:$0xff] %vm48, %v590
  %599 = vst.msk [vmem:[%s9 + $0x18] sm:$0xff] %vm48, %v591
  %600 = vst.msk [vmem:[%s9 + $0x20] sm:$0xff] %vm48, %v592
  %601 = vst.msk [vmem:[%s9 + $0x28] sm:$0xff] %vm48, %v593
  %602 = vst.msk [vmem:[%s9 + $0x30] sm:$0xff] %vm48, %v594
  %603 = vst.msk [vmem:[%s9 + $0x38] sm:$0xff] %vm48, %v595
  // Predicated region
  $region34: #{_lambda_.13} parent=0 // pred_check
    _
  $region35: #{_lambda_.13} parent=0 // pred_check_branch
    %605 = sbr.rel (0) target = $region37
  $region36: #{_lambda_.13} parent=0 // pred_region
    _
  $region37: #{_lambda_.13} parent=0 // pred_fallthru
    _
  // Predicated region
  $region38: #{_lambda_.13} parent=0 // pred_check
    _
  $region39: #{_lambda_.13} parent=0 // pred_check_branch
    %607 = sbr.rel (0) target = $region41
  $region40: #{_lambda_.13} parent=0 // pred_region
    _
  $region41: #{_lambda_.13} parent=0 // pred_fallthru
    _
  // Predicated region
  $region42: #{_lambda_.13} parent=0 // pred_check
    _
  $region43: #{_lambda_.13} parent=0 // pred_check_branch
    %609 = sbr.rel (0) target = $region45
  $region44: #{_lambda_.13} parent=0 // pred_region
    _
  $region45: #{_lambda_.13} parent=0 // pred_fallthru
    _
  // Predicated region
  $region46: #{_lambda_.13} parent=0 // pred_check
    _
  $region47: #{_lambda_.13} parent=0 // pred_check_branch
    %611 = sbr.rel (0) target = $region49
  $region48: #{_lambda_.13} parent=0 // pred_region
    _
  $region49: #{_lambda_.13} parent=0 // pred_fallthru
    _

// kernel: _lambda_.11
$region0: #{_lambda_.11}
  #allocation0 [shape = 'u32[]', space=smem, size = 0x4, offset = 0x4, fixed_abs, tag = 'smem constant byte address 0x4 - core index']
  #allocation1 [shape = 'u32[144,128]{1,0:T(1,128)}', space=vmem, size = 0x12000, scoped, tag = 'internal scratch']
  #allocation2 [shape = 'f32[1,32]{1,0:T(1,128)}', space=vmem, size = 0x200, scoped, tag = 'scratch operand']
  %s0 = inlined_call_operand.vmem [shape: s32[1,128], index: 0, kind: input, shape index: {}]
  %s1 = inlined_call_operand.vmem [shape: s32[1,128], index: 1, kind: input, shape index: {}]
  %s2 = inlined_call_operand.vmem [shape: f32[128,3], index: 2, kind: input, shape index: {}]
  %s3 = inlined_call_operand.vmem [shape: bf16[64,64], index: 3, kind: input, shape index: {}]
  %s4 = inlined_call_operand.vmem [shape: f32[32,96], index: 4, kind: input, shape index: {}]
  %s5 = inlined_call_operand.vmem [shape: f32[64,96], index: 5, kind: output, shape index: {}]
  %s6 = sld [smem:[#allocation0]]
  $region34: #{_lambda_.11} parent=0
    _
  %s8 = ssub.s32 1, %s6
  %s9 = scalar_select 0, %s8, %s6
  // Predicated region
  $region2: #{_lambda_.11} parent=0 // pred_check
    _
  $region3: #{_lambda_.11} parent=0 // pred_check_branch
    %11 = sbr.rel (0) target = $region5
  $region4: #{_lambda_.11} parent=0 // pred_region
    _
  $region5: #{_lambda_.11} parent=0 // pred_fallthru
    _
  // Predicated region
  $region6: #{_lambda_.11} parent=0 // pred_check
    _
  $region7: #{_lambda_.11} parent=0 // pred_check_branch
    %13 = sbr.rel (0) target = $region9
  $region8: #{_lambda_.11} parent=0 // pred_region
    _
  $region9: #{_lambda_.11} parent=0 // pred_fallthru
    _
  // Predicated region
  $region10: #{_lambda_.11} parent=0 // pred_check
    _
  $region11: #{_lambda_.11} parent=0 // pred_check_branch
    %15 = sbr.rel (0) target = $region13
  $region12: #{_lambda_.11} parent=0 // pred_region
    _
  $region13: #{_lambda_.11} parent=0 // pred_fallthru
    _
  // Predicated region
  $region14: #{_lambda_.11} parent=0 // pred_check
    _
  $region15: #{_lambda_.11} parent=0 // pred_check_branch
    %17 = sbr.rel (0) target = $region17
  $region16: #{_lambda_.11} parent=0 // pred_region
    _
  $region17: #{_lambda_.11} parent=0 // pred_fallthru
    _
  // Predicated region
  $region18: #{_lambda_.11} parent=0 // pred_check
    _
  $region19: #{_lambda_.11} parent=0 // pred_check_branch
    %19 = sbr.rel (0) target = $region21
  $region20: #{_lambda_.11} parent=0 // pred_region
    _
  $region21: #{_lambda_.11} parent=0 // pred_fallthru
    _
  %p21 = scmp.eq.s32.totalorder 0, 0
  // Predicated region
  $region22: #{_lambda_.11} parent=0 // pred_check
    %p22 = pneg %p21
  $region23: #{_lambda_.11} parent=0 // pred_check_branch
    %24 = sbr.rel (%p22) target = $region25
  $region24: #{_lambda_.11} parent=0 // pred_region
    %vm25 = vcmask 785408
    %26 = vst.msk [vmem:[%s5] sm:$0xff] %vm25, 0.0
    %27 = vst.msk [vmem:[%s5 + $0x8] sm:$0xff] %vm25, 0.0
    %28 = vst.msk [vmem:[%s5 + $0x10] sm:$0xff] %vm25, 0.0
    %29 = vst.msk [vmem:[%s5 + $0x18] sm:$0xff] %vm25, 0.0
    %30 = vst.msk [vmem:[%s5 + $0x20] sm:$0xff] %vm25, 0.0
    %31 = vst.msk [vmem:[%s5 + $0x28] sm:$0xff] %vm25, 0.0
    %32 = vst.msk [vmem:[%s5 + $0x30] sm:$0xff] %vm25, 0.0
    %33 = vst.msk [vmem:[%s5 + $0x38] sm:$0xff] %vm25, 0.0
    %vm34 = vcmask 253952
    %35 = vst.msk [vmem:[#allocation2] sm:$0x1] %vm34, -1e+30
  $region25: #{_lambda_.11} parent=0 // pred_fallthru
    _
  %v36 = vlaneseq
  %v37 = vand.u32 %v36, 127
  %s38 = smul.u32 0, 128
  %v39 = vstv %s38
  %v40 = vadd.s32 %v39, %v37
  %vm41 = vcmp.lt.s32.totalorder %v40, 128
  %v42 = vlaneseq
  %v43 = vshrl.u32 %v42, 7
  %v44 = vadd.s32 %v43, 8
  %v45 = vadd.s32 %v43, 16
  %v46 = vadd.s32 %v43, 24
  %v47 = vadd.s32 %v43, 32
  %v48 = vadd.s32 %v43, 40
  %v49 = vadd.s32 %v43, 48
  %v50 = vadd.s32 %v43, 56
  %v51 = vld [vmem:[%s0] sm:$0x1]
  %v52 = vlaneseq
  %v53 = vshrl.u32 %v52, 7
  %v54 = vsub.s32 0, %v53
  %v55 = vrot.slane %v51, %v54
  %vm56 = vcmp.eq.s32.totalorder %v43, %v55
  %vm57 = vcmp.eq.s32.totalorder %v44, %v55
  %vm58 = vcmp.eq.s32.totalorder %v45, %v55
  %vm59 = vcmp.eq.s32.totalorder %v46, %v55
  %vm60 = vcmp.eq.s32.totalorder %v47, %v55
  %vm61 = vcmp.eq.s32.totalorder %v48, %v55
  %vm62 = vcmp.eq.s32.totalorder %v49, %v55
  %vm63 = vcmp.eq.s32.totalorder %v50, %v55
  %v64 = vsel %vm41, 1, 0
  %vm65 = vcmp.eq.s32.totalorder %v64, 1
  %vm66 = vmand %vm56, %vm65
  %vm67 = vmand %vm57, %vm65
  %vm68 = vmand %vm58, %vm65
  %vm69 = vmand %vm59, %vm65
  %vm70 = vmand %vm60, %vm65
  %vm71 = vmand %vm61, %vm65
  %vm72 = vmand %vm62, %vm65
  %vm73 = vmand %vm63, %vm65
  %v74 = vsel %vm66, 1.0, 0.0
  %v75 = vsel %vm67, 1.0, 0.0
  %v76 = vsel %vm68, 1.0, 0.0
  %v77 = vsel %vm69, 1.0, 0.0
  %v78 = vsel %vm70, 1.0, 0.0
  %v79 = vsel %vm71, 1.0, 0.0
  %v80 = vsel %vm72, 1.0, 0.0
  %v81 = vsel %vm73, 1.0, 0.0
  %v82 = vpack.c.bf16 %v75, %v74
  %v83 = vpack.c.bf16 %v77, %v76
  %v84 = vpack.c.bf16 %v79, %v78
  %v85 = vpack.c.bf16 %v81, %v80
  %v86 = vld [vmem:[%s1] sm:$0x1]
  %v87 = vlaneseq
  %v88 = vshrl.u32 %v87, 7
  %v89 = vsub.s32 0, %v88
  %v90 = vrot.slane %v86, %v89
  %vm91 = vcmp.eq.s32.totalorder %v43, %v90
  %vm92 = vcmp.eq.s32.totalorder %v44, %v90
  %vm93 = vcmp.eq.s32.totalorder %v45, %v90
  %vm94 = vcmp.eq.s32.totalorder %v46, %v90
  %vm95 = vcmp.eq.s32.totalorder %v47, %v90
  %vm96 = vcmp.eq.s32.totalorder %v48, %v90
  %vm97 = vcmp.eq.s32.totalorder %v49, %v90
  %vm98 = vcmp.eq.s32.totalorder %v50, %v90
  %vm99 = vmand %vm91, %vm65
  %vm100 = vmand %vm92, %vm65
  %vm101 = vmand %vm93, %vm65
  %vm102 = vmand %vm94, %vm65
  %vm103 = vmand %vm95, %vm65
  %vm104 = vmand %vm96, %vm65
  %vm105 = vmand %vm97, %vm65
  %vm106 = vmand %vm98, %vm65
  %v107 = vsel %vm99, 1.0, 0.0
  %v108 = vsel %vm100, 1.0, 0.0
  %v109 = vsel %vm101, 1.0, 0.0
  %v110 = vsel %vm102, 1.0, 0.0
  %v111 = vsel %vm103, 1.0, 0.0
  %v112 = vsel %vm104, 1.0, 0.0
  %v113 = vsel %vm105, 1.0, 0.0
  %v114 = vsel %vm106, 1.0, 0.0
  %v115 = vpack.c.bf16 %v108, %v107
  %v116 = vpack.c.bf16 %v110, %v109
  %v117 = vpack.c.bf16 %v112, %v111
  %v118 = vpack.c.bf16 %v114, %v113
  %v119 = vld [vmem:[%s3] sm:$0xf]
  %v120 = vld [vmem:[%s3 + $0x4] sm:$0xf]
  %v121 = vld [vmem:[%s3 + $0x8] sm:$0xf]
  %v122 = vld [vmem:[%s3 + $0xc] sm:$0xf]
  %v123 = vld [vmem:[%s3 + $0x10] sm:$0xf]
  %v124 = vld [vmem:[%s3 + $0x14] sm:$0xf]
  %v125 = vld [vmem:[%s3 + $0x18] sm:$0xf]
  %v126 = vld [vmem:[%s3 + $0x1c] sm:$0xf]
  %127 = vxpose.xlu0.c.b16.start [1/8] %v82, 128
  %128 = vxpose.xlu0.c.b16.cont [2/8] %v83, 128
  %129 = vxpose.xlu0.c.b16.cont [3/8] %v84, 128
  %130 = vxpose.xlu0.c.b16.cont [4/8] %v85, 128
  %131 = vxpose.xlu0.c.b16.cont [5/8] 0, 128
  %132 = vxpose.xlu0.c.b16.cont [6/8] 0, 128
  %133 = vxpose.xlu0.c.b16.cont [7/8] 0, 128
  %134 = vxpose.xlu0.c.b16.end [8/8] 0, 128
  %v135 = vpop.trf.xlu0
  %v136 = vpop.trf.xlu0
  %v137 = vpop.trf.xlu0
  %v138 = vpop.trf.xlu0
  %v139 = vpop.trf.xlu0
  %v140 = vpop.trf.xlu0
  %v141 = vpop.trf.xlu0
  %v142 = vpop.trf.xlu0
  %v151 = vunpack.c.l.b16 %v119
  %v152 = vunpack.c.l.b16 %v120
  %v153 = vunpack.c.l.b16 %v121
  %v154 = vunpack.c.l.b16 %v122
  %v155 = vunpack.c.l.b16 %v123
  %v156 = vunpack.c.l.b16 %v124
  %v157 = vunpack.c.l.b16 %v125
  %v158 = vunpack.c.l.b16 %v126
  %v159 = vpack.c.b16 %v152, %v151
  %v160 = vpack.c.b16 %v154, %v153
  %v161 = vpack.c.b16 %v156, %v155
  %v162 = vpack.c.b16 %v158, %v157
  %vm167 = vcmask 523264
  %v169 = vsel %vm167, %v135, 0
  %v172 = vsel %vm167, %v136, 0
  %v175 = vsel %vm167, %v137, 0
  %v178 = vsel %vm167, %v138, 0
  %v181 = vsel %vm167, %v139, 0
  %v184 = vsel %vm167, %v140, 0
  %v187 = vsel %vm167, %v141, 0
  %v190 = vsel %vm167, %v142, 0
  %192 = vmatprep.subr.bf16.mxu0 0
  %193 = vmatpush1.bf16.msra.mxu0 0
  %194 = vmatprep.subr.bf16.mxu0 0
  %195 = vmatpush1.bf16.msra.mxu0 0
  %196 = vmatprep.subr.bf16.mxu0 0
  %197 = vmatpush1.bf16.msra.mxu0 0
  %198 = vmatprep.subr.bf16.mxu0 0
  %199 = vmatpush1.bf16.msra.mxu0 0
  %200 = vmatprep.subr.bf16.mxu0 0
  %201 = vmatpush1.bf16.msra.mxu0 %v162
  %202 = vmatprep.subr.bf16.mxu0 0
  %203 = vmatpush1.bf16.msra.mxu0 %v161
  %204 = vmatprep.subr.bf16.mxu0 0
  %205 = vmatpush1.bf16.msra.mxu0 %v160
  %206 = vmatprep.subr.bf16.mxu0 0
  %207 = vmatpush1.bf16.msra.mxu0 %v159
  %208 = vmatprep.subr.bf16.mxu0 0
  %209 = vmatpush2.bf16.msra.mxu0 0
  %210 = vmatprep.subr.bf16.mxu0 0
  %211 = vmatpush2.bf16.msra.mxu0 0
  %212 = vmatprep.subr.bf16.mxu0 0
  %213 = vmatpush2.bf16.msra.mxu0 0
  %214 = vmatprep.subr.bf16.mxu0 0
  %215 = vmatpush2.bf16.msra.mxu0 0
  %216 = vmatprep.subr.bf16.mxu0 0
  %217 = vmatpush2.bf16.msra.mxu0 0
  %218 = vmatprep.subr.bf16.mxu0 0
  %219 = vmatpush2.bf16.msra.mxu0 0
  %220 = vmatprep.subr.bf16.mxu0 0
  %221 = vmatpush2.bf16.msra.mxu0 0
  %222 = vmatprep.subr.bf16.mxu0 0
  %223 = vmatpush2.bf16.msra.mxu0 0
  %224 = vmatprep.mubr.bf16.mxu0 0
  %225 = vmatmul.mubr.bf16.gmra.mxu0 %v169
  %v226 = vpop.f32.mrf.mxu0
  %v227 = vadd.f32 0.0, %v226
  %v228 = vpop.f32.mrf.mxu0
  %v229 = vpop.f32.mrf.mxu0
  %v230 = vadd.f32 0.0, %v229
  %v231 = vpop.f32.mrf.mxu0
  %232 = vmatprep.mubr.bf16.mxu0 0
  %233 = vmatmul.mubr.bf16.gmra.mxu0 %v172
  %v234 = vpop.f32.mrf.mxu0
  %v235 = vadd.f32 0.0, %v234
  %v236 = vpop.f32.mrf.mxu0
  %v237 = vpop.f32.mrf.mxu0
  %v238 = vadd.f32 0.0, %v237
  %v239 = vpop.f32.mrf.mxu0
  %240 = vmatprep.mubr.bf16.mxu0 0
  %241 = vmatmul.mubr.bf16.gmra.mxu0 %v175
  %v242 = vpop.f32.mrf.mxu0
  %v243 = vadd.f32 0.0, %v242
  %v244 = vpop.f32.mrf.mxu0
  %v245 = vpop.f32.mrf.mxu0
  %v246 = vadd.f32 0.0, %v245
  %v247 = vpop.f32.mrf.mxu0
  %248 = vmatprep.mubr.bf16.mxu0 0
  %249 = vmatmul.mubr.bf16.gmra.mxu0 %v178
  %v250 = vpop.f32.mrf.mxu0
  %v251 = vadd.f32 0.0, %v250
  %v252 = vpop.f32.mrf.mxu0
  %v253 = vpop.f32.mrf.mxu0
  %v254 = vadd.f32 0.0, %v253
  %v255 = vpop.f32.mrf.mxu0
  %256 = vmatprep.mubr.bf16.mxu0 0
  %257 = vmatmul.mubr.bf16.gmra.mxu0 %v181
  %v258 = vpop.f32.mrf.mxu0
  %v259 = vadd.f32 0.0, %v258
  %v260 = vpop.f32.mrf.mxu0
  %v261 = vpop.f32.mrf.mxu0
  %v262 = vadd.f32 0.0, %v261
  %v263 = vpop.f32.mrf.mxu0
  %264 = vmatprep.mubr.bf16.mxu0 0
  %265 = vmatmul.mubr.bf16.gmra.mxu0 %v184
  %v266 = vpop.f32.mrf.mxu0
  %v267 = vadd.f32 0.0, %v266
  %v268 = vpop.f32.mrf.mxu0
  %v269 = vpop.f32.mrf.mxu0
  %v270 = vadd.f32 0.0, %v269
  %v271 = vpop.f32.mrf.mxu0
  %272 = vmatprep.mubr.bf16.mxu0 0
  %273 = vmatmul.mubr.bf16.gmra.mxu0 %v187
  %v274 = vpop.f32.mrf.mxu0
  %v275 = vadd.f32 0.0, %v274
  %v276 = vpop.f32.mrf.mxu0
  %v277 = vpop.f32.mrf.mxu0
  %v278 = vadd.f32 0.0, %v277
  %v279 = vpop.f32.mrf.mxu0
  %280 = vmatprep.mubr.bf16.mxu0 0
  %281 = vmatmul.mubr.bf16.gmra.mxu0 %v190
  %v282 = vpop.f32.mrf.mxu0
  %v283 = vadd.f32 0.0, %v282
  %v284 = vpop.f32.mrf.mxu0
  %v285 = vpop.f32.mrf.mxu0
  %v286 = vadd.f32 0.0, %v285
  %v287 = vpop.f32.mrf.mxu0
  %288 = vdwg.mxu0
  %v289 = vld [vmem:[%s4] sm:$0xff]
  %v290 = vld [vmem:[%s4 + $0x8] sm:$0xff]
  %v291 = vld [vmem:[%s4 + $0x10] sm:$0xff]
  %v292 = vld [vmem:[%s4 + $0x18] sm:$0xff]
  %vm293 = vcmask 261120
  %v295 = vsel %vm293, %v227, 0
  %v298 = vsel %vm293, %v230, 0
  %v301 = vsel %vm293, %v235, 0
  %v304 = vsel %vm293, %v238, 0
  %v307 = vsel %vm293, %v243, 0
  %v310 = vsel %vm293, %v246, 0
  %v313 = vsel %vm293, %v251, 0
  %v316 = vsel %vm293, %v254, 0
  %v319 = vsel %vm293, %v259, 0
  %v322 = vsel %vm293, %v262, 0
  %v325 = vsel %vm293, %v267, 0
  %v328 = vsel %vm293, %v270, 0
  %v331 = vsel %vm293, %v275, 0
  %v334 = vsel %vm293, %v278, 0
  %v337 = vsel %vm293, %v283, 0
  %v340 = vsel %vm293, %v286, 0
  %342 = vmatprep.subr.mxu0 0.0
  %343 = vmatpush1.msra.mxu0 0.0
  %344 = vmatprep.subr.mxu0 0.0
  %345 = vmatpush1.msra.mxu0 0.0
  %346 = vmatprep.subr.mxu0 0.0
  %347 = vmatpush1.msra.mxu0 0.0
  %348 = vmatprep.subr.mxu0 0.0
  %349 = vmatpush1.msra.mxu0 0.0
  %350 = vmatprep.subr.mxu0 0.0
  %351 = vmatpush1.msra.mxu0 0.0
  %352 = vmatprep.subr.mxu0 0.0
  %353 = vmatpush1.msra.mxu0 0.0
  %354 = vmatprep.subr.mxu0 0.0
  %355 = vmatpush1.msra.mxu0 0.0
  %356 = vmatprep.subr.mxu0 0.0
  %357 = vmatpush1.msra.mxu0 0.0
  %358 = vmatprep.subr.mxu0 0.0
  %359 = vmatpush1.msra.mxu0 0.0
  %360 = vmatprep.subr.mxu0 0.0
  %361 = vmatpush1.msra.mxu0 0.0
  %362 = vmatprep.subr.mxu0 0.0
  %363 = vmatpush1.msra.mxu0 0.0
  %364 = vmatprep.subr.mxu0 0.0
  %365 = vmatpush1.msra.mxu0 0.0
  %366 = vmatprep.subr.mxu0 0.0
  %367 = vmatpush1.msra.mxu0 %v292
  %368 = vmatprep.subr.mxu0 0.0
  %369 = vmatpush1.msra.mxu0 %v291
  %370 = vmatprep.subr.mxu0 0.0
  %371 = vmatpush1.msra.mxu0 %v290
  %372 = vmatprep.subr.mxu0 0.0
  %373 = vmatpush1.msra.mxu0 %v289
  %374 = vmatprep.subr.mxu0 0.0
  %375 = vmatpush2.msra.mxu0 0.0
  %376 = vmatprep.subr.mxu0 0.0
  %377 = vmatpush2.msra.mxu0 0.0
  %378 = vmatprep.subr.mxu0 0.0
  %379 = vmatpush2.msra.mxu0 0.0
  %380 = vmatprep.subr.mxu0 0.0
  %381 = vmatpush2.msra.mxu0 0.0
  %382 = vmatprep.subr.mxu0 0.0
  %383 = vmatpush2.msra.mxu0 0.0
  %384 = vmatprep.subr.mxu0 0.0
  %385 = vmatpush2.msra.mxu0 0.0
  %386 = vmatprep.subr.mxu0 0.0
  %387 = vmatpush2.msra.mxu0 0.0
  %388 = vmatprep.subr.mxu0 0.0
  %389 = vmatpush2.msra.mxu0 0.0
  %390 = vmatprep.subr.mxu0 0.0
  %391 = vmatpush2.msra.mxu0 0.0
  %392 = vmatprep.subr.mxu0 0.0
  %393 = vmatpush2.msra.mxu0 0.0
  %394 = vmatprep.subr.mxu0 0.0
  %395 = vmatpush2.msra.mxu0 0.0
  %396 = vmatprep.subr.mxu0 0.0
  %397 = vmatpush2.msra.mxu0 0.0
  %398 = vmatprep.subr.mxu0 0.0
  %399 = vmatpush2.msra.mxu0 0.0
  %400 = vmatprep.subr.mxu0 0.0
  %401 = vmatpush2.msra.mxu0 0.0
  %402 = vmatprep.subr.mxu0 0.0
  %403 = vmatpush2.msra.mxu0 0.0
  %404 = vmatprep.subr.mxu0 0.0
  %405 = vmatpush2.msra.mxu0 0.0
  %406 = vmatprep.mubr.f32.mxu0 0.0
  %407 = vmatmul.mubr.f32.gmra.mxu0 %v295
  %v408 = vpop.f32.mrf.mxu0
  %v409 = vadd.f32 0.0, %v408
  %v410 = vpop.f32.mrf.mxu0
  %411 = vmatprep.mubr.f32.mxu0 0.0
  %412 = vmatmul.mubr.f32.gmra.mxu0 %v298
  %v413 = vpop.f32.mrf.mxu0
  %v414 = vadd.f32 0.0, %v413
  %v415 = vpop.f32.mrf.mxu0
  %416 = vmatprep.mubr.f32.mxu0 0.0
  %417 = vmatmul.mubr.f32.gmra.mxu0 %v301
  %v418 = vpop.f32.mrf.mxu0
  %v419 = vadd.f32 0.0, %v418
  %v420 = vpop.f32.mrf.mxu0
  %421 = vmatprep.mubr.f32.mxu0 0.0
  %422 = vmatmul.mubr.f32.gmra.mxu0 %v304
  %v423 = vpop.f32.mrf.mxu0
  %v424 = vadd.f32 0.0, %v423
  %v425 = vpop.f32.mrf.mxu0
  %426 = vmatprep.mubr.f32.mxu0 0.0
  %427 = vmatmul.mubr.f32.gmra.mxu0 %v307
  %v428 = vpop.f32.mrf.mxu0
  %v429 = vadd.f32 0.0, %v428
  %v430 = vpop.f32.mrf.mxu0
  %431 = vmatprep.mubr.f32.mxu0 0.0
  %432 = vmatmul.mubr.f32.gmra.mxu0 %v310
  %v433 = vpop.f32.mrf.mxu0
  %v434 = vadd.f32 0.0, %v433
  %v435 = vpop.f32.mrf.mxu0
  %436 = vmatprep.mubr.f32.mxu0 0.0
  %437 = vmatmul.mubr.f32.gmra.mxu0 %v313
  %v438 = vpop.f32.mrf.mxu0
  %v439 = vadd.f32 0.0, %v438
  %v440 = vpop.f32.mrf.mxu0
  %441 = vmatprep.mubr.f32.mxu0 0.0
  %442 = vmatmul.mubr.f32.gmra.mxu0 %v316
  %v443 = vpop.f32.mrf.mxu0
  %v444 = vadd.f32 0.0, %v443
  %v445 = vpop.f32.mrf.mxu0
  %446 = vmatprep.mubr.f32.mxu0 0.0
  %447 = vmatmul.mubr.f32.gmra.mxu0 %v319
  %v448 = vpop.f32.mrf.mxu0
  %v449 = vadd.f32 0.0, %v448
  %v450 = vpop.f32.mrf.mxu0
  %451 = vmatprep.mubr.f32.mxu0 0.0
  %452 = vmatmul.mubr.f32.gmra.mxu0 %v322
  %v453 = vpop.f32.mrf.mxu0
  %v454 = vadd.f32 0.0, %v453
  %v455 = vpop.f32.mrf.mxu0
  %456 = vmatprep.mubr.f32.mxu0 0.0
  %457 = vmatmul.mubr.f32.gmra.mxu0 %v325
  %v458 = vpop.f32.mrf.mxu0
  %v459 = vadd.f32 0.0, %v458
  %v460 = vpop.f32.mrf.mxu0
  %461 = vmatprep.mubr.f32.mxu0 0.0
  %462 = vmatmul.mubr.f32.gmra.mxu0 %v328
  %v463 = vpop.f32.mrf.mxu0
  %v464 = vadd.f32 0.0, %v463
  %v465 = vpop.f32.mrf.mxu0
  %466 = vmatprep.mubr.f32.mxu0 0.0
  %467 = vmatmul.mubr.f32.gmra.mxu0 %v331
  %v468 = vpop.f32.mrf.mxu0
  %v469 = vadd.f32 0.0, %v468
  %v470 = vpop.f32.mrf.mxu0
  %471 = vmatprep.mubr.f32.mxu0 0.0
  %472 = vmatmul.mubr.f32.gmra.mxu0 %v334
  %v473 = vpop.f32.mrf.mxu0
  %v474 = vadd.f32 0.0, %v473
  %v475 = vpop.f32.mrf.mxu0
  %476 = vmatprep.mubr.f32.mxu0 0.0
  %477 = vmatmul.mubr.f32.gmra.mxu0 %v337
  %v478 = vpop.f32.mrf.mxu0
  %v479 = vadd.f32 0.0, %v478
  %v480 = vpop.f32.mrf.mxu0
  %481 = vmatprep.mubr.f32.mxu0 0.0
  %482 = vmatmul.mubr.f32.gmra.mxu0 %v340
  %v483 = vpop.f32.mrf.mxu0
  %v484 = vadd.f32 0.0, %v483
  %v485 = vpop.f32.mrf.mxu0
  %486 = vdwg.mxu0
  %v487 = vld [vmem:[%s2] sm:$0xff]
  %v488 = vld [vmem:[%s2 + $0x8] sm:$0xff]
  %v489 = vld [vmem:[%s2 + $0x10] sm:$0xff]
  %v490 = vld [vmem:[%s2 + $0x18] sm:$0xff]
  %v491 = vld [vmem:[%s2 + $0x20] sm:$0xff]
  %v492 = vld [vmem:[%s2 + $0x28] sm:$0xff]
  %v493 = vld [vmem:[%s2 + $0x30] sm:$0xff]
  %v494 = vld [vmem:[%s2 + $0x38] sm:$0xff]
  %v495 = vld [vmem:[%s2 + $0x40] sm:$0xff]
  %v496 = vld [vmem:[%s2 + $0x48] sm:$0xff]
  %v497 = vld [vmem:[%s2 + $0x50] sm:$0xff]
  %v498 = vld [vmem:[%s2 + $0x58] sm:$0xff]
  %v499 = vld [vmem:[%s2 + $0x60] sm:$0xff]
  %v500 = vld [vmem:[%s2 + $0x68] sm:$0xff]
  %v501 = vld [vmem:[%s2 + $0x70] sm:$0xff]
  %v502 = vld [vmem:[%s2 + $0x78] sm:$0xff]
  %504 = vset.pattern.permute.xlu0 0
  %505 = vperm.xlu0 %504, %v487
  %v506 = vpop.permute.xlu0 %505
  %509 = vset.pattern.permute.xlu0 0
  %510 = vperm.xlu0 %509, %v488
  %v511 = vpop.permute.xlu0 %510
  %514 = vset.pattern.permute.xlu0 0
  %515 = vperm.xlu0 %514, %v489
  %v516 = vpop.permute.xlu0 %515
  %519 = vset.pattern.permute.xlu0 0
  %520 = vperm.xlu0 %519, %v490
  %v521 = vpop.permute.xlu0 %520
  %524 = vset.pattern.permute.xlu0 0
  %525 = vperm.xlu0 %524, %v491
  %v526 = vpop.permute.xlu0 %525
  %529 = vset.pattern.permute.xlu0 0
  %530 = vperm.xlu0 %529, %v492
  %v531 = vpop.permute.xlu0 %530
  %534 = vset.pattern.permute.xlu0 0
  %535 = vperm.xlu0 %534, %v493
  %v536 = vpop.permute.xlu0 %535
  %539 = vset.pattern.permute.xlu0 0
  %540 = vperm.xlu0 %539, %v494
  %v541 = vpop.permute.xlu0 %540
  %544 = vset.pattern.permute.xlu0 0
  %545 = vperm.xlu0 %544, %v495
  %v546 = vpop.permute.xlu0 %545
  %549 = vset.pattern.permute.xlu0 0
  %550 = vperm.xlu0 %549, %v496
  %v551 = vpop.permute.xlu0 %550
  %554 = vset.pattern.permute.xlu0 0
  %555 = vperm.xlu0 %554, %v497
  %v556 = vpop.permute.xlu0 %555
  %559 = vset.pattern.permute.xlu0 0
  %560 = vperm.xlu0 %559, %v498
  %v561 = vpop.permute.xlu0 %560
  %564 = vset.pattern.permute.xlu0 0
  %565 = vperm.xlu0 %564, %v499
  %v566 = vpop.permute.xlu0 %565
  %569 = vset.pattern.permute.xlu0 0
  %570 = vperm.xlu0 %569, %v500
  %v571 = vpop.permute.xlu0 %570
  %574 = vset.pattern.permute.xlu0 0
  %575 = vperm.xlu0 %574, %v501
  %v576 = vpop.permute.xlu0 %575
  %579 = vset.pattern.permute.xlu0 0
  %580 = vperm.xlu0 %579, %v502
  %v581 = vpop.permute.xlu0 %580
  %v583 = vmul.f32 %v506, %v409
  %v584 = vmul.f32 %v511, %v414
  %v585 = vmul.f32 %v516, %v419
  %v586 = vmul.f32 %v521, %v424
  %v587 = vmul.f32 %v526, %v429
  %v588 = vmul.f32 %v531, %v434
  %v589 = vmul.f32 %v536, %v439
  %v590 = vmul.f32 %v541, %v444
  %v591 = vmul.f32 %v546, %v449
  %v592 = vmul.f32 %v551, %v454
  %v593 = vmul.f32 %v556, %v459
  %v594 = vmul.f32 %v561, %v464
  %v595 = vmul.f32 %v566, %v469
  %v596 = vmul.f32 %v571, %v474
  %v597 = vmul.f32 %v576, %v479
  %v598 = vmul.f32 %v581, %v484
  %599 = vset.pattern.permute.xlu0 1
  %600 = vperm.xlu0 %599, %v487
  %v601 = vpop.permute.xlu0 %600
  %603 = vset.pattern.permute.xlu0 1
  %604 = vperm.xlu0 %603, %v488
  %v605 = vpop.permute.xlu0 %604
  %607 = vset.pattern.permute.xlu0 1
  %608 = vperm.xlu0 %607, %v489
  %v609 = vpop.permute.xlu0 %608
  %611 = vset.pattern.permute.xlu0 1
  %612 = vperm.xlu0 %611, %v490
  %v613 = vpop.permute.xlu0 %612
  %615 = vset.pattern.permute.xlu0 1
  %616 = vperm.xlu0 %615, %v491
  %v617 = vpop.permute.xlu0 %616
  %619 = vset.pattern.permute.xlu0 1
  %620 = vperm.xlu0 %619, %v492
  %v621 = vpop.permute.xlu0 %620
  %623 = vset.pattern.permute.xlu0 1
  %624 = vperm.xlu0 %623, %v493
  %v625 = vpop.permute.xlu0 %624
  %627 = vset.pattern.permute.xlu0 1
  %628 = vperm.xlu0 %627, %v494
  %v629 = vpop.permute.xlu0 %628
  %631 = vset.pattern.permute.xlu0 1
  %632 = vperm.xlu0 %631, %v495
  %v633 = vpop.permute.xlu0 %632
  %635 = vset.pattern.permute.xlu0 1
  %636 = vperm.xlu0 %635, %v496
  %v637 = vpop.permute.xlu0 %636
  %639 = vset.pattern.permute.xlu0 1
  %640 = vperm.xlu0 %639, %v497
  %v641 = vpop.permute.xlu0 %640
  %643 = vset.pattern.permute.xlu0 1
  %644 = vperm.xlu0 %643, %v498
  %v645 = vpop.permute.xlu0 %644
  %647 = vset.pattern.permute.xlu0 1
  %648 = vperm.xlu0 %647, %v499
  %v649 = vpop.permute.xlu0 %648
  %651 = vset.pattern.permute.xlu0 1
  %652 = vperm.xlu0 %651, %v500
  %v653 = vpop.permute.xlu0 %652
  %655 = vset.pattern.permute.xlu0 1
  %656 = vperm.xlu0 %655, %v501
  %v657 = vpop.permute.xlu0 %656
  %659 = vset.pattern.permute.xlu0 1
  %660 = vperm.xlu0 %659, %v502
  %v661 = vpop.permute.xlu0 %660
  %v663 = vmul.f32 %v601, %v409
  %v664 = vmul.f32 %v605, %v414
  %v665 = vmul.f32 %v609, %v419
  %v666 = vmul.f32 %v613, %v424
  %v667 = vmul.f32 %v617, %v429
  %v668 = vmul.f32 %v621, %v434
  %v669 = vmul.f32 %v625, %v439
  %v670 = vmul.f32 %v629, %v444
  %v671 = vmul.f32 %v633, %v449
  %v672 = vmul.f32 %v637, %v454
  %v673 = vmul.f32 %v641, %v459
  %v674 = vmul.f32 %v645, %v464
  %v675 = vmul.f32 %v649, %v469
  %v676 = vmul.f32 %v653, %v474
  %v677 = vmul.f32 %v657, %v479
  %v678 = vmul.f32 %v661, %v484
  %695 = vrot.lane.b32.xlu0 %v663, 96
  %v696 = vpop.permute.xlu0 %695
  %697 = vrot.lane.b32.xlu0 %v664, 96
  %v698 = vpop.permute.xlu0 %697
  %699 = vrot.lane.b32.xlu0 %v665, 96
  %v700 = vpop.permute.xlu0 %699
  %701 = vrot.lane.b32.xlu0 %v666, 96
  %v702 = vpop.permute.xlu0 %701
  %703 = vrot.lane.b32.xlu0 %v667, 96
  %v704 = vpop.permute.xlu0 %703
  %705 = vrot.lane.b32.xlu0 %v668, 96
  %v706 = vpop.permute.xlu0 %705
  %707 = vrot.lane.b32.xlu0 %v669, 96
  %v708 = vpop.permute.xlu0 %707
  %709 = vrot.lane.b32.xlu0 %v670, 96
  %v710 = vpop.permute.xlu0 %709
  %711 = vrot.lane.b32.xlu0 %v671, 96
  %v712 = vpop.permute.xlu0 %711
  %713 = vrot.lane.b32.xlu0 %v672, 96
  %v714 = vpop.permute.xlu0 %713
  %715 = vrot.lane.b32.xlu0 %v673, 96
  %v716 = vpop.permute.xlu0 %715
  %717 = vrot.lane.b32.xlu0 %v674, 96
  %v718 = vpop.permute.xlu0 %717
  %719 = vrot.lane.b32.xlu0 %v675, 96
  %v720 = vpop.permute.xlu0 %719
  %721 = vrot.lane.b32.xlu0 %v676, 96
  %v722 = vpop.permute.xlu0 %721
  %723 = vrot.lane.b32.xlu0 %v677, 96
  %v724 = vpop.permute.xlu0 %723
  %725 = vrot.lane.b32.xlu0 %v678, 96
  %v726 = vpop.permute.xlu0 %725
  %v743 = vadd.f32 %v583, %v696
  %v744 = vadd.f32 %v584, %v698
  %v745 = vadd.f32 %v585, %v700
  %v746 = vadd.f32 %v586, %v702
  %v747 = vadd.f32 %v587, %v704
  %v748 = vadd.f32 %v588, %v706
  %v749 = vadd.f32 %v589, %v708
  %v750 = vadd.f32 %v590, %v710
  %v751 = vadd.f32 %v591, %v712
  %v752 = vadd.f32 %v592, %v714
  %v753 = vadd.f32 %v593, %v716
  %v754 = vadd.f32 %v594, %v718
  %v755 = vadd.f32 %v595, %v720
  %v756 = vadd.f32 %v596, %v722
  %v757 = vadd.f32 %v597, %v724
  %v758 = vadd.f32 %v598, %v726
  %759 = vset.pattern.permute.xlu0 2
  %760 = vperm.xlu0 %759, %v487
  %v761 = vpop.permute.xlu0 %760
  %763 = vset.pattern.permute.xlu0 2
  %764 = vperm.xlu0 %763, %v488
  %v765 = vpop.permute.xlu0 %764
  %767 = vset.pattern.permute.xlu0 2
  %768 = vperm.xlu0 %767, %v489
  %v769 = vpop.permute.xlu0 %768
  %771 = vset.pattern.permute.xlu0 2
  %772 = vperm.xlu0 %771, %v490
  %v773 = vpop.permute.xlu0 %772
  %775 = vset.pattern.permute.xlu0 2
  %776 = vperm.xlu0 %775, %v491
  %v777 = vpop.permute.xlu0 %776
  %779 = vset.pattern.permute.xlu0 2
  %780 = vperm.xlu0 %779, %v492
  %v781 = vpop.permute.xlu0 %780
  %783 = vset.pattern.permute.xlu0 2
  %784 = vperm.xlu0 %783, %v493
  %v785 = vpop.permute.xlu0 %784
  %787 = vset.pattern.permute.xlu0 2
  %788 = vperm.xlu0 %787, %v494
  %v789 = vpop.permute.xlu0 %788
  %791 = vset.pattern.permute.xlu0 2
  %792 = vperm.xlu0 %791, %v495
  %v793 = vpop.permute.xlu0 %792
  %795 = vset.pattern.permute.xlu0 2
  %796 = vperm.xlu0 %795, %v496
  %v797 = vpop.permute.xlu0 %796
  %799 = vset.pattern.permute.xlu0 2
  %800 = vperm.xlu0 %799, %v497
  %v801 = vpop.permute.xlu0 %800
  %803 = vset.pattern.permute.xlu0 2
  %804 = vperm.xlu0 %803, %v498
  %v805 = vpop.permute.xlu0 %804
  %807 = vset.pattern.permute.xlu0 2
  %808 = vperm.xlu0 %807, %v499
  %v809 = vpop.permute.xlu0 %808
  %811 = vset.pattern.permute.xlu0 2
  %812 = vperm.xlu0 %811, %v500
  %v813 = vpop.permute.xlu0 %812
  %815 = vset.pattern.permute.xlu0 2
  %816 = vperm.xlu0 %815, %v501
  %v817 = vpop.permute.xlu0 %816
  %819 = vset.pattern.permute.xlu0 2
  %820 = vperm.xlu0 %819, %v502
  %v821 = vpop.permute.xlu0 %820
  %v823 = vmul.f32 %v761, %v409
  %v824 = vmul.f32 %v765, %v414
  %v825 = vmul.f32 %v769, %v419
  %v826 = vmul.f32 %v773, %v424
  %v827 = vmul.f32 %v777, %v429
  %v828 = vmul.f32 %v781, %v434
  %v829 = vmul.f32 %v785, %v439
  %v830 = vmul.f32 %v789, %v444
  %v831 = vmul.f32 %v793, %v449
  %v832 = vmul.f32 %v797, %v454
  %v833 = vmul.f32 %v801, %v459
  %v834 = vmul.f32 %v805, %v464
  %v835 = vmul.f32 %v809, %v469
  %v836 = vmul.f32 %v813, %v474
  %v837 = vmul.f32 %v817, %v479
  %v838 = vmul.f32 %v821, %v484
  %855 = vrot.lane.b32.xlu0 %v823, 64
  %v856 = vpop.permute.xlu0 %855
  %857 = vrot.lane.b32.xlu0 %v824, 64
  %v858 = vpop.permute.xlu0 %857
  %859 = vrot.lane.b32.xlu0 %v825, 64
  %v860 = vpop.permute.xlu0 %859
  %861 = vrot.lane.b32.xlu0 %v826, 64
  %v862 = vpop.permute.xlu0 %861
  %863 = vrot.lane.b32.xlu0 %v827, 64
  %v864 = vpop.permute.xlu0 %863
  %865 = vrot.lane.b32.xlu0 %v828, 64
  %v866 = vpop.permute.xlu0 %865
  %867 = vrot.lane.b32.xlu0 %v829, 64
  %v868 = vpop.permute.xlu0 %867
  %869 = vrot.lane.b32.xlu0 %v830, 64
  %v870 = vpop.permute.xlu0 %869
  %871 = vrot.lane.b32.xlu0 %v831, 64
  %v872 = vpop.permute.xlu0 %871
  %873 = vrot.lane.b32.xlu0 %v832, 64
  %v874 = vpop.permute.xlu0 %873
  %875 = vrot.lane.b32.xlu0 %v833, 64
  %v876 = vpop.permute.xlu0 %875
  %877 = vrot.lane.b32.xlu0 %v834, 64
  %v878 = vpop.permute.xlu0 %877
  %879 = vrot.lane.b32.xlu0 %v835, 64
  %v880 = vpop.permute.xlu0 %879
  %881 = vrot.lane.b32.xlu0 %v836, 64
  %v882 = vpop.permute.xlu0 %881
  %883 = vrot.lane.b32.xlu0 %v837, 64
  %v884 = vpop.permute.xlu0 %883
  %885 = vrot.lane.b32.xlu0 %v838, 64
  %v886 = vpop.permute.xlu0 %885
  %v903 = vadd.f32 %v743, %v856
  %v904 = vadd.f32 %v744, %v858
  %v905 = vadd.f32 %v745, %v860
  %v906 = vadd.f32 %v746, %v862
  %v907 = vadd.f32 %v747, %v864
  %v908 = vadd.f32 %v748, %v866
  %v909 = vadd.f32 %v749, %v868
  %v910 = vadd.f32 %v750, %v870
  %v911 = vadd.f32 %v751, %v872
  %v912 = vadd.f32 %v752, %v874
  %v913 = vadd.f32 %v753, %v876
  %v914 = vadd.f32 %v754, %v878
  %v915 = vadd.f32 %v755, %v880
  %v916 = vadd.f32 %v756, %v882
  %v917 = vadd.f32 %v757, %v884
  %v918 = vadd.f32 %v758, %v886
  %v919 = vld [vmem:[#allocation2] sm:$0x1]
  %v920 = vsel %vm293, %v903, -inf
  %v921 = vsel %vm293, %v904, -inf
  %v922 = vsel %vm293, %v905, -inf
  %v923 = vsel %vm293, %v906, -inf
  %v924 = vsel %vm293, %v907, -inf
  %v925 = vmax.f32 %v920, %v924
  %v926 = vsel %vm293, %v908, -inf
  %v927 = vmax.f32 %v921, %v926
  %v928 = vsel %vm293, %v909, -inf
  %v929 = vmax.f32 %v922, %v928
  %v930 = vsel %vm293, %v910, -inf
  %v931 = vmax.f32 %v923, %v930
  %v932 = vsel %vm293, %v911, -inf
  %v933 = vmax.f32 %v925, %v932
  %v934 = vsel %vm293, %v912, -inf
  %v935 = vmax.f32 %v927, %v934
  %v936 = vsel %vm293, %v913, -inf
  %v937 = vmax.f32 %v929, %v936
  %v938 = vsel %vm293, %v914, -inf
  %v939 = vmax.f32 %v931, %v938
  %v940 = vsel %vm293, %v915, -inf
  %v941 = vmax.f32 %v933, %v940
  %v942 = vsel %vm293, %v916, -inf
  %v943 = vmax.f32 %v935, %v942
  %v944 = vsel %vm293, %v917, -inf
  %v945 = vmax.f32 %v937, %v944
  %v946 = vsel %vm293, %v918, -inf
  %v947 = vmax.f32 %v939, %v946
  %v948 = vmax.f32 %v941, %v943
  %v949 = vmax.f32 %v945, %v947
  %v950 = vmax.f32 %v948, %v949
  %v951 = vrot.slane %v950, 4
  %v952 = vmax.f32 %v950, %v951
  %v953 = vrot.slane %v952, 2
  %v954 = vmax.f32 %v952, %v953
  %v955 = vrot.slane %v954, 1
  %v956 = vmax.f32 %v954, %v955
  %v957 = vmax.f32 %v919, %v956
  %v958 = vsub.f32 %v919, %v957
  %v959 = vmul.f32 %v958, 1.442695
  %v960 = vpow.pop %v959
  %v962 = vlaneseq
  %v963 = vshrl.u32 %v962, 7
  %v964 = vsub.s32 0, %v963
  %v965 = vrot.slane %v957, %v964
  %v967 = vsub.f32 %v903, %v965
  %v968 = vsub.f32 %v904, %v965
  %v969 = vsub.f32 %v905, %v965
  %v970 = vsub.f32 %v906, %v965
  %v971 = vsub.f32 %v907, %v965
  %v972 = vsub.f32 %v908, %v965
  %v973 = vsub.f32 %v909, %v965
  %v974 = vsub.f32 %v910, %v965
  %v975 = vsub.f32 %v911, %v965
  %v976 = vsub.f32 %v912, %v965
  %v977 = vsub.f32 %v913, %v965
  %v978 = vsub.f32 %v914, %v965
  %v979 = vsub.f32 %v915, %v965
  %v980 = vsub.f32 %v916, %v965
  %v981 = vsub.f32 %v917, %v965
  %v982 = vsub.f32 %v918, %v965
  %v983 = vmul.f32 %v967, 1.442695
  %v984 = vpow.pop %v983
  %v985 = vmul.f32 %v968, 1.442695
  %v986 = vpow.pop %v985
  %v987 = vmul.f32 %v969, 1.442695
  %v988 = vpow.pop %v987
  %v989 = vmul.f32 %v970, 1.442695
  %v990 = vpow.pop %v989
  %v991 = vmul.f32 %v971, 1.442695
  %v992 = vpow.pop %v991
  %v993 = vmul.f32 %v972, 1.442695
  %v994 = vpow.pop %v993
  %v995 = vmul.f32 %v973, 1.442695
  %v996 = vpow.pop %v995
  %v997 = vmul.f32 %v974, 1.442695
  %v998 = vpow.pop %v997
  %v999 = vmul.f32 %v975, 1.442695
  %v1000 = vpow.pop %v999
  %v1001 = vmul.f32 %v976, 1.442695
  %v1002 = vpow.pop %v1001
  %v1003 = vmul.f32 %v977, 1.442695
  %v1004 = vpow.pop %v1003
  %v1005 = vmul.f32 %v978, 1.442695
  %v1006 = vpow.pop %v1005
  %v1007 = vmul.f32 %v979, 1.442695
  %v1008 = vpow.pop %v1007
  %v1009 = vmul.f32 %v980, 1.442695
  %v1010 = vpow.pop %v1009
  %v1011 = vmul.f32 %v981, 1.442695
  %v1012 = vpow.pop %v1011
  %v1013 = vmul.f32 %v982, 1.442695
  %v1014 = vpow.pop %v1013
  %vm1015 = vcmask 253952
  %1016 = vst.msk [vmem:[#allocation2] sm:$0x1] %vm1015, %v957
  %v1017 = vmul.f32 %v903, %v984
  %v1018 = vmul.f32 %v904, %v986
  %v1019 = vmul.f32 %v905, %v988
  %v1020 = vmul.f32 %v906, %v990
  %v1021 = vmul.f32 %v907, %v992
  %v1022 = vmul.f32 %v908, %v994
  %v1023 = vmul.f32 %v909, %v996
  %v1024 = vmul.f32 %v910, %v998
  %v1025 = vmul.f32 %v911, %v1000
  %v1026 = vmul.f32 %v912, %v1002
  %v1027 = vmul.f32 %v913, %v1004
  %v1028 = vmul.f32 %v914, %v1006
  %v1029 = vmul.f32 %v915, %v1008
  %v1030 = vmul.f32 %v916, %v1010
  %v1031 = vmul.f32 %v917, %v1012
  %v1032 = vmul.f32 %v918, %v1014
  %1033 = vrot.lane.b32.xlu0 %v227, 96
  %v1034 = vpop.permute.xlu0 %1033
  %1035 = vrot.lane.b32.xlu0 %v230, 96
  %v1036 = vpop.permute.xlu0 %1035
  %1037 = vrot.lane.b32.xlu0 %v235, 96
  %v1038 = vpop.permute.xlu0 %1037
  %1039 = vrot.lane.b32.xlu0 %v238, 96
  %v1040 = vpop.permute.xlu0 %1039
  %1041 = vrot.lane.b32.xlu0 %v243, 96
  %v1042 = vpop.permute.xlu0 %1041
  %1043 = vrot.lane.b32.xlu0 %v246, 96
  %v1044 = vpop.permute.xlu0 %1043
  %1045 = vrot.lane.b32.xlu0 %v251, 96
  %v1046 = vpop.permute.xlu0 %1045
  %1047 = vrot.lane.b32.xlu0 %v254, 96
  %v1048 = vpop.permute.xlu0 %1047
  %1049 = vrot.lane.b32.xlu0 %v259, 96
  %v1050 = vpop.permute.xlu0 %1049
  %1051 = vrot.lane.b32.xlu0 %v262, 96
  %v1052 = vpop.permute.xlu0 %1051
  %1053 = vrot.lane.b32.xlu0 %v267, 96
  %v1054 = vpop.permute.xlu0 %1053
  %1055 = vrot.lane.b32.xlu0 %v270, 96
  %v1056 = vpop.permute.xlu0 %1055
  %1057 = vrot.lane.b32.xlu0 %v275, 96
  %v1058 = vpop.permute.xlu0 %1057
  %1059 = vrot.lane.b32.xlu0 %v278, 96
  %v1060 = vpop.permute.xlu0 %1059
  %1061 = vrot.lane.b32.xlu0 %v283, 96
  %v1062 = vpop.permute.xlu0 %1061
  %1063 = vrot.lane.b32.xlu0 %v286, 96
  %v1064 = vpop.permute.xlu0 %1063
  %1097 = vrot.lane.b32.xlu0 %v1017, 32
  %v1098 = vpop.permute.xlu0 %1097
  %1099 = vrot.lane.b32.xlu0 %v1018, 32
  %v1100 = vpop.permute.xlu0 %1099
  %1101 = vrot.lane.b32.xlu0 %v1019, 32
  %v1102 = vpop.permute.xlu0 %1101
  %1103 = vrot.lane.b32.xlu0 %v1020, 32
  %v1104 = vpop.permute.xlu0 %1103
  %1105 = vrot.lane.b32.xlu0 %v1021, 32
  %v1106 = vpop.permute.xlu0 %1105
  %1107 = vrot.lane.b32.xlu0 %v1022, 32
  %v1108 = vpop.permute.xlu0 %1107
  %1109 = vrot.lane.b32.xlu0 %v1023, 32
  %v1110 = vpop.permute.xlu0 %1109
  %1111 = vrot.lane.b32.xlu0 %v1024, 32
  %v1112 = vpop.permute.xlu0 %1111
  %1113 = vrot.lane.b32.xlu0 %v1025, 32
  %v1114 = vpop.permute.xlu0 %1113
  %1115 = vrot.lane.b32.xlu0 %v1026, 32
  %v1116 = vpop.permute.xlu0 %1115
  %1117 = vrot.lane.b32.xlu0 %v1027, 32
  %v1118 = vpop.permute.xlu0 %1117
  %1119 = vrot.lane.b32.xlu0 %v1028, 32
  %v1120 = vpop.permute.xlu0 %1119
  %1121 = vrot.lane.b32.xlu0 %v1029, 32
  %v1122 = vpop.permute.xlu0 %1121
  %1123 = vrot.lane.b32.xlu0 %v1030, 32
  %v1124 = vpop.permute.xlu0 %1123
  %1125 = vrot.lane.b32.xlu0 %v1031, 32
  %v1126 = vpop.permute.xlu0 %1125
  %1127 = vrot.lane.b32.xlu0 %v1032, 32
  %v1128 = vpop.permute.xlu0 %1127
  %1161 = vrot.lane.b32.xlu0 %v984, 64
  %v1162 = vpop.permute.xlu0 %1161
  %1163 = vrot.lane.b32.xlu0 %v986, 64
  %v1164 = vpop.permute.xlu0 %1163
  %1165 = vrot.lane.b32.xlu0 %v988, 64
  %v1166 = vpop.permute.xlu0 %1165
  %1167 = vrot.lane.b32.xlu0 %v990, 64
  %v1168 = vpop.permute.xlu0 %1167
  %1169 = vrot.lane.b32.xlu0 %v992, 64
  %v1170 = vpop.permute.xlu0 %1169
  %1171 = vrot.lane.b32.xlu0 %v994, 64
  %v1172 = vpop.permute.xlu0 %1171
  %1173 = vrot.lane.b32.xlu0 %v996, 64
  %v1174 = vpop.permute.xlu0 %1173
  %1175 = vrot.lane.b32.xlu0 %v998, 64
  %v1176 = vpop.permute.xlu0 %1175
  %1177 = vrot.lane.b32.xlu0 %v1000, 64
  %v1178 = vpop.permute.xlu0 %1177
  %1179 = vrot.lane.b32.xlu0 %v1002, 64
  %v1180 = vpop.permute.xlu0 %1179
  %1181 = vrot.lane.b32.xlu0 %v1004, 64
  %v1182 = vpop.permute.xlu0 %1181
  %1183 = vrot.lane.b32.xlu0 %v1006, 64
  %v1184 = vpop.permute.xlu0 %1183
  %1185 = vrot.lane.b32.xlu0 %v1008, 64
  %v1186 = vpop.permute.xlu0 %1185
  %1187 = vrot.lane.b32.xlu0 %v1010, 64
  %v1188 = vpop.permute.xlu0 %1187
  %1189 = vrot.lane.b32.xlu0 %v1012, 64
  %v1190 = vpop.permute.xlu0 %1189
  %1191 = vrot.lane.b32.xlu0 %v1014, 64
  %v1192 = vpop.permute.xlu0 %1191
  %v1209 = vsel %vm293, %v1034, %v1098
  %v1210 = vsel %vm293, %v1036, %v1100
  %v1211 = vsel %vm293, %v1038, %v1102
  %v1212 = vsel %vm293, %v1040, %v1104
  %v1213 = vsel %vm293, %v1042, %v1106
  %v1214 = vsel %vm293, %v1044, %v1108
  %v1215 = vsel %vm293, %v1046, %v1110
  %v1216 = vsel %vm293, %v1048, %v1112
  %v1217 = vsel %vm293, %v1050, %v1114
  %v1218 = vsel %vm293, %v1052, %v1116
  %v1219 = vsel %vm293, %v1054, %v1118
  %v1220 = vsel %vm293, %v1056, %v1120
  %v1221 = vsel %vm293, %v1058, %v1122
  %v1222 = vsel %vm293, %v1060, %v1124
  %v1223 = vsel %vm293, %v1062, %v1126
  %v1224 = vsel %vm293, %v1064, %v1128
  %v1225 = vsel %vm167, %v1209, %v1162
  %v1226 = vsel %vm167, %v1210, %v1164
  %v1227 = vsel %vm167, %v1211, %v1166
  %v1228 = vsel %vm167, %v1212, %v1168
  %v1229 = vsel %vm167, %v1213, %v1170
  %v1230 = vsel %vm167, %v1214, %v1172
  %v1231 = vsel %vm167, %v1215, %v1174
  %v1232 = vsel %vm167, %v1216, %v1176
  %v1233 = vsel %vm167, %v1217, %v1178
  %v1234 = vsel %vm167, %v1218, %v1180
  %v1235 = vsel %vm167, %v1219, %v1182
  %v1236 = vsel %vm167, %v1220, %v1184
  %v1237 = vsel %vm167, %v1221, %v1186
  %v1238 = vsel %vm167, %v1222, %v1188
  %v1239 = vsel %vm167, %v1223, %v1190
  %v1240 = vsel %vm167, %v1224, %v1192
  %v1241 = vpack.c.bf16 %v1226, %v1225
  %v1242 = vpack.c.bf16 %v1228, %v1227
  %v1243 = vpack.c.bf16 %v1230, %v1229
  %v1244 = vpack.c.bf16 %v1232, %v1231
  %v1245 = vpack.c.bf16 %v1234, %v1233
  %v1246 = vpack.c.bf16 %v1236, %v1235
  %v1247 = vpack.c.bf16 %v1238, %v1237
  %v1248 = vpack.c.bf16 %v1240, %v1239
  %1249 = vmatprep.subr.bf16.mxu0 0
  %1250 = vmatpush1.bf16.msra.mxu0 %v1248
  %1251 = vmatprep.subr.bf16.mxu0 0
  %1252 = vmatpush1.bf16.msra.mxu0 %v1247
  %1253 = vmatprep.subr.bf16.mxu0 0
  %1254 = vmatpush1.bf16.msra.mxu0 %v1246
  %1255 = vmatprep.subr.bf16.mxu0 0
  %1256 = vmatpush1.bf16.msra.mxu0 %v1245
  %1257 = vmatprep.subr.bf16.mxu0 0
  %1258 = vmatpush1.bf16.msra.mxu0 %v1244
  %1259 = vmatprep.subr.bf16.mxu0 0
  %1260 = vmatpush1.bf16.msra.mxu0 %v1243
  %1261 = vmatprep.subr.bf16.mxu0 0
  %1262 = vmatpush1.bf16.msra.mxu0 %v1242
  %1263 = vmatprep.subr.bf16.mxu0 0
  %1264 = vmatpush1.bf16.msra.mxu0 %v1241
  %1265 = vmatprep.subr.bf16.mxu0 0
  %1266 = vmatpush2.bf16.msra.mxu0 0
  %1267 = vmatprep.subr.bf16.mxu0 0
  %1268 = vmatpush2.bf16.msra.mxu0 0
  %1269 = vmatprep.subr.bf16.mxu0 0
  %1270 = vmatpush2.bf16.msra.mxu0 0
  %1271 = vmatprep.subr.bf16.mxu0 0
  %1272 = vmatpush2.bf16.msra.mxu0 0
  %1273 = vmatprep.subr.bf16.mxu0 0
  %1274 = vmatpush2.bf16.msra.mxu0 0
  %1275 = vmatprep.subr.bf16.mxu0 0
  %1276 = vmatpush2.bf16.msra.mxu0 0
  %1277 = vmatprep.subr.bf16.mxu0 0
  %1278 = vmatpush2.bf16.msra.mxu0 0
  %1279 = vmatprep.subr.bf16.mxu0 0
  %1280 = vmatpush2.bf16.msra.mxu0 0
  %1281 = vmatprep.mubr.bf16.mxu0 0
  %1282 = vmatmul.mubr.bf16.gmra.mxu0 %v115
  %v1283 = vpop.f32.mrf.mxu0
  %v1284 = vadd.f32 0.0, %v1283
  %v1285 = vpop.f32.mrf.mxu0
  %v1286 = vpop.f32.mrf.mxu0
  %v1287 = vadd.f32 0.0, %v1286
  %v1288 = vpop.f32.mrf.mxu0
  %1289 = vmatprep.mubr.bf16.mxu0 0
  %1290 = vmatmul.mubr.bf16.gmra.mxu0 %v116
  %v1291 = vpop.f32.mrf.mxu0
  %v1292 = vadd.f32 0.0, %v1291
  %v1293 = vpop.f32.mrf.mxu0
  %v1294 = vpop.f32.mrf.mxu0
  %v1295 = vadd.f32 0.0, %v1294
  %v1296 = vpop.f32.mrf.mxu0
  %1297 = vmatprep.mubr.bf16.mxu0 0
  %1298 = vmatmul.mubr.bf16.gmra.mxu0 %v117
  %v1299 = vpop.f32.mrf.mxu0
  %v1300 = vadd.f32 0.0, %v1299
  %v1301 = vpop.f32.mrf.mxu0
  %v1302 = vpop.f32.mrf.mxu0
  %v1303 = vadd.f32 0.0, %v1302
  %v1304 = vpop.f32.mrf.mxu0
  %1305 = vmatprep.mubr.bf16.mxu0 0
  %1306 = vmatmul.mubr.bf16.gmra.mxu0 %v118
  %v1307 = vpop.f32.mrf.mxu0
  %v1308 = vadd.f32 0.0, %v1307
  %v1309 = vpop.f32.mrf.mxu0
  %v1310 = vpop.f32.mrf.mxu0
  %v1311 = vadd.f32 0.0, %v1310
  %v1312 = vpop.f32.mrf.mxu0
  %1313 = vdwg.mxu0
  %v1315 = vlaneseq
  %v1316 = vshrl.u32 %v1315, 7
  %v1317 = vsub.s32 0, %v1316
  %v1318 = vrot.slane %v960, %v1317
  %1319 = vrot.lane.b32.xlu0 %v1318, 32
  %v1320 = vpop.permute.xlu0 %1319
  %1322 = vrot.lane.b32.xlu0 %v1318, 64
  %v1323 = vpop.permute.xlu0 %1322
  %v1325 = vsel %vm293, 1.0, %v1320
  %v1326 = vsel %vm167, %v1325, %v1323
  %v1327 = vld [vmem:[%s5] sm:$0xff]
  %v1328 = vld [vmem:[%s5 + $0x8] sm:$0xff]
  %v1329 = vld [vmem:[%s5 + $0x10] sm:$0xff]
  %v1330 = vld [vmem:[%s5 + $0x18] sm:$0xff]
  %v1331 = vld [vmem:[%s5 + $0x20] sm:$0xff]
  %v1332 = vld [vmem:[%s5 + $0x28] sm:$0xff]
  %v1333 = vld [vmem:[%s5 + $0x30] sm:$0xff]
  %v1334 = vld [vmem:[%s5 + $0x38] sm:$0xff]
  %v1335 = vlaneseq
  %v1336 = vshrl.u32 %v1335, 7
  %v1337 = vsub.s32 0, %v1336
  %v1338 = vrot.slane %v1326, %v1337
  %v1339 = vmul.f32 %v1327, %v1338
  %v1340 = vmul.f32 %v1328, %v1338
  %v1341 = vmul.f32 %v1329, %v1338
  %v1342 = vmul.f32 %v1330, %v1338
  %v1343 = vmul.f32 %v1331, %v1338
  %v1344 = vmul.f32 %v1332, %v1338
  %v1345 = vmul.f32 %v1333, %v1338
  %v1346 = vmul.f32 %v1334, %v1338
  %v1347 = vadd.f32 %v1339, %v1284
  %v1348 = vadd.f32 %v1340, %v1287
  %v1349 = vadd.f32 %v1341, %v1292
  %v1350 = vadd.f32 %v1342, %v1295
  %v1351 = vadd.f32 %v1343, %v1300
  %v1352 = vadd.f32 %v1344, %v1303
  %v1353 = vadd.f32 %v1345, %v1308
  %v1354 = vadd.f32 %v1346, %v1311
  %vm1355 = vcmask 785408
  %1356 = vst.msk [vmem:[%s5] sm:$0xff] %vm1355, %v1347
  %1357 = vst.msk [vmem:[%s5 + $0x8] sm:$0xff] %vm1355, %v1348
  %1358 = vst.msk [vmem:[%s5 + $0x10] sm:$0xff] %vm1355, %v1349
  %1359 = vst.msk [vmem:[%s5 + $0x18] sm:$0xff] %vm1355, %v1350
  %1360 = vst.msk [vmem:[%s5 + $0x20] sm:$0xff] %vm1355, %v1351
  %1361 = vst.msk [vmem:[%s5 + $0x28] sm:$0xff] %vm1355, %v1352
  %1362 = vst.msk [vmem:[%s5 + $0x30] sm:$0xff] %vm1355, %v1353
  %1363 = vst.msk [vmem:[%s5 + $0x38] sm:$0xff] %vm1355, %v1354
  // Predicated region
  $region26: #{_lambda_.11} parent=0 // pred_check
    _
  $region27: #{_lambda_.11} parent=0 // pred_check_branch
    %1365 = sbr.rel (0) target = $region29
  $region28: #{_lambda_.11} parent=0 // pred_region
    _
  $region29: #{_lambda_.11} parent=0 // pred_fallthru
    _
  // Predicated region
  $region30: #{_lambda_.11} parent=0 // pred_check
    _
  $region31: #{_lambda_.11} parent=0 // pred_check_branch
    %1367 = sbr.rel (0) target = $region33
  $region32: #{_lambda_.11} parent=0 // pred_region
    _
  $region33: #{_lambda_.11} parent=0 // pred_fallthru
    _

// kernel: _lambda_.15
$region0: #{_lambda_.15}
  #allocation0 [shape = 'u32[]', space=smem, size = 0x4, offset = 0x4, fixed_abs, tag = 'smem constant byte address 0x4 - core index']
  #allocation1 [shape = 'u32[144,128]{1,0:T(1,128)}', space=vmem, size = 0x12000, scoped, tag = 'internal scratch']
  %s0 = inlined_call_operand.vmem [shape: f32[64,16], index: 0, kind: input, shape index: {}]
  %s1 = inlined_call_operand.vmem [shape: f32[64,48], index: 1, kind: input, shape index: {}]
  %s2 = inlined_call_operand.vmem [shape: f32[64,1], index: 2, kind: input, shape index: {}]
  %s3 = inlined_call_operand.vmem [shape: f32[16,16], index: 3, kind: input, shape index: {}]
  %s4 = inlined_call_operand.vmem [shape: f32[1,16], index: 4, kind: input, shape index: {}]
  %s5 = inlined_call_operand.vmem [shape: f32[1,16], index: 5, kind: input, shape index: {}]
  %s6 = inlined_call_operand.vmem [shape: f32[1,16], index: 6, kind: input, shape index: {}]
  %s7 = inlined_call_operand.vmem [shape: f32[64,16], index: 7, kind: output, shape index: {}]
  %s8 = sld [smem:[#allocation0]]
  $region38: #{_lambda_.15} parent=0
    _
  %s10 = ssub.s32 1, %s8
  %s11 = scalar_select 0, %s10, %s8
  // Predicated region
  $region2: #{_lambda_.15} parent=0 // pred_check
    _
  $region3: #{_lambda_.15} parent=0 // pred_check_branch
    %13 = sbr.rel (0) target = $region5
  $region4: #{_lambda_.15} parent=0 // pred_region
    _
  $region5: #{_lambda_.15} parent=0 // pred_fallthru
    _
  // Predicated region
  $region6: #{_lambda_.15} parent=0 // pred_check
    _
  $region7: #{_lambda_.15} parent=0 // pred_check_branch
    %15 = sbr.rel (0) target = $region9
  $region8: #{_lambda_.15} parent=0 // pred_region
    _
  $region9: #{_lambda_.15} parent=0 // pred_fallthru
    _
  // Predicated region
  $region10: #{_lambda_.15} parent=0 // pred_check
    _
  $region11: #{_lambda_.15} parent=0 // pred_check_branch
    %17 = sbr.rel (0) target = $region13
  $region12: #{_lambda_.15} parent=0 // pred_region
    _
  $region13: #{_lambda_.15} parent=0 // pred_fallthru
    _
  // Predicated region
  $region14: #{_lambda_.15} parent=0 // pred_check
    _
  $region15: #{_lambda_.15} parent=0 // pred_check_branch
    %19 = sbr.rel (0) target = $region17
  $region16: #{_lambda_.15} parent=0 // pred_region
    _
  $region17: #{_lambda_.15} parent=0 // pred_fallthru
    _
  // Predicated region
  $region18: #{_lambda_.15} parent=0 // pred_check
    _
  $region19: #{_lambda_.15} parent=0 // pred_check_branch
    %21 = sbr.rel (0) target = $region21
  $region20: #{_lambda_.15} parent=0 // pred_region
    _
  $region21: #{_lambda_.15} parent=0 // pred_fallthru
    _
  // Predicated region
  $region22: #{_lambda_.15} parent=0 // pred_check
    _
  $region23: #{_lambda_.15} parent=0 // pred_check_branch
    %23 = sbr.rel (0) target = $region25
  $region24: #{_lambda_.15} parent=0 // pred_region
    _
  $region25: #{_lambda_.15} parent=0 // pred_fallthru
    _
  // Predicated region
  $region26: #{_lambda_.15} parent=0 // pred_check
    _
  $region27: #{_lambda_.15} parent=0 // pred_check_branch
    %25 = sbr.rel (0) target = $region29
  $region28: #{_lambda_.15} parent=0 // pred_region
    _
  $region29: #{_lambda_.15} parent=0 // pred_fallthru
    _
  %v26 = vld [vmem:[%s1] sm:$0xff]
  %v27 = vld [vmem:[%s1 + $0x8] sm:$0xff]
  %v28 = vld [vmem:[%s1 + $0x10] sm:$0xff]
  %v29 = vld [vmem:[%s1 + $0x18] sm:$0xff]
  %v30 = vld [vmem:[%s1 + $0x20] sm:$0xff]
  %v31 = vld [vmem:[%s1 + $0x28] sm:$0xff]
  %v32 = vld [vmem:[%s1 + $0x30] sm:$0xff]
  %v33 = vld [vmem:[%s1 + $0x38] sm:$0xff]
  %v34 = vld [vmem:[%s0] sm:$0xff]
  %v35 = vld [vmem:[%s0 + $0x8] sm:$0xff]
  %v36 = vld [vmem:[%s0 + $0x10] sm:$0xff]
  %v37 = vld [vmem:[%s0 + $0x18] sm:$0xff]
  %v38 = vld [vmem:[%s0 + $0x20] sm:$0xff]
  %v39 = vld [vmem:[%s0 + $0x28] sm:$0xff]
  %v40 = vld [vmem:[%s0 + $0x30] sm:$0xff]
  %v41 = vld [vmem:[%s0 + $0x38] sm:$0xff]
  %v42 = vld [vmem:[%s2] sm:$0xff]
  %v43 = vld [vmem:[%s2 + $0x8] sm:$0xff]
  %v44 = vld [vmem:[%s2 + $0x10] sm:$0xff]
  %v45 = vld [vmem:[%s2 + $0x18] sm:$0xff]
  %v46 = vld [vmem:[%s2 + $0x20] sm:$0xff]
  %v47 = vld [vmem:[%s2 + $0x28] sm:$0xff]
  %v48 = vld [vmem:[%s2 + $0x30] sm:$0xff]
  %v49 = vld [vmem:[%s2 + $0x38] sm:$0xff]
  %51 = vset.pattern.permute.xlu0 0
  %52 = vperm.xlu0 %51, %v42
  %v53 = vpop.permute.xlu0 %52
  %56 = vset.pattern.permute.xlu0 0
  %57 = vperm.xlu0 %56, %v43
  %v58 = vpop.permute.xlu0 %57
  %61 = vset.pattern.permute.xlu0 0
  %62 = vperm.xlu0 %61, %v44
  %v63 = vpop.permute.xlu0 %62
  %66 = vset.pattern.permute.xlu0 0
  %67 = vperm.xlu0 %66, %v45
  %v68 = vpop.permute.xlu0 %67
  %71 = vset.pattern.permute.xlu0 0
  %72 = vperm.xlu0 %71, %v46
  %v73 = vpop.permute.xlu0 %72
  %76 = vset.pattern.permute.xlu0 0
  %77 = vperm.xlu0 %76, %v47
  %v78 = vpop.permute.xlu0 %77
  %81 = vset.pattern.permute.xlu0 0
  %82 = vperm.xlu0 %81, %v48
  %v83 = vpop.permute.xlu0 %82
  %86 = vset.pattern.permute.xlu0 0
  %87 = vperm.xlu0 %86, %v49
  %v88 = vpop.permute.xlu0 %87
  %v90 = vmul.f32 %v53, %v26
  %v91 = vmul.f32 %v58, %v27
  %v92 = vmul.f32 %v63, %v28
  %v93 = vmul.f32 %v68, %v29
  %v94 = vmul.f32 %v73, %v30
  %v95 = vmul.f32 %v78, %v31
  %v96 = vmul.f32 %v83, %v32
  %v97 = vmul.f32 %v88, %v33
  %v98 = vadd.f32 %v34, %v90
  %v99 = vadd.f32 %v35, %v91
  %v100 = vadd.f32 %v36, %v92
  %v101 = vadd.f32 %v37, %v93
  %v102 = vadd.f32 %v38, %v94
  %v103 = vadd.f32 %v39, %v95
  %v104 = vadd.f32 %v40, %v96
  %v105 = vadd.f32 %v41, %v97
  %v106 = vadd.f32 %v26, 1e-16
  %v107 = vadd.f32 %v27, 1e-16
  %v108 = vadd.f32 %v28, 1e-16
  %v109 = vadd.f32 %v29, 1e-16
  %v110 = vadd.f32 %v30, 1e-16
  %v111 = vadd.f32 %v31, 1e-16
  %v112 = vadd.f32 %v32, 1e-16
  %v113 = vadd.f32 %v33, 1e-16
  %v114 = vrcp.pop %v106
  %v115 = vrcp.pop %v107
  %v116 = vrcp.pop %v108
  %v117 = vrcp.pop %v109
  %v118 = vrcp.pop %v110
  %v119 = vrcp.pop %v111
  %v120 = vrcp.pop %v112
  %v121 = vrcp.pop %v113
  %130 = vrot.lane.b32.xlu0 %v114, 112
  %v131 = vpop.permute.xlu0 %130
  %132 = vrot.lane.b32.xlu0 %v115, 112
  %v133 = vpop.permute.xlu0 %132
  %134 = vrot.lane.b32.xlu0 %v116, 112
  %v135 = vpop.permute.xlu0 %134
  %136 = vrot.lane.b32.xlu0 %v117, 112
  %v137 = vpop.permute.xlu0 %136
  %138 = vrot.lane.b32.xlu0 %v118, 112
  %v139 = vpop.permute.xlu0 %138
  %140 = vrot.lane.b32.xlu0 %v119, 112
  %v141 = vpop.permute.xlu0 %140
  %142 = vrot.lane.b32.xlu0 %v120, 112
  %v143 = vpop.permute.xlu0 %142
  %144 = vrot.lane.b32.xlu0 %v121, 112
  %v145 = vpop.permute.xlu0 %144
  %v154 = vmul.f32 %v26, %v131
  %v155 = vmul.f32 %v27, %v133
  %v156 = vmul.f32 %v28, %v135
  %v157 = vmul.f32 %v29, %v137
  %v158 = vmul.f32 %v30, %v139
  %v159 = vmul.f32 %v31, %v141
  %v160 = vmul.f32 %v32, %v143
  %v161 = vmul.f32 %v33, %v145
  %v162 = vmax.f32 %v154, 0.0
  %v163 = vmax.f32 %v155, 0.0
  %v164 = vmax.f32 %v156, 0.0
  %v165 = vmax.f32 %v157, 0.0
  %v166 = vmax.f32 %v158, 0.0
  %v167 = vmax.f32 %v159, 0.0
  %v168 = vmax.f32 %v160, 0.0
  %v169 = vmax.f32 %v161, 0.0
  %v170 = vmul.f32 %v162, 0.1
  %v171 = vmul.f32 %v163, 0.1
  %v172 = vmul.f32 %v164, 0.1
  %v173 = vmul.f32 %v165, 0.1
  %v174 = vmul.f32 %v166, 0.1
  %v175 = vmul.f32 %v167, 0.1
  %v176 = vmul.f32 %v168, 0.1
  %v177 = vmul.f32 %v169, 0.1
  %186 = vrot.lane.b32.xlu0 %v170, 112
  %v187 = vpop.permute.xlu0 %186
  %188 = vrot.lane.b32.xlu0 %v171, 112
  %v189 = vpop.permute.xlu0 %188
  %190 = vrot.lane.b32.xlu0 %v172, 112
  %v191 = vpop.permute.xlu0 %190
  %192 = vrot.lane.b32.xlu0 %v173, 112
  %v193 = vpop.permute.xlu0 %192
  %194 = vrot.lane.b32.xlu0 %v174, 112
  %v195 = vpop.permute.xlu0 %194
  %196 = vrot.lane.b32.xlu0 %v175, 112
  %v197 = vpop.permute.xlu0 %196
  %198 = vrot.lane.b32.xlu0 %v176, 112
  %v199 = vpop.permute.xlu0 %198
  %200 = vrot.lane.b32.xlu0 %v177, 112
  %v201 = vpop.permute.xlu0 %200
  %v210 = vadd.f32 %v98, %v187
  %v211 = vadd.f32 %v99, %v189
  %v212 = vadd.f32 %v100, %v191
  %v213 = vadd.f32 %v101, %v193
  %v214 = vadd.f32 %v102, %v195
  %v215 = vadd.f32 %v103, %v197
  %v216 = vadd.f32 %v104, %v199
  %v217 = vadd.f32 %v105, %v201
  %v218 = vld [vmem:[%s3] sm:$0xff]
  %v219 = vld [vmem:[%s3 + $0x8] sm:$0xff]
  %v220 = vld [vmem:[%s4] sm:$0x1]
  %v222 = vlaneseq
  %v223 = vshrl.u32 %v222, 7
  %v224 = vsub.s32 0, %v223
  %v225 = vrot.slane %v220, %v224
  %vm227 = vcmask 130048
  %v229 = vsel %vm227, %v210, 0
  %v232 = vsel %vm227, %v211, 0
  %v235 = vsel %vm227, %v212, 0
  %v238 = vsel %vm227, %v213, 0
  %v241 = vsel %vm227, %v214, 0
  %v244 = vsel %vm227, %v215, 0
  %v247 = vsel %vm227, %v216, 0
  %v250 = vsel %vm227, %v217, 0
  %252 = vmatprep.subr.mxu0 0.0
  %253 = vmatpush1.msra.mxu0 0.0
  %254 = vmatprep.subr.mxu0 0.0
  %255 = vmatpush1.msra.mxu0 0.0
  %256 = vmatprep.subr.mxu0 0.0
  %257 = vmatpush1.msra.mxu0 0.0
  %258 = vmatprep.subr.mxu0 0.0
  %259 = vmatpush1.msra.mxu0 0.0
  %260 = vmatprep.subr.mxu0 0.0
  %261 = vmatpush1.msra.mxu0 0.0
  %262 = vmatprep.subr.mxu0 0.0
  %263 = vmatpush1.msra.mxu0 0.0
  %264 = vmatprep.subr.mxu0 0.0
  %265 = vmatpush1.msra.mxu0 0.0
  %266 = vmatprep.subr.mxu0 0.0
  %267 = vmatpush1.msra.mxu0 0.0
  %268 = vmatprep.subr.mxu0 0.0
  %269 = vmatpush1.msra.mxu0 0.0
  %270 = vmatprep.subr.mxu0 0.0
  %271 = vmatpush1.msra.mxu0 0.0
  %272 = vmatprep.subr.mxu0 0.0
  %273 = vmatpush1.msra.mxu0 0.0
  %274 = vmatprep.subr.mxu0 0.0
  %275 = vmatpush1.msra.mxu0 0.0
  %276 = vmatprep.subr.mxu0 0.0
  %277 = vmatpush1.msra.mxu0 0.0
  %278 = vmatprep.subr.mxu0 0.0
  %279 = vmatpush1.msra.mxu0 0.0
  %280 = vmatprep.subr.mxu0 0.0
  %281 = vmatpush1.msra.mxu0 %v219
  %282 = vmatprep.subr.mxu0 0.0
  %283 = vmatpush1.msra.mxu0 %v218
  %284 = vmatprep.subr.mxu0 0.0
  %285 = vmatpush2.msra.mxu0 0.0
  %286 = vmatprep.subr.mxu0 0.0
  %287 = vmatpush2.msra.mxu0 0.0
  %288 = vmatprep.subr.mxu0 0.0
  %289 = vmatpush2.msra.mxu0 0.0
  %290 = vmatprep.subr.mxu0 0.0
  %291 = vmatpush2.msra.mxu0 0.0
  %292 = vmatprep.subr.mxu0 0.0
  %293 = vmatpush2.msra.mxu0 0.0
  %294 = vmatprep.subr.mxu0 0.0
  %295 = vmatpush2.msra.mxu0 0.0
  %296 = vmatprep.subr.mxu0 0.0
  %297 = vmatpush2.msra.mxu0 0.0
  %298 = vmatprep.subr.mxu0 0.0
  %299 = vmatpush2.msra.mxu0 0.0
  %300 = vmatprep.subr.mxu0 0.0
  %301 = vmatpush2.msra.mxu0 0.0
  %302 = vmatprep.subr.mxu0 0.0
  %303 = vmatpush2.msra.mxu0 0.0
  %304 = vmatprep.subr.mxu0 0.0
  %305 = vmatpush2.msra.mxu0 0.0
  %306 = vmatprep.subr.mxu0 0.0
  %307 = vmatpush2.msra.mxu0 0.0
  %308 = vmatprep.subr.mxu0 0.0
  %309 = vmatpush2.msra.mxu0 0.0
  %310 = vmatprep.subr.mxu0 0.0
  %311 = vmatpush2.msra.mxu0 0.0
  %312 = vmatprep.subr.mxu0 0.0
  %313 = vmatpush2.msra.mxu0 0.0
  %314 = vmatprep.subr.mxu0 0.0
  %315 = vmatpush2.msra.mxu0 0.0
  %316 = vmatprep.mubr.f32.mxu0 0.0
  %317 = vmatmul.mubr.f32.gmra.mxu0 %v229
  %v318 = vpop.f32.mrf.mxu0
  %v319 = vadd.f32 %v225, %v318
  %v320 = vpop.f32.mrf.mxu0
  %321 = vmatprep.mubr.f32.mxu0 0.0
  %322 = vmatmul.mubr.f32.gmra.mxu0 %v232
  %v323 = vpop.f32.mrf.mxu0
  %v324 = vadd.f32 %v225, %v323
  %v325 = vpop.f32.mrf.mxu0
  %326 = vmatprep.mubr.f32.mxu0 0.0
  %327 = vmatmul.mubr.f32.gmra.mxu0 %v235
  %v328 = vpop.f32.mrf.mxu0
  %v329 = vadd.f32 %v225, %v328
  %v330 = vpop.f32.mrf.mxu0
  %331 = vmatprep.mubr.f32.mxu0 0.0
  %332 = vmatmul.mubr.f32.gmra.mxu0 %v238
  %v333 = vpop.f32.mrf.mxu0
  %v334 = vadd.f32 %v225, %v333
  %v335 = vpop.f32.mrf.mxu0
  %336 = vmatprep.mubr.f32.mxu0 0.0
  %337 = vmatmul.mubr.f32.gmra.mxu0 %v241
  %v338 = vpop.f32.mrf.mxu0
  %v339 = vadd.f32 %v225, %v338
  %v340 = vpop.f32.mrf.mxu0
  %341 = vmatprep.mubr.f32.mxu0 0.0
  %342 = vmatmul.mubr.f32.gmra.mxu0 %v244
  %v343 = vpop.f32.mrf.mxu0
  %v344 = vadd.f32 %v225, %v343
  %v345 = vpop.f32.mrf.mxu0
  %346 = vmatprep.mubr.f32.mxu0 0.0
  %347 = vmatmul.mubr.f32.gmra.mxu0 %v247
  %v348 = vpop.f32.mrf.mxu0
  %v349 = vadd.f32 %v225, %v348
  %v350 = vpop.f32.mrf.mxu0
  %351 = vmatprep.mubr.f32.mxu0 0.0
  %352 = vmatmul.mubr.f32.gmra.mxu0 %v250
  %v353 = vpop.f32.mrf.mxu0
  %v354 = vadd.f32 %v225, %v353
  %v355 = vpop.f32.mrf.mxu0
  %356 = vdwg.mxu0
  %v357 = vsel %vm227, %v319, 0.0
  %358 = vadd.xlane.f32.xlu0 %v357
  %v359 = vpop.xlane.xlu0 %358
  %v360 = vsel %vm227, %v324, 0.0
  %361 = vadd.xlane.f32.xlu0 %v360
  %v362 = vpop.xlane.xlu0 %361
  %v363 = vsel %vm227, %v329, 0.0
  %364 = vadd.xlane.f32.xlu0 %v363
  %v365 = vpop.xlane.xlu0 %364
  %v366 = vsel %vm227, %v334, 0.0
  %367 = vadd.xlane.f32.xlu0 %v366
  %v368 = vpop.xlane.xlu0 %367
  %v369 = vsel %vm227, %v339, 0.0
  %370 = vadd.xlane.f32.xlu0 %v369
  %v371 = vpop.xlane.xlu0 %370
  %v372 = vsel %vm227, %v344, 0.0
  %373 = vadd.xlane.f32.xlu0 %v372
  %v374 = vpop.xlane.xlu0 %373
  %v375 = vsel %vm227, %v349, 0.0
  %376 = vadd.xlane.f32.xlu0 %v375
  %v377 = vpop.xlane.xlu0 %376
  %v378 = vsel %vm227, %v354, 0.0
  %379 = vadd.xlane.f32.xlu0 %v378
  %v380 = vpop.xlane.xlu0 %379
  %v381 = vrcp.pop 16.0
  %v382 = vmul.f32 %v359, %v381
  %v383 = vmul.f32 %v362, %v381
  %v384 = vmul.f32 %v365, %v381
  %v385 = vmul.f32 %v368, %v381
  %v386 = vmul.f32 %v371, %v381
  %v387 = vmul.f32 %v374, %v381
  %v388 = vmul.f32 %v377, %v381
  %v389 = vmul.f32 %v380, %v381
  %v390 = vsub.f32 %v319, %v382
  %v391 = vsub.f32 %v324, %v383
  %v392 = vsub.f32 %v329, %v384
  %v393 = vsub.f32 %v334, %v385
  %v394 = vsub.f32 %v339, %v386
  %v395 = vsub.f32 %v344, %v387
  %v396 = vsub.f32 %v349, %v388
  %v397 = vsub.f32 %v354, %v389
  %v398 = vmul.f32 %v390, %v390
  %v399 = vmul.f32 %v391, %v391
  %v400 = vmul.f32 %v392, %v392
  %v401 = vmul.f32 %v393, %v393
  %v402 = vmul.f32 %v394, %v394
  %v403 = vmul.f32 %v395, %v395
  %v404 = vmul.f32 %v396, %v396
  %v405 = vmul.f32 %v397, %v397
  %v406 = vsel %vm227, %v398, 0.0
  %407 = vadd.xlane.f32.xlu0 %v406
  %v408 = vpop.xlane.xlu0 %407
  %v409 = vsel %vm227, %v399, 0.0
  %410 = vadd.xlane.f32.xlu0 %v409
  %v411 = vpop.xlane.xlu0 %410
  %v412 = vsel %vm227, %v400, 0.0
  %413 = vadd.xlane.f32.xlu0 %v412
  %v414 = vpop.xlane.xlu0 %413
  %v415 = vsel %vm227, %v401, 0.0
  %416 = vadd.xlane.f32.xlu0 %v415
  %v417 = vpop.xlane.xlu0 %416
  %v418 = vsel %vm227, %v402, 0.0
  %419 = vadd.xlane.f32.xlu0 %v418
  %v420 = vpop.xlane.xlu0 %419
  %v421 = vsel %vm227, %v403, 0.0
  %422 = vadd.xlane.f32.xlu0 %v421
  %v423 = vpop.xlane.xlu0 %422
  %v424 = vsel %vm227, %v404, 0.0
  %425 = vadd.xlane.f32.xlu0 %v424
  %v426 = vpop.xlane.xlu0 %425
  %v427 = vsel %vm227, %v405, 0.0
  %428 = vadd.xlane.f32.xlu0 %v427
  %v429 = vpop.xlane.xlu0 %428
  %v430 = vmul.f32 %v408, %v381
  %v431 = vmul.f32 %v411, %v381
  %v432 = vmul.f32 %v414, %v381
  %v433 = vmul.f32 %v417, %v381
  %v434 = vmul.f32 %v420, %v381
  %v435 = vmul.f32 %v423, %v381
  %v436 = vmul.f32 %v426, %v381
  %v437 = vmul.f32 %v429, %v381
  %v438 = vadd.f32 %v430, 1e-05
  %v439 = vadd.f32 %v431, 1e-05
  %v440 = vadd.f32 %v432, 1e-05
  %v441 = vadd.f32 %v433, 1e-05
  %v442 = vadd.f32 %v434, 1e-05
  %v443 = vadd.f32 %v435, 1e-05
  %v444 = vadd.f32 %v436, 1e-05
  %v445 = vadd.f32 %v437, 1e-05
  %v446 = vrsqrt.pop %v438
  %v447 = vrsqrt.pop %v439
  %v448 = vrsqrt.pop %v440
  %v449 = vrsqrt.pop %v441
  %v450 = vrsqrt.pop %v442
  %v451 = vrsqrt.pop %v443
  %v452 = vrsqrt.pop %v444
  %v453 = vrsqrt.pop %v445
  %v454 = vmul.f32 %v390, %v446
  %v455 = vmul.f32 %v391, %v447
  %v456 = vmul.f32 %v392, %v448
  %v457 = vmul.f32 %v393, %v449
  %v458 = vmul.f32 %v394, %v450
  %v459 = vmul.f32 %v395, %v451
  %v460 = vmul.f32 %v396, %v452
  %v461 = vmul.f32 %v397, %v453
  %v462 = vld [vmem:[%s5] sm:$0x1]
  %v464 = vlaneseq
  %v465 = vshrl.u32 %v464, 7
  %v466 = vsub.s32 0, %v465
  %v467 = vrot.slane %v462, %v466
  %v469 = vmul.f32 %v454, %v467
  %v470 = vmul.f32 %v455, %v467
  %v471 = vmul.f32 %v456, %v467
  %v472 = vmul.f32 %v457, %v467
  %v473 = vmul.f32 %v458, %v467
  %v474 = vmul.f32 %v459, %v467
  %v475 = vmul.f32 %v460, %v467
  %v476 = vmul.f32 %v461, %v467
  %v477 = vld [vmem:[%s6] sm:$0x1]
  %v479 = vlaneseq
  %v480 = vshrl.u32 %v479, 7
  %v481 = vsub.s32 0, %v480
  %v482 = vrot.slane %v477, %v481
  %v484 = vadd.f32 %v469, %v482
  %v485 = vadd.f32 %v470, %v482
  %v486 = vadd.f32 %v471, %v482
  %v487 = vadd.f32 %v472, %v482
  %v488 = vadd.f32 %v473, %v482
  %v489 = vadd.f32 %v474, %v482
  %v490 = vadd.f32 %v475, %v482
  %v491 = vadd.f32 %v476, %v482
  %492 = vst.msk [vmem:[%s7] sm:$0xff] %vm227, %v484
  %493 = vst.msk [vmem:[%s7 + $0x8] sm:$0xff] %vm227, %v485
  %494 = vst.msk [vmem:[%s7 + $0x10] sm:$0xff] %vm227, %v486
  %495 = vst.msk [vmem:[%s7 + $0x18] sm:$0xff] %vm227, %v487
  %496 = vst.msk [vmem:[%s7 + $0x20] sm:$0xff] %vm227, %v488
  %497 = vst.msk [vmem:[%s7 + $0x28] sm:$0xff] %vm227, %v489
  %498 = vst.msk [vmem:[%s7 + $0x30] sm:$0xff] %vm227, %v490
  %499 = vst.msk [vmem:[%s7 + $0x38] sm:$0xff] %vm227, %v491
  // Predicated region
  $region30: #{_lambda_.15} parent=0 // pred_check
    _
  $region31: #{_lambda_.15} parent=0 // pred_check_branch
    %501 = sbr.rel (0) target = $region33
  $region32: #{_lambda_.15} parent=0 // pred_region
    _
  $region33: #{_lambda_.15} parent=0 // pred_fallthru
    _
  // Predicated region
  $region34: #{_lambda_.15} parent=0 // pred_check
    _
  $region35: #{_lambda_.15} parent=0 // pred_check_branch
    %503 = sbr.rel (0) target = $region37
  $region36: #{_lambda_.15} parent=0 // pred_region
    _
  $region37: #{_lambda_.15} parent=0 // pred_fallthru
    _

// kernel: _lambda_.14
$region0: #{_lambda_.14}
  #allocation0 [shape = 'u32[]', space=smem, size = 0x4, offset = 0x4, fixed_abs, tag = 'smem constant byte address 0x4 - core index']
  #allocation1 [shape = 'u32[144,128]{1,0:T(1,128)}', space=vmem, size = 0x12000, scoped, tag = 'internal scratch']
  #allocation2 [shape = 'f32[1,16]{1,0:T(1,128)}', space=vmem, size = 0x200, scoped, tag = 'scratch operand']
  %s0 = inlined_call_operand.vmem [shape: s32[1,128], index: 0, kind: input, shape index: {}]
  %s1 = inlined_call_operand.vmem [shape: s32[1,128], index: 1, kind: input, shape index: {}]
  %s2 = inlined_call_operand.vmem [shape: f32[128,3], index: 2, kind: input, shape index: {}]
  %s3 = inlined_call_operand.vmem [shape: bf16[64,32], index: 3, kind: input, shape index: {}]
  %s4 = inlined_call_operand.vmem [shape: f32[16,48], index: 4, kind: input, shape index: {}]
  %s5 = inlined_call_operand.vmem [shape: f32[64,48], index: 5, kind: output, shape index: {}]
  %s6 = sld [smem:[#allocation0]]
  $region34: #{_lambda_.14} parent=0
    _
  %s8 = ssub.s32 1, %s6
  %s9 = scalar_select 0, %s8, %s6
  // Predicated region
  $region2: #{_lambda_.14} parent=0 // pred_check
    _
  $region3: #{_lambda_.14} parent=0 // pred_check_branch
    %11 = sbr.rel (0) target = $region5
  $region4: #{_lambda_.14} parent=0 // pred_region
    _
  $region5: #{_lambda_.14} parent=0 // pred_fallthru
    _
  // Predicated region
  $region6: #{_lambda_.14} parent=0 // pred_check
    _
  $region7: #{_lambda_.14} parent=0 // pred_check_branch
    %13 = sbr.rel (0) target = $region9
  $region8: #{_lambda_.14} parent=0 // pred_region
    _
  $region9: #{_lambda_.14} parent=0 // pred_fallthru
    _
  // Predicated region
  $region10: #{_lambda_.14} parent=0 // pred_check
    _
  $region11: #{_lambda_.14} parent=0 // pred_check_branch
    %15 = sbr.rel (0) target = $region13
  $region12: #{_lambda_.14} parent=0 // pred_region
    _
  $region13: #{_lambda_.14} parent=0 // pred_fallthru
    _
  // Predicated region
  $region14: #{_lambda_.14} parent=0 // pred_check
    _
  $region15: #{_lambda_.14} parent=0 // pred_check_branch
    %17 = sbr.rel (0) target = $region17
  $region16: #{_lambda_.14} parent=0 // pred_region
    _
  $region17: #{_lambda_.14} parent=0 // pred_fallthru
    _
  // Predicated region
  $region18: #{_lambda_.14} parent=0 // pred_check
    _
  $region19: #{_lambda_.14} parent=0 // pred_check_branch
    %19 = sbr.rel (0) target = $region21
  $region20: #{_lambda_.14} parent=0 // pred_region
    _
  $region21: #{_lambda_.14} parent=0 // pred_fallthru
    _
  %p21 = scmp.eq.s32.totalorder 0, 0
  // Predicated region
  $region22: #{_lambda_.14} parent=0 // pred_check
    %p22 = pneg %p21
  $region23: #{_lambda_.14} parent=0 // pred_check_branch
    %24 = sbr.rel (%p22) target = $region25
  $region24: #{_lambda_.14} parent=0 // pred_region
    %vm25 = vcmask 392192
    %26 = vst.msk [vmem:[%s5] sm:$0xff] %vm25, 0.0
    %27 = vst.msk [vmem:[%s5 + $0x8] sm:$0xff] %vm25, 0.0
    %28 = vst.msk [vmem:[%s5 + $0x10] sm:$0xff] %vm25, 0.0
    %29 = vst.msk [vmem:[%s5 + $0x18] sm:$0xff] %vm25, 0.0
    %30 = vst.msk [vmem:[%s5 + $0x20] sm:$0xff] %vm25, 0.0
    %31 = vst.msk [vmem:[%s5 + $0x28] sm:$0xff] %vm25, 0.0
    %32 = vst.msk [vmem:[%s5 + $0x30] sm:$0xff] %vm25, 0.0
    %33 = vst.msk [vmem:[%s5 + $0x38] sm:$0xff] %vm25, 0.0
    %vm34 = vcmask 122880
    %35 = vst.msk [vmem:[#allocation2] sm:$0x1] %vm34, -1e+30
  $region25: #{_lambda_.14} parent=0 // pred_fallthru
    _
  %v36 = vlaneseq
  %v37 = vand.u32 %v36, 127
  %s38 = smul.u32 0, 128
  %v39 = vstv %s38
  %v40 = vadd.s32 %v39, %v37
  %vm41 = vcmp.lt.s32.totalorder %v40, 128
  %v42 = vlaneseq
  %v43 = vshrl.u32 %v42, 7
  %v44 = vadd.s32 %v43, 8
  %v45 = vadd.s32 %v43, 16
  %v46 = vadd.s32 %v43, 24
  %v47 = vadd.s32 %v43, 32
  %v48 = vadd.s32 %v43, 40
  %v49 = vadd.s32 %v43, 48
  %v50 = vadd.s32 %v43, 56
  %v51 = vld [vmem:[%s0] sm:$0x1]
  %v52 = vlaneseq
  %v53 = vshrl.u32 %v52, 7
  %v54 = vsub.s32 0, %v53
  %v55 = vrot.slane %v51, %v54
  %vm56 = vcmp.eq.s32.totalorder %v43, %v55
  %vm57 = vcmp.eq.s32.totalorder %v44, %v55
  %vm58 = vcmp.eq.s32.totalorder %v45, %v55
  %vm59 = vcmp.eq.s32.totalorder %v46, %v55
  %vm60 = vcmp.eq.s32.totalorder %v47, %v55
  %vm61 = vcmp.eq.s32.totalorder %v48, %v55
  %vm62 = vcmp.eq.s32.totalorder %v49, %v55
  %vm63 = vcmp.eq.s32.totalorder %v50, %v55
  %v64 = vsel %vm41, 1, 0
  %vm65 = vcmp.eq.s32.totalorder %v64, 1
  %vm66 = vmand %vm56, %vm65
  %vm67 = vmand %vm57, %vm65
  %vm68 = vmand %vm58, %vm65
  %vm69 = vmand %vm59, %vm65
  %vm70 = vmand %vm60, %vm65
  %vm71 = vmand %vm61, %vm65
  %vm72 = vmand %vm62, %vm65
  %vm73 = vmand %vm63, %vm65
  %v74 = vsel %vm66, 1.0, 0.0
  %v75 = vsel %vm67, 1.0, 0.0
  %v76 = vsel %vm68, 1.0, 0.0
  %v77 = vsel %vm69, 1.0, 0.0
  %v78 = vsel %vm70, 1.0, 0.0
  %v79 = vsel %vm71, 1.0, 0.0
  %v80 = vsel %vm72, 1.0, 0.0
  %v81 = vsel %vm73, 1.0, 0.0
  %v82 = vpack.c.bf16 %v75, %v74
  %v83 = vpack.c.bf16 %v77, %v76
  %v84 = vpack.c.bf16 %v79, %v78
  %v85 = vpack.c.bf16 %v81, %v80
  %v86 = vld [vmem:[%s1] sm:$0x1]
  %v87 = vlaneseq
  %v88 = vshrl.u32 %v87, 7
  %v89 = vsub.s32 0, %v88
  %v90 = vrot.slane %v86, %v89
  %vm91 = vcmp.eq.s32.totalorder %v43, %v90
  %vm92 = vcmp.eq.s32.totalorder %v44, %v90
  %vm93 = vcmp.eq.s32.totalorder %v45, %v90
  %vm94 = vcmp.eq.s32.totalorder %v46, %v90
  %vm95 = vcmp.eq.s32.totalorder %v47, %v90
  %vm96 = vcmp.eq.s32.totalorder %v48, %v90
  %vm97 = vcmp.eq.s32.totalorder %v49, %v90
  %vm98 = vcmp.eq.s32.totalorder %v50, %v90
  %vm99 = vmand %vm91, %vm65
  %vm100 = vmand %vm92, %vm65
  %vm101 = vmand %vm93, %vm65
  %vm102 = vmand %vm94, %vm65
  %vm103 = vmand %vm95, %vm65
  %vm104 = vmand %vm96, %vm65
  %vm105 = vmand %vm97, %vm65
  %vm106 = vmand %vm98, %vm65
  %v107 = vsel %vm99, 1.0, 0.0
  %v108 = vsel %vm100, 1.0, 0.0
  %v109 = vsel %vm101, 1.0, 0.0
  %v110 = vsel %vm102, 1.0, 0.0
  %v111 = vsel %vm103, 1.0, 0.0
  %v112 = vsel %vm104, 1.0, 0.0
  %v113 = vsel %vm105, 1.0, 0.0
  %v114 = vsel %vm106, 1.0, 0.0
  %v115 = vpack.c.bf16 %v108, %v107
  %v116 = vpack.c.bf16 %v110, %v109
  %v117 = vpack.c.bf16 %v112, %v111
  %v118 = vpack.c.bf16 %v114, %v113
  %v119 = vld [vmem:[%s3] sm:$0xf]
  %v120 = vld [vmem:[%s3 + $0x4] sm:$0xf]
  %v121 = vld [vmem:[%s3 + $0x8] sm:$0xf]
  %v122 = vld [vmem:[%s3 + $0xc] sm:$0xf]
  %v123 = vld [vmem:[%s3 + $0x10] sm:$0xf]
  %v124 = vld [vmem:[%s3 + $0x14] sm:$0xf]
  %v125 = vld [vmem:[%s3 + $0x18] sm:$0xf]
  %v126 = vld [vmem:[%s3 + $0x1c] sm:$0xf]
  %127 = vxpose.xlu0.c.b16.start [1/8] %v82, 128
  %128 = vxpose.xlu0.c.b16.cont [2/8] %v83, 128
  %129 = vxpose.xlu0.c.b16.cont [3/8] %v84, 128
  %130 = vxpose.xlu0.c.b16.cont [4/8] %v85, 128
  %131 = vxpose.xlu0.c.b16.cont [5/8] 0, 128
  %132 = vxpose.xlu0.c.b16.cont [6/8] 0, 128
  %133 = vxpose.xlu0.c.b16.cont [7/8] 0, 128
  %134 = vxpose.xlu0.c.b16.end [8/8] 0, 128
  %v135 = vpop.trf.xlu0
  %v136 = vpop.trf.xlu0
  %v137 = vpop.trf.xlu0
  %v138 = vpop.trf.xlu0
  %v139 = vpop.trf.xlu0
  %v140 = vpop.trf.xlu0
  %v141 = vpop.trf.xlu0
  %v142 = vpop.trf.xlu0
  %v151 = vunpack.c.l.b16 %v119
  %v152 = vunpack.c.l.b16 %v120
  %v153 = vunpack.c.l.b16 %v121
  %v154 = vunpack.c.l.b16 %v122
  %v155 = vunpack.c.l.b16 %v123
  %v156 = vunpack.c.l.b16 %v124
  %v157 = vunpack.c.l.b16 %v125
  %v158 = vunpack.c.l.b16 %v126
  %v159 = vpack.c.b16 %v152, %v151
  %v160 = vpack.c.b16 %v154, %v153
  %v161 = vpack.c.b16 %v156, %v155
  %v162 = vpack.c.b16 %v158, %v157
  %vm167 = vcmask 523264
  %v169 = vsel %vm167, %v135, 0
  %v172 = vsel %vm167, %v136, 0
  %v175 = vsel %vm167, %v137, 0
  %v178 = vsel %vm167, %v138, 0
  %v181 = vsel %vm167, %v139, 0
  %v184 = vsel %vm167, %v140, 0
  %v187 = vsel %vm167, %v141, 0
  %v190 = vsel %vm167, %v142, 0
  %192 = vmatprep.subr.bf16.mxu0 0
  %193 = vmatpush1.bf16.msra.mxu0 0
  %194 = vmatprep.subr.bf16.mxu0 0
  %195 = vmatpush1.bf16.msra.mxu0 0
  %196 = vmatprep.subr.bf16.mxu0 0
  %197 = vmatpush1.bf16.msra.mxu0 0
  %198 = vmatprep.subr.bf16.mxu0 0
  %199 = vmatpush1.bf16.msra.mxu0 0
  %200 = vmatprep.subr.bf16.mxu0 0
  %201 = vmatpush1.bf16.msra.mxu0 %v162
  %202 = vmatprep.subr.bf16.mxu0 0
  %203 = vmatpush1.bf16.msra.mxu0 %v161
  %204 = vmatprep.subr.bf16.mxu0 0
  %205 = vmatpush1.bf16.msra.mxu0 %v160
  %206 = vmatprep.subr.bf16.mxu0 0
  %207 = vmatpush1.bf16.msra.mxu0 %v159
  %208 = vmatprep.subr.bf16.mxu0 0
  %209 = vmatpush2.bf16.msra.mxu0 0
  %210 = vmatprep.subr.bf16.mxu0 0
  %211 = vmatpush2.bf16.msra.mxu0 0
  %212 = vmatprep.subr.bf16.mxu0 0
  %213 = vmatpush2.bf16.msra.mxu0 0
  %214 = vmatprep.subr.bf16.mxu0 0
  %215 = vmatpush2.bf16.msra.mxu0 0
  %216 = vmatprep.subr.bf16.mxu0 0
  %217 = vmatpush2.bf16.msra.mxu0 0
  %218 = vmatprep.subr.bf16.mxu0 0
  %219 = vmatpush2.bf16.msra.mxu0 0
  %220 = vmatprep.subr.bf16.mxu0 0
  %221 = vmatpush2.bf16.msra.mxu0 0
  %222 = vmatprep.subr.bf16.mxu0 0
  %223 = vmatpush2.bf16.msra.mxu0 0
  %224 = vmatprep.mubr.bf16.mxu0 0
  %225 = vmatmul.mubr.bf16.gmra.mxu0 %v169
  %v226 = vpop.f32.mrf.mxu0
  %v227 = vadd.f32 0.0, %v226
  %v228 = vpop.f32.mrf.mxu0
  %v229 = vpop.f32.mrf.mxu0
  %v230 = vadd.f32 0.0, %v229
  %v231 = vpop.f32.mrf.mxu0
  %232 = vmatprep.mubr.bf16.mxu0 0
  %233 = vmatmul.mubr.bf16.gmra.mxu0 %v172
  %v234 = vpop.f32.mrf.mxu0
  %v235 = vadd.f32 0.0, %v234
  %v236 = vpop.f32.mrf.mxu0
  %v237 = vpop.f32.mrf.mxu0
  %v238 = vadd.f32 0.0, %v237
  %v239 = vpop.f32.mrf.mxu0
  %240 = vmatprep.mubr.bf16.mxu0 0
  %241 = vmatmul.mubr.bf16.gmra.mxu0 %v175
  %v242 = vpop.f32.mrf.mxu0
  %v243 = vadd.f32 0.0, %v242
  %v244 = vpop.f32.mrf.mxu0
  %v245 = vpop.f32.mrf.mxu0
  %v246 = vadd.f32 0.0, %v245
  %v247 = vpop.f32.mrf.mxu0
  %248 = vmatprep.mubr.bf16.mxu0 0
  %249 = vmatmul.mubr.bf16.gmra.mxu0 %v178
  %v250 = vpop.f32.mrf.mxu0
  %v251 = vadd.f32 0.0, %v250
  %v252 = vpop.f32.mrf.mxu0
  %v253 = vpop.f32.mrf.mxu0
  %v254 = vadd.f32 0.0, %v253
  %v255 = vpop.f32.mrf.mxu0
  %256 = vmatprep.mubr.bf16.mxu0 0
  %257 = vmatmul.mubr.bf16.gmra.mxu0 %v181
  %v258 = vpop.f32.mrf.mxu0
  %v259 = vadd.f32 0.0, %v258
  %v260 = vpop.f32.mrf.mxu0
  %v261 = vpop.f32.mrf.mxu0
  %v262 = vadd.f32 0.0, %v261
  %v263 = vpop.f32.mrf.mxu0
  %264 = vmatprep.mubr.bf16.mxu0 0
  %265 = vmatmul.mubr.bf16.gmra.mxu0 %v184
  %v266 = vpop.f32.mrf.mxu0
  %v267 = vadd.f32 0.0, %v266
  %v268 = vpop.f32.mrf.mxu0
  %v269 = vpop.f32.mrf.mxu0
  %v270 = vadd.f32 0.0, %v269
  %v271 = vpop.f32.mrf.mxu0
  %272 = vmatprep.mubr.bf16.mxu0 0
  %273 = vmatmul.mubr.bf16.gmra.mxu0 %v187
  %v274 = vpop.f32.mrf.mxu0
  %v275 = vadd.f32 0.0, %v274
  %v276 = vpop.f32.mrf.mxu0
  %v277 = vpop.f32.mrf.mxu0
  %v278 = vadd.f32 0.0, %v277
  %v279 = vpop.f32.mrf.mxu0
  %280 = vmatprep.mubr.bf16.mxu0 0
  %281 = vmatmul.mubr.bf16.gmra.mxu0 %v190
  %v282 = vpop.f32.mrf.mxu0
  %v283 = vadd.f32 0.0, %v282
  %v284 = vpop.f32.mrf.mxu0
  %v285 = vpop.f32.mrf.mxu0
  %v286 = vadd.f32 0.0, %v285
  %v287 = vpop.f32.mrf.mxu0
  %288 = vdwg.mxu0
  %v289 = vld [vmem:[%s4] sm:$0xff]
  %v290 = vld [vmem:[%s4 + $0x8] sm:$0xff]
  %vm291 = vcmask 130048
  %v293 = vsel %vm291, %v227, 0
  %v296 = vsel %vm291, %v230, 0
  %v299 = vsel %vm291, %v235, 0
  %v302 = vsel %vm291, %v238, 0
  %v305 = vsel %vm291, %v243, 0
  %v308 = vsel %vm291, %v246, 0
  %v311 = vsel %vm291, %v251, 0
  %v314 = vsel %vm291, %v254, 0
  %v317 = vsel %vm291, %v259, 0
  %v320 = vsel %vm291, %v262, 0
  %v323 = vsel %vm291, %v267, 0
  %v326 = vsel %vm291, %v270, 0
  %v329 = vsel %vm291, %v275, 0
  %v332 = vsel %vm291, %v278, 0
  %v335 = vsel %vm291, %v283, 0
  %v338 = vsel %vm291, %v286, 0
  %340 = vmatprep.subr.mxu0 0.0
  %341 = vmatpush1.msra.mxu0 0.0
  %342 = vmatprep.subr.mxu0 0.0
  %343 = vmatpush1.msra.mxu0 0.0
  %344 = vmatprep.subr.mxu0 0.0
  %345 = vmatpush1.msra.mxu0 0.0
  %346 = vmatprep.subr.mxu0 0.0
  %347 = vmatpush1.msra.mxu0 0.0
  %348 = vmatprep.subr.mxu0 0.0
  %349 = vmatpush1.msra.mxu0 0.0
  %350 = vmatprep.subr.mxu0 0.0
  %351 = vmatpush1.msra.mxu0 0.0
  %352 = vmatprep.subr.mxu0 0.0
  %353 = vmatpush1.msra.mxu0 0.0
  %354 = vmatprep.subr.mxu0 0.0
  %355 = vmatpush1.msra.mxu0 0.0
  %356 = vmatprep.subr.mxu0 0.0
  %357 = vmatpush1.msra.mxu0 0.0
  %358 = vmatprep.subr.mxu0 0.0
  %359 = vmatpush1.msra.mxu0 0.0
  %360 = vmatprep.subr.mxu0 0.0
  %361 = vmatpush1.msra.mxu0 0.0
  %362 = vmatprep.subr.mxu0 0.0
  %363 = vmatpush1.msra.mxu0 0.0
  %364 = vmatprep.subr.mxu0 0.0
  %365 = vmatpush1.msra.mxu0 0.0
  %366 = vmatprep.subr.mxu0 0.0
  %367 = vmatpush1.msra.mxu0 0.0
  %368 = vmatprep.subr.mxu0 0.0
  %369 = vmatpush1.msra.mxu0 %v290
  %370 = vmatprep.subr.mxu0 0.0
  %371 = vmatpush1.msra.mxu0 %v289
  %372 = vmatprep.subr.mxu0 0.0
  %373 = vmatpush2.msra.mxu0 0.0
  %374 = vmatprep.subr.mxu0 0.0
  %375 = vmatpush2.msra.mxu0 0.0
  %376 = vmatprep.subr.mxu0 0.0
  %377 = vmatpush2.msra.mxu0 0.0
  %378 = vmatprep.subr.mxu0 0.0
  %379 = vmatpush2.msra.mxu0 0.0
  %380 = vmatprep.subr.mxu0 0.0
  %381 = vmatpush2.msra.mxu0 0.0
  %382 = vmatprep.subr.mxu0 0.0
  %383 = vmatpush2.msra.mxu0 0.0
  %384 = vmatprep.subr.mxu0 0.0
  %385 = vmatpush2.msra.mxu0 0.0
  %386 = vmatprep.subr.mxu0 0.0
  %387 = vmatpush2.msra.mxu0 0.0
  %388 = vmatprep.subr.mxu0 0.0
  %389 = vmatpush2.msra.mxu0 0.0
  %390 = vmatprep.subr.mxu0 0.0
  %391 = vmatpush2.msra.mxu0 0.0
  %392 = vmatprep.subr.mxu0 0.0
  %393 = vmatpush2.msra.mxu0 0.0
  %394 = vmatprep.subr.mxu0 0.0
  %395 = vmatpush2.msra.mxu0 0.0
  %396 = vmatprep.subr.mxu0 0.0
  %397 = vmatpush2.msra.mxu0 0.0
  %398 = vmatprep.subr.mxu0 0.0
  %399 = vmatpush2.msra.mxu0 0.0
  %400 = vmatprep.subr.mxu0 0.0
  %401 = vmatpush2.msra.mxu0 0.0
  %402 = vmatprep.subr.mxu0 0.0
  %403 = vmatpush2.msra.mxu0 0.0
  %404 = vmatprep.mubr.f32.mxu0 0.0
  %405 = vmatmul.mubr.f32.gmra.mxu0 %v293
  %v406 = vpop.f32.mrf.mxu0
  %v407 = vadd.f32 0.0, %v406
  %v408 = vpop.f32.mrf.mxu0
  %409 = vmatprep.mubr.f32.mxu0 0.0
  %410 = vmatmul.mubr.f32.gmra.mxu0 %v296
  %v411 = vpop.f32.mrf.mxu0
  %v412 = vadd.f32 0.0, %v411
  %v413 = vpop.f32.mrf.mxu0
  %414 = vmatprep.mubr.f32.mxu0 0.0
  %415 = vmatmul.mubr.f32.gmra.mxu0 %v299
  %v416 = vpop.f32.mrf.mxu0
  %v417 = vadd.f32 0.0, %v416
  %v418 = vpop.f32.mrf.mxu0
  %419 = vmatprep.mubr.f32.mxu0 0.0
  %420 = vmatmul.mubr.f32.gmra.mxu0 %v302
  %v421 = vpop.f32.mrf.mxu0
  %v422 = vadd.f32 0.0, %v421
  %v423 = vpop.f32.mrf.mxu0
  %424 = vmatprep.mubr.f32.mxu0 0.0
  %425 = vmatmul.mubr.f32.gmra.mxu0 %v305
  %v426 = vpop.f32.mrf.mxu0
  %v427 = vadd.f32 0.0, %v426
  %v428 = vpop.f32.mrf.mxu0
  %429 = vmatprep.mubr.f32.mxu0 0.0
  %430 = vmatmul.mubr.f32.gmra.mxu0 %v308
  %v431 = vpop.f32.mrf.mxu0
  %v432 = vadd.f32 0.0, %v431
  %v433 = vpop.f32.mrf.mxu0
  %434 = vmatprep.mubr.f32.mxu0 0.0
  %435 = vmatmul.mubr.f32.gmra.mxu0 %v311
  %v436 = vpop.f32.mrf.mxu0
  %v437 = vadd.f32 0.0, %v436
  %v438 = vpop.f32.mrf.mxu0
  %439 = vmatprep.mubr.f32.mxu0 0.0
  %440 = vmatmul.mubr.f32.gmra.mxu0 %v314
  %v441 = vpop.f32.mrf.mxu0
  %v442 = vadd.f32 0.0, %v441
  %v443 = vpop.f32.mrf.mxu0
  %444 = vmatprep.mubr.f32.mxu0 0.0
  %445 = vmatmul.mubr.f32.gmra.mxu0 %v317
  %v446 = vpop.f32.mrf.mxu0
  %v447 = vadd.f32 0.0, %v446
  %v448 = vpop.f32.mrf.mxu0
  %449 = vmatprep.mubr.f32.mxu0 0.0
  %450 = vmatmul.mubr.f32.gmra.mxu0 %v320
  %v451 = vpop.f32.mrf.mxu0
  %v452 = vadd.f32 0.0, %v451
  %v453 = vpop.f32.mrf.mxu0
  %454 = vmatprep.mubr.f32.mxu0 0.0
  %455 = vmatmul.mubr.f32.gmra.mxu0 %v323
  %v456 = vpop.f32.mrf.mxu0
  %v457 = vadd.f32 0.0, %v456
  %v458 = vpop.f32.mrf.mxu0
  %459 = vmatprep.mubr.f32.mxu0 0.0
  %460 = vmatmul.mubr.f32.gmra.mxu0 %v326
  %v461 = vpop.f32.mrf.mxu0
  %v462 = vadd.f32 0.0, %v461
  %v463 = vpop.f32.mrf.mxu0
  %464 = vmatprep.mubr.f32.mxu0 0.0
  %465 = vmatmul.mubr.f32.gmra.mxu0 %v329
  %v466 = vpop.f32.mrf.mxu0
  %v467 = vadd.f32 0.0, %v466
  %v468 = vpop.f32.mrf.mxu0
  %469 = vmatprep.mubr.f32.mxu0 0.0
  %470 = vmatmul.mubr.f32.gmra.mxu0 %v332
  %v471 = vpop.f32.mrf.mxu0
  %v472 = vadd.f32 0.0, %v471
  %v473 = vpop.f32.mrf.mxu0
  %474 = vmatprep.mubr.f32.mxu0 0.0
  %475 = vmatmul.mubr.f32.gmra.mxu0 %v335
  %v476 = vpop.f32.mrf.mxu0
  %v477 = vadd.f32 0.0, %v476
  %v478 = vpop.f32.mrf.mxu0
  %479 = vmatprep.mubr.f32.mxu0 0.0
  %480 = vmatmul.mubr.f32.gmra.mxu0 %v338
  %v481 = vpop.f32.mrf.mxu0
  %v482 = vadd.f32 0.0, %v481
  %v483 = vpop.f32.mrf.mxu0
  %484 = vdwg.mxu0
  %v485 = vld [vmem:[%s2] sm:$0xff]
  %v486 = vld [vmem:[%s2 + $0x8] sm:$0xff]
  %v487 = vld [vmem:[%s2 + $0x10] sm:$0xff]
  %v488 = vld [vmem:[%s2 + $0x18] sm:$0xff]
  %v489 = vld [vmem:[%s2 + $0x20] sm:$0xff]
  %v490 = vld [vmem:[%s2 + $0x28] sm:$0xff]
  %v491 = vld [vmem:[%s2 + $0x30] sm:$0xff]
  %v492 = vld [vmem:[%s2 + $0x38] sm:$0xff]
  %v493 = vld [vmem:[%s2 + $0x40] sm:$0xff]
  %v494 = vld [vmem:[%s2 + $0x48] sm:$0xff]
  %v495 = vld [vmem:[%s2 + $0x50] sm:$0xff]
  %v496 = vld [vmem:[%s2 + $0x58] sm:$0xff]
  %v497 = vld [vmem:[%s2 + $0x60] sm:$0xff]
  %v498 = vld [vmem:[%s2 + $0x68] sm:$0xff]
  %v499 = vld [vmem:[%s2 + $0x70] sm:$0xff]
  %v500 = vld [vmem:[%s2 + $0x78] sm:$0xff]
  %502 = vset.pattern.permute.xlu0 0
  %503 = vperm.xlu0 %502, %v485
  %v504 = vpop.permute.xlu0 %503
  %507 = vset.pattern.permute.xlu0 0
  %508 = vperm.xlu0 %507, %v486
  %v509 = vpop.permute.xlu0 %508
  %512 = vset.pattern.permute.xlu0 0
  %513 = vperm.xlu0 %512, %v487
  %v514 = vpop.permute.xlu0 %513
  %517 = vset.pattern.permute.xlu0 0
  %518 = vperm.xlu0 %517, %v488
  %v519 = vpop.permute.xlu0 %518
  %522 = vset.pattern.permute.xlu0 0
  %523 = vperm.xlu0 %522, %v489
  %v524 = vpop.permute.xlu0 %523
  %527 = vset.pattern.permute.xlu0 0
  %528 = vperm.xlu0 %527, %v490
  %v529 = vpop.permute.xlu0 %528
  %532 = vset.pattern.permute.xlu0 0
  %533 = vperm.xlu0 %532, %v491
  %v534 = vpop.permute.xlu0 %533
  %537 = vset.pattern.permute.xlu0 0
  %538 = vperm.xlu0 %537, %v492
  %v539 = vpop.permute.xlu0 %538
  %542 = vset.pattern.permute.xlu0 0
  %543 = vperm.xlu0 %542, %v493
  %v544 = vpop.permute.xlu0 %543
  %547 = vset.pattern.permute.xlu0 0
  %548 = vperm.xlu0 %547, %v494
  %v549 = vpop.permute.xlu0 %548
  %552 = vset.pattern.permute.xlu0 0
  %553 = vperm.xlu0 %552, %v495
  %v554 = vpop.permute.xlu0 %553
  %557 = vset.pattern.permute.xlu0 0
  %558 = vperm.xlu0 %557, %v496
  %v559 = vpop.permute.xlu0 %558
  %562 = vset.pattern.permute.xlu0 0
  %563 = vperm.xlu0 %562, %v497
  %v564 = vpop.permute.xlu0 %563
  %567 = vset.pattern.permute.xlu0 0
  %568 = vperm.xlu0 %567, %v498
  %v569 = vpop.permute.xlu0 %568
  %572 = vset.pattern.permute.xlu0 0
  %573 = vperm.xlu0 %572, %v499
  %v574 = vpop.permute.xlu0 %573
  %577 = vset.pattern.permute.xlu0 0
  %578 = vperm.xlu0 %577, %v500
  %v579 = vpop.permute.xlu0 %578
  %v581 = vmul.f32 %v504, %v407
  %v582 = vmul.f32 %v509, %v412
  %v583 = vmul.f32 %v514, %v417
  %v584 = vmul.f32 %v519, %v422
  %v585 = vmul.f32 %v524, %v427
  %v586 = vmul.f32 %v529, %v432
  %v587 = vmul.f32 %v534, %v437
  %v588 = vmul.f32 %v539, %v442
  %v589 = vmul.f32 %v544, %v447
  %v590 = vmul.f32 %v549, %v452
  %v591 = vmul.f32 %v554, %v457
  %v592 = vmul.f32 %v559, %v462
  %v593 = vmul.f32 %v564, %v467
  %v594 = vmul.f32 %v569, %v472
  %v595 = vmul.f32 %v574, %v477
  %v596 = vmul.f32 %v579, %v482
  %597 = vset.pattern.permute.xlu0 1
  %598 = vperm.xlu0 %597, %v485
  %v599 = vpop.permute.xlu0 %598
  %601 = vset.pattern.permute.xlu0 1
  %602 = vperm.xlu0 %601, %v486
  %v603 = vpop.permute.xlu0 %602
  %605 = vset.pattern.permute.xlu0 1
  %606 = vperm.xlu0 %605, %v487
  %v607 = vpop.permute.xlu0 %606
  %609 = vset.pattern.permute.xlu0 1
  %610 = vperm.xlu0 %609, %v488
  %v611 = vpop.permute.xlu0 %610
  %613 = vset.pattern.permute.xlu0 1
  %614 = vperm.xlu0 %613, %v489
  %v615 = vpop.permute.xlu0 %614
  %617 = vset.pattern.permute.xlu0 1
  %618 = vperm.xlu0 %617, %v490
  %v619 = vpop.permute.xlu0 %618
  %621 = vset.pattern.permute.xlu0 1
  %622 = vperm.xlu0 %621, %v491
  %v623 = vpop.permute.xlu0 %622
  %625 = vset.pattern.permute.xlu0 1
  %626 = vperm.xlu0 %625, %v492
  %v627 = vpop.permute.xlu0 %626
  %629 = vset.pattern.permute.xlu0 1
  %630 = vperm.xlu0 %629, %v493
  %v631 = vpop.permute.xlu0 %630
  %633 = vset.pattern.permute.xlu0 1
  %634 = vperm.xlu0 %633, %v494
  %v635 = vpop.permute.xlu0 %634
  %637 = vset.pattern.permute.xlu0 1
  %638 = vperm.xlu0 %637, %v495
  %v639 = vpop.permute.xlu0 %638
  %641 = vset.pattern.permute.xlu0 1
  %642 = vperm.xlu0 %641, %v496
  %v643 = vpop.permute.xlu0 %642
  %645 = vset.pattern.permute.xlu0 1
  %646 = vperm.xlu0 %645, %v497
  %v647 = vpop.permute.xlu0 %646
  %649 = vset.pattern.permute.xlu0 1
  %650 = vperm.xlu0 %649, %v498
  %v651 = vpop.permute.xlu0 %650
  %653 = vset.pattern.permute.xlu0 1
  %654 = vperm.xlu0 %653, %v499
  %v655 = vpop.permute.xlu0 %654
  %657 = vset.pattern.permute.xlu0 1
  %658 = vperm.xlu0 %657, %v500
  %v659 = vpop.permute.xlu0 %658
  %v661 = vmul.f32 %v599, %v407
  %v662 = vmul.f32 %v603, %v412
  %v663 = vmul.f32 %v607, %v417
  %v664 = vmul.f32 %v611, %v422
  %v665 = vmul.f32 %v615, %v427
  %v666 = vmul.f32 %v619, %v432
  %v667 = vmul.f32 %v623, %v437
  %v668 = vmul.f32 %v627, %v442
  %v669 = vmul.f32 %v631, %v447
  %v670 = vmul.f32 %v635, %v452
  %v671 = vmul.f32 %v639, %v457
  %v672 = vmul.f32 %v643, %v462
  %v673 = vmul.f32 %v647, %v467
  %v674 = vmul.f32 %v651, %v472
  %v675 = vmul.f32 %v655, %v477
  %v676 = vmul.f32 %v659, %v482
  %693 = vrot.lane.b32.xlu0 %v661, 112
  %v694 = vpop.permute.xlu0 %693
  %695 = vrot.lane.b32.xlu0 %v662, 112
  %v696 = vpop.permute.xlu0 %695
  %697 = vrot.lane.b32.xlu0 %v663, 112
  %v698 = vpop.permute.xlu0 %697
  %699 = vrot.lane.b32.xlu0 %v664, 112
  %v700 = vpop.permute.xlu0 %699
  %701 = vrot.lane.b32.xlu0 %v665, 112
  %v702 = vpop.permute.xlu0 %701
  %703 = vrot.lane.b32.xlu0 %v666, 112
  %v704 = vpop.permute.xlu0 %703
  %705 = vrot.lane.b32.xlu0 %v667, 112
  %v706 = vpop.permute.xlu0 %705
  %707 = vrot.lane.b32.xlu0 %v668, 112
  %v708 = vpop.permute.xlu0 %707
  %709 = vrot.lane.b32.xlu0 %v669, 112
  %v710 = vpop.permute.xlu0 %709
  %711 = vrot.lane.b32.xlu0 %v670, 112
  %v712 = vpop.permute.xlu0 %711
  %713 = vrot.lane.b32.xlu0 %v671, 112
  %v714 = vpop.permute.xlu0 %713
  %715 = vrot.lane.b32.xlu0 %v672, 112
  %v716 = vpop.permute.xlu0 %715
  %717 = vrot.lane.b32.xlu0 %v673, 112
  %v718 = vpop.permute.xlu0 %717
  %719 = vrot.lane.b32.xlu0 %v674, 112
  %v720 = vpop.permute.xlu0 %719
  %721 = vrot.lane.b32.xlu0 %v675, 112
  %v722 = vpop.permute.xlu0 %721
  %723 = vrot.lane.b32.xlu0 %v676, 112
  %v724 = vpop.permute.xlu0 %723
  %v741 = vadd.f32 %v581, %v694
  %v742 = vadd.f32 %v582, %v696
  %v743 = vadd.f32 %v583, %v698
  %v744 = vadd.f32 %v584, %v700
  %v745 = vadd.f32 %v585, %v702
  %v746 = vadd.f32 %v586, %v704
  %v747 = vadd.f32 %v587, %v706
  %v748 = vadd.f32 %v588, %v708
  %v749 = vadd.f32 %v589, %v710
  %v750 = vadd.f32 %v590, %v712
  %v751 = vadd.f32 %v591, %v714
  %v752 = vadd.f32 %v592, %v716
  %v753 = vadd.f32 %v593, %v718
  %v754 = vadd.f32 %v594, %v720
  %v755 = vadd.f32 %v595, %v722
  %v756 = vadd.f32 %v596, %v724
  %757 = vset.pattern.permute.xlu0 2
  %758 = vperm.xlu0 %757, %v485
  %v759 = vpop.permute.xlu0 %758
  %761 = vset.pattern.permute.xlu0 2
  %762 = vperm.xlu0 %761, %v486
  %v763 = vpop.permute.xlu0 %762
  %765 = vset.pattern.permute.xlu0 2
  %766 = vperm.xlu0 %765, %v487
  %v767 = vpop.permute.xlu0 %766
  %769 = vset.pattern.permute.xlu0 2
  %770 = vperm.xlu0 %769, %v488
  %v771 = vpop.permute.xlu0 %770
  %773 = vset.pattern.permute.xlu0 2
  %774 = vperm.xlu0 %773, %v489
  %v775 = vpop.permute.xlu0 %774
  %777 = vset.pattern.permute.xlu0 2
  %778 = vperm.xlu0 %777, %v490
  %v779 = vpop.permute.xlu0 %778
  %781 = vset.pattern.permute.xlu0 2
  %782 = vperm.xlu0 %781, %v491
  %v783 = vpop.permute.xlu0 %782
  %785 = vset.pattern.permute.xlu0 2
  %786 = vperm.xlu0 %785, %v492
  %v787 = vpop.permute.xlu0 %786
  %789 = vset.pattern.permute.xlu0 2
  %790 = vperm.xlu0 %789, %v493
  %v791 = vpop.permute.xlu0 %790
  %793 = vset.pattern.permute.xlu0 2
  %794 = vperm.xlu0 %793, %v494
  %v795 = vpop.permute.xlu0 %794
  %797 = vset.pattern.permute.xlu0 2
  %798 = vperm.xlu0 %797, %v495
  %v799 = vpop.permute.xlu0 %798
  %801 = vset.pattern.permute.xlu0 2
  %802 = vperm.xlu0 %801, %v496
  %v803 = vpop.permute.xlu0 %802
  %805 = vset.pattern.permute.xlu0 2
  %806 = vperm.xlu0 %805, %v497
  %v807 = vpop.permute.xlu0 %806
  %809 = vset.pattern.permute.xlu0 2
  %810 = vperm.xlu0 %809, %v498
  %v811 = vpop.permute.xlu0 %810
  %813 = vset.pattern.permute.xlu0 2
  %814 = vperm.xlu0 %813, %v499
  %v815 = vpop.permute.xlu0 %814
  %817 = vset.pattern.permute.xlu0 2
  %818 = vperm.xlu0 %817, %v500
  %v819 = vpop.permute.xlu0 %818
  %v821 = vmul.f32 %v759, %v407
  %v822 = vmul.f32 %v763, %v412
  %v823 = vmul.f32 %v767, %v417
  %v824 = vmul.f32 %v771, %v422
  %v825 = vmul.f32 %v775, %v427
  %v826 = vmul.f32 %v779, %v432
  %v827 = vmul.f32 %v783, %v437
  %v828 = vmul.f32 %v787, %v442
  %v829 = vmul.f32 %v791, %v447
  %v830 = vmul.f32 %v795, %v452
  %v831 = vmul.f32 %v799, %v457
  %v832 = vmul.f32 %v803, %v462
  %v833 = vmul.f32 %v807, %v467
  %v834 = vmul.f32 %v811, %v472
  %v835 = vmul.f32 %v815, %v477
  %v836 = vmul.f32 %v819, %v482
  %853 = vrot.lane.b32.xlu0 %v821, 96
  %v854 = vpop.permute.xlu0 %853
  %855 = vrot.lane.b32.xlu0 %v822, 96
  %v856 = vpop.permute.xlu0 %855
  %857 = vrot.lane.b32.xlu0 %v823, 96
  %v858 = vpop.permute.xlu0 %857
  %859 = vrot.lane.b32.xlu0 %v824, 96
  %v860 = vpop.permute.xlu0 %859
  %861 = vrot.lane.b32.xlu0 %v825, 96
  %v862 = vpop.permute.xlu0 %861
  %863 = vrot.lane.b32.xlu0 %v826, 96
  %v864 = vpop.permute.xlu0 %863
  %865 = vrot.lane.b32.xlu0 %v827, 96
  %v866 = vpop.permute.xlu0 %865
  %867 = vrot.lane.b32.xlu0 %v828, 96
  %v868 = vpop.permute.xlu0 %867
  %869 = vrot.lane.b32.xlu0 %v829, 96
  %v870 = vpop.permute.xlu0 %869
  %871 = vrot.lane.b32.xlu0 %v830, 96
  %v872 = vpop.permute.xlu0 %871
  %873 = vrot.lane.b32.xlu0 %v831, 96
  %v874 = vpop.permute.xlu0 %873
  %875 = vrot.lane.b32.xlu0 %v832, 96
  %v876 = vpop.permute.xlu0 %875
  %877 = vrot.lane.b32.xlu0 %v833, 96
  %v878 = vpop.permute.xlu0 %877
  %879 = vrot.lane.b32.xlu0 %v834, 96
  %v880 = vpop.permute.xlu0 %879
  %881 = vrot.lane.b32.xlu0 %v835, 96
  %v882 = vpop.permute.xlu0 %881
  %883 = vrot.lane.b32.xlu0 %v836, 96
  %v884 = vpop.permute.xlu0 %883
  %v901 = vadd.f32 %v741, %v854
  %v902 = vadd.f32 %v742, %v856
  %v903 = vadd.f32 %v743, %v858
  %v904 = vadd.f32 %v744, %v860
  %v905 = vadd.f32 %v745, %v862
  %v906 = vadd.f32 %v746, %v864
  %v907 = vadd.f32 %v747, %v866
  %v908 = vadd.f32 %v748, %v868
  %v909 = vadd.f32 %v749, %v870
  %v910 = vadd.f32 %v750, %v872
  %v911 = vadd.f32 %v751, %v874
  %v912 = vadd.f32 %v752, %v876
  %v913 = vadd.f32 %v753, %v878
  %v914 = vadd.f32 %v754, %v880
  %v915 = vadd.f32 %v755, %v882
  %v916 = vadd.f32 %v756, %v884
  %v917 = vld [vmem:[#allocation2] sm:$0x1]
  %v918 = vsel %vm291, %v901, -inf
  %v919 = vsel %vm291, %v902, -inf
  %v920 = vsel %vm291, %v903, -inf
  %v921 = vsel %vm291, %v904, -inf
  %v922 = vsel %vm291, %v905, -inf
  %v923 = vmax.f32 %v918, %v922
  %v924 = vsel %vm291, %v906, -inf
  %v925 = vmax.f32 %v919, %v924
  %v926 = vsel %vm291, %v907, -inf
  %v927 = vmax.f32 %v920, %v926
  %v928 = vsel %vm291, %v908, -inf
  %v929 = vmax.f32 %v921, %v928
  %v930 = vsel %vm291, %v909, -inf
  %v931 = vmax.f32 %v923, %v930
  %v932 = vsel %vm291, %v910, -inf
  %v933 = vmax.f32 %v925, %v932
  %v934 = vsel %vm291, %v911, -inf
  %v935 = vmax.f32 %v927, %v934
  %v936 = vsel %vm291, %v912, -inf
  %v937 = vmax.f32 %v929, %v936
  %v938 = vsel %vm291, %v913, -inf
  %v939 = vmax.f32 %v931, %v938
  %v940 = vsel %vm291, %v914, -inf
  %v941 = vmax.f32 %v933, %v940
  %v942 = vsel %vm291, %v915, -inf
  %v943 = vmax.f32 %v935, %v942
  %v944 = vsel %vm291, %v916, -inf
  %v945 = vmax.f32 %v937, %v944
  %v946 = vmax.f32 %v939, %v941
  %v947 = vmax.f32 %v943, %v945
  %v948 = vmax.f32 %v946, %v947
  %v949 = vrot.slane %v948, 4
  %v950 = vmax.f32 %v948, %v949
  %v951 = vrot.slane %v950, 2
  %v952 = vmax.f32 %v950, %v951
  %v953 = vrot.slane %v952, 1
  %v954 = vmax.f32 %v952, %v953
  %v955 = vmax.f32 %v917, %v954
  %v956 = vsub.f32 %v917, %v955
  %v957 = vmul.f32 %v956, 1.442695
  %v958 = vpow.pop %v957
  %v960 = vlaneseq
  %v961 = vshrl.u32 %v960, 7
  %v962 = vsub.s32 0, %v961
  %v963 = vrot.slane %v955, %v962
  %v965 = vsub.f32 %v901, %v963
  %v966 = vsub.f32 %v902, %v963
  %v967 = vsub.f32 %v903, %v963
  %v968 = vsub.f32 %v904, %v963
  %v969 = vsub.f32 %v905, %v963
  %v970 = vsub.f32 %v906, %v963
  %v971 = vsub.f32 %v907, %v963
  %v972 = vsub.f32 %v908, %v963
  %v973 = vsub.f32 %v909, %v963
  %v974 = vsub.f32 %v910, %v963
  %v975 = vsub.f32 %v911, %v963
  %v976 = vsub.f32 %v912, %v963
  %v977 = vsub.f32 %v913, %v963
  %v978 = vsub.f32 %v914, %v963
  %v979 = vsub.f32 %v915, %v963
  %v980 = vsub.f32 %v916, %v963
  %v981 = vmul.f32 %v965, 1.442695
  %v982 = vpow.pop %v981
  %v983 = vmul.f32 %v966, 1.442695
  %v984 = vpow.pop %v983
  %v985 = vmul.f32 %v967, 1.442695
  %v986 = vpow.pop %v985
  %v987 = vmul.f32 %v968, 1.442695
  %v988 = vpow.pop %v987
  %v989 = vmul.f32 %v969, 1.442695
  %v990 = vpow.pop %v989
  %v991 = vmul.f32 %v970, 1.442695
  %v992 = vpow.pop %v991
  %v993 = vmul.f32 %v971, 1.442695
  %v994 = vpow.pop %v993
  %v995 = vmul.f32 %v972, 1.442695
  %v996 = vpow.pop %v995
  %v997 = vmul.f32 %v973, 1.442695
  %v998 = vpow.pop %v997
  %v999 = vmul.f32 %v974, 1.442695
  %v1000 = vpow.pop %v999
  %v1001 = vmul.f32 %v975, 1.442695
  %v1002 = vpow.pop %v1001
  %v1003 = vmul.f32 %v976, 1.442695
  %v1004 = vpow.pop %v1003
  %v1005 = vmul.f32 %v977, 1.442695
  %v1006 = vpow.pop %v1005
  %v1007 = vmul.f32 %v978, 1.442695
  %v1008 = vpow.pop %v1007
  %v1009 = vmul.f32 %v979, 1.442695
  %v1010 = vpow.pop %v1009
  %v1011 = vmul.f32 %v980, 1.442695
  %v1012 = vpow.pop %v1011
  %vm1013 = vcmask 122880
  %1014 = vst.msk [vmem:[#allocation2] sm:$0x1] %vm1013, %v955
  %v1015 = vmul.f32 %v901, %v982
  %v1016 = vmul.f32 %v902, %v984
  %v1017 = vmul.f32 %v903, %v986
  %v1018 = vmul.f32 %v904, %v988
  %v1019 = vmul.f32 %v905, %v990
  %v1020 = vmul.f32 %v906, %v992
  %v1021 = vmul.f32 %v907, %v994
  %v1022 = vmul.f32 %v908, %v996
  %v1023 = vmul.f32 %v909, %v998
  %v1024 = vmul.f32 %v910, %v1000
  %v1025 = vmul.f32 %v911, %v1002
  %v1026 = vmul.f32 %v912, %v1004
  %v1027 = vmul.f32 %v913, %v1006
  %v1028 = vmul.f32 %v914, %v1008
  %v1029 = vmul.f32 %v915, %v1010
  %v1030 = vmul.f32 %v916, %v1012
  %1031 = vrot.lane.b32.xlu0 %v227, 112
  %v1032 = vpop.permute.xlu0 %1031
  %1033 = vrot.lane.b32.xlu0 %v230, 112
  %v1034 = vpop.permute.xlu0 %1033
  %1035 = vrot.lane.b32.xlu0 %v235, 112
  %v1036 = vpop.permute.xlu0 %1035
  %1037 = vrot.lane.b32.xlu0 %v238, 112
  %v1038 = vpop.permute.xlu0 %1037
  %1039 = vrot.lane.b32.xlu0 %v243, 112
  %v1040 = vpop.permute.xlu0 %1039
  %1041 = vrot.lane.b32.xlu0 %v246, 112
  %v1042 = vpop.permute.xlu0 %1041
  %1043 = vrot.lane.b32.xlu0 %v251, 112
  %v1044 = vpop.permute.xlu0 %1043
  %1045 = vrot.lane.b32.xlu0 %v254, 112
  %v1046 = vpop.permute.xlu0 %1045
  %1047 = vrot.lane.b32.xlu0 %v259, 112
  %v1048 = vpop.permute.xlu0 %1047
  %1049 = vrot.lane.b32.xlu0 %v262, 112
  %v1050 = vpop.permute.xlu0 %1049
  %1051 = vrot.lane.b32.xlu0 %v267, 112
  %v1052 = vpop.permute.xlu0 %1051
  %1053 = vrot.lane.b32.xlu0 %v270, 112
  %v1054 = vpop.permute.xlu0 %1053
  %1055 = vrot.lane.b32.xlu0 %v275, 112
  %v1056 = vpop.permute.xlu0 %1055
  %1057 = vrot.lane.b32.xlu0 %v278, 112
  %v1058 = vpop.permute.xlu0 %1057
  %1059 = vrot.lane.b32.xlu0 %v283, 112
  %v1060 = vpop.permute.xlu0 %1059
  %1061 = vrot.lane.b32.xlu0 %v286, 112
  %v1062 = vpop.permute.xlu0 %1061
  %1095 = vrot.lane.b32.xlu0 %v1015, 16
  %v1096 = vpop.permute.xlu0 %1095
  %1097 = vrot.lane.b32.xlu0 %v1016, 16
  %v1098 = vpop.permute.xlu0 %1097
  %1099 = vrot.lane.b32.xlu0 %v1017, 16
  %v1100 = vpop.permute.xlu0 %1099
  %1101 = vrot.lane.b32.xlu0 %v1018, 16
  %v1102 = vpop.permute.xlu0 %1101
  %1103 = vrot.lane.b32.xlu0 %v1019, 16
  %v1104 = vpop.permute.xlu0 %1103
  %1105 = vrot.lane.b32.xlu0 %v1020, 16
  %v1106 = vpop.permute.xlu0 %1105
  %1107 = vrot.lane.b32.xlu0 %v1021, 16
  %v1108 = vpop.permute.xlu0 %1107
  %1109 = vrot.lane.b32.xlu0 %v1022, 16
  %v1110 = vpop.permute.xlu0 %1109
  %1111 = vrot.lane.b32.xlu0 %v1023, 16
  %v1112 = vpop.permute.xlu0 %1111
  %1113 = vrot.lane.b32.xlu0 %v1024, 16
  %v1114 = vpop.permute.xlu0 %1113
  %1115 = vrot.lane.b32.xlu0 %v1025, 16
  %v1116 = vpop.permute.xlu0 %1115
  %1117 = vrot.lane.b32.xlu0 %v1026, 16
  %v1118 = vpop.permute.xlu0 %1117
  %1119 = vrot.lane.b32.xlu0 %v1027, 16
  %v1120 = vpop.permute.xlu0 %1119
  %1121 = vrot.lane.b32.xlu0 %v1028, 16
  %v1122 = vpop.permute.xlu0 %1121
  %1123 = vrot.lane.b32.xlu0 %v1029, 16
  %v1124 = vpop.permute.xlu0 %1123
  %1125 = vrot.lane.b32.xlu0 %v1030, 16
  %v1126 = vpop.permute.xlu0 %1125
  %1159 = vrot.lane.b32.xlu0 %v982, 32
  %v1160 = vpop.permute.xlu0 %1159
  %1161 = vrot.lane.b32.xlu0 %v984, 32
  %v1162 = vpop.permute.xlu0 %1161
  %1163 = vrot.lane.b32.xlu0 %v986, 32
  %v1164 = vpop.permute.xlu0 %1163
  %1165 = vrot.lane.b32.xlu0 %v988, 32
  %v1166 = vpop.permute.xlu0 %1165
  %1167 = vrot.lane.b32.xlu0 %v990, 32
  %v1168 = vpop.permute.xlu0 %1167
  %1169 = vrot.lane.b32.xlu0 %v992, 32
  %v1170 = vpop.permute.xlu0 %1169
  %1171 = vrot.lane.b32.xlu0 %v994, 32
  %v1172 = vpop.permute.xlu0 %1171
  %1173 = vrot.lane.b32.xlu0 %v996, 32
  %v1174 = vpop.permute.xlu0 %1173
  %1175 = vrot.lane.b32.xlu0 %v998, 32
  %v1176 = vpop.permute.xlu0 %1175
  %1177 = vrot.lane.b32.xlu0 %v1000, 32
  %v1178 = vpop.permute.xlu0 %1177
  %1179 = vrot.lane.b32.xlu0 %v1002, 32
  %v1180 = vpop.permute.xlu0 %1179
  %1181 = vrot.lane.b32.xlu0 %v1004, 32
  %v1182 = vpop.permute.xlu0 %1181
  %1183 = vrot.lane.b32.xlu0 %v1006, 32
  %v1184 = vpop.permute.xlu0 %1183
  %1185 = vrot.lane.b32.xlu0 %v1008, 32
  %v1186 = vpop.permute.xlu0 %1185
  %1187 = vrot.lane.b32.xlu0 %v1010, 32
  %v1188 = vpop.permute.xlu0 %1187
  %1189 = vrot.lane.b32.xlu0 %v1012, 32
  %v1190 = vpop.permute.xlu0 %1189
  %v1207 = vsel %vm291, %v1032, %v1096
  %v1208 = vsel %vm291, %v1034, %v1098
  %v1209 = vsel %vm291, %v1036, %v1100
  %v1210 = vsel %vm291, %v1038, %v1102
  %v1211 = vsel %vm291, %v1040, %v1104
  %v1212 = vsel %vm291, %v1042, %v1106
  %v1213 = vsel %vm291, %v1044, %v1108
  %v1214 = vsel %vm291, %v1046, %v1110
  %v1215 = vsel %vm291, %v1048, %v1112
  %v1216 = vsel %vm291, %v1050, %v1114
  %v1217 = vsel %vm291, %v1052, %v1116
  %v1218 = vsel %vm291, %v1054, %v1118
  %v1219 = vsel %vm291, %v1056, %v1120
  %v1220 = vsel %vm291, %v1058, %v1122
  %v1221 = vsel %vm291, %v1060, %v1124
  %v1222 = vsel %vm291, %v1062, %v1126
  %vm1223 = vcmask 261120
  %v1224 = vsel %vm1223, %v1207, %v1160
  %v1225 = vsel %vm1223, %v1208, %v1162
  %v1226 = vsel %vm1223, %v1209, %v1164
  %v1227 = vsel %vm1223, %v1210, %v1166
  %v1228 = vsel %vm1223, %v1211, %v1168
  %v1229 = vsel %vm1223, %v1212, %v1170
  %v1230 = vsel %vm1223, %v1213, %v1172
  %v1231 = vsel %vm1223, %v1214, %v1174
  %v1232 = vsel %vm1223, %v1215, %v1176
  %v1233 = vsel %vm1223, %v1216, %v1178
  %v1234 = vsel %vm1223, %v1217, %v1180
  %v1235 = vsel %vm1223, %v1218, %v1182
  %v1236 = vsel %vm1223, %v1219, %v1184
  %v1237 = vsel %vm1223, %v1220, %v1186
  %v1238 = vsel %vm1223, %v1221, %v1188
  %v1239 = vsel %vm1223, %v1222, %v1190
  %v1240 = vpack.c.bf16 %v1225, %v1224
  %v1241 = vpack.c.bf16 %v1227, %v1226
  %v1242 = vpack.c.bf16 %v1229, %v1228
  %v1243 = vpack.c.bf16 %v1231, %v1230
  %v1244 = vpack.c.bf16 %v1233, %v1232
  %v1245 = vpack.c.bf16 %v1235, %v1234
  %v1246 = vpack.c.bf16 %v1237, %v1236
  %v1247 = vpack.c.bf16 %v1239, %v1238
  %1248 = vmatprep.subr.bf16.mxu0 0
  %1249 = vmatpush1.bf16.msra.mxu0 %v1247
  %1250 = vmatprep.subr.bf16.mxu0 0
  %1251 = vmatpush1.bf16.msra.mxu0 %v1246
  %1252 = vmatprep.subr.bf16.mxu0 0
  %1253 = vmatpush1.bf16.msra.mxu0 %v1245
  %1254 = vmatprep.subr.bf16.mxu0 0
  %1255 = vmatpush1.bf16.msra.mxu0 %v1244
  %1256 = vmatprep.subr.bf16.mxu0 0
  %1257 = vmatpush1.bf16.msra.mxu0 %v1243
  %1258 = vmatprep.subr.bf16.mxu0 0
  %1259 = vmatpush1.bf16.msra.mxu0 %v1242
  %1260 = vmatprep.subr.bf16.mxu0 0
  %1261 = vmatpush1.bf16.msra.mxu0 %v1241
  %1262 = vmatprep.subr.bf16.mxu0 0
  %1263 = vmatpush1.bf16.msra.mxu0 %v1240
  %1264 = vmatprep.subr.bf16.mxu0 0
  %1265 = vmatpush2.bf16.msra.mxu0 0
  %1266 = vmatprep.subr.bf16.mxu0 0
  %1267 = vmatpush2.bf16.msra.mxu0 0
  %1268 = vmatprep.subr.bf16.mxu0 0
  %1269 = vmatpush2.bf16.msra.mxu0 0
  %1270 = vmatprep.subr.bf16.mxu0 0
  %1271 = vmatpush2.bf16.msra.mxu0 0
  %1272 = vmatprep.subr.bf16.mxu0 0
  %1273 = vmatpush2.bf16.msra.mxu0 0
  %1274 = vmatprep.subr.bf16.mxu0 0
  %1275 = vmatpush2.bf16.msra.mxu0 0
  %1276 = vmatprep.subr.bf16.mxu0 0
  %1277 = vmatpush2.bf16.msra.mxu0 0
  %1278 = vmatprep.subr.bf16.mxu0 0
  %1279 = vmatpush2.bf16.msra.mxu0 0
  %1280 = vmatprep.mubr.bf16.mxu0 0
  %1281 = vmatmul.mubr.bf16.gmra.mxu0 %v115
  %v1282 = vpop.f32.mrf.mxu0
  %v1283 = vadd.f32 0.0, %v1282
  %v1284 = vpop.f32.mrf.mxu0
  %v1285 = vpop.f32.mrf.mxu0
  %v1286 = vadd.f32 0.0, %v1285
  %v1287 = vpop.f32.mrf.mxu0
  %1288 = vmatprep.mubr.bf16.mxu0 0
  %1289 = vmatmul.mubr.bf16.gmra.mxu0 %v116
  %v1290 = vpop.f32.mrf.mxu0
  %v1291 = vadd.f32 0.0, %v1290
  %v1292 = vpop.f32.mrf.mxu0
  %v1293 = vpop.f32.mrf.mxu0
  %v1294 = vadd.f32 0.0, %v1293
  %v1295 = vpop.f32.mrf.mxu0
  %1296 = vmatprep.mubr.bf16.mxu0 0
  %1297 = vmatmul.mubr.bf16.gmra.mxu0 %v117
  %v1298 = vpop.f32.mrf.mxu0
  %v1299 = vadd.f32 0.0, %v1298
  %v1300 = vpop.f32.mrf.mxu0
  %v1301 = vpop.f32.mrf.mxu0
  %v1302 = vadd.f32 0.0, %v1301
  %v1303 = vpop.f32.mrf.mxu0
  %1304 = vmatprep.mubr.bf16.mxu0 0
  %1305 = vmatmul.mubr.bf16.gmra.mxu0 %v118
  %v1306 = vpop.f32.mrf.mxu0
  %v1307 = vadd.f32 0.0, %v1306
  %v1308 = vpop.f32.mrf.mxu0
  %v1309 = vpop.f32.mrf.mxu0
  %v1310 = vadd.f32 0.0, %v1309
  %v1311 = vpop.f32.mrf.mxu0
  %1312 = vdwg.mxu0
  %v1314 = vlaneseq
  %v1315 = vshrl.u32 %v1314, 7
  %v1316 = vsub.s32 0, %v1315
  %v1317 = vrot.slane %v958, %v1316
  %1318 = vrot.lane.b32.xlu0 %v1317, 16
  %v1319 = vpop.permute.xlu0 %1318
  %1321 = vrot.lane.b32.xlu0 %v1317, 32
  %v1322 = vpop.permute.xlu0 %1321
  %v1324 = vsel %vm291, 1.0, %v1319
  %v1325 = vsel %vm1223, %v1324, %v1322
  %v1326 = vld [vmem:[%s5] sm:$0xff]
  %v1327 = vld [vmem:[%s5 + $0x8] sm:$0xff]
  %v1328 = vld [vmem:[%s5 + $0x10] sm:$0xff]
  %v1329 = vld [vmem:[%s5 + $0x18] sm:$0xff]
  %v1330 = vld [vmem:[%s5 + $0x20] sm:$0xff]
  %v1331 = vld [vmem:[%s5 + $0x28] sm:$0xff]
  %v1332 = vld [vmem:[%s5 + $0x30] sm:$0xff]
  %v1333 = vld [vmem:[%s5 + $0x38] sm:$0xff]
  %v1334 = vlaneseq
  %v1335 = vshrl.u32 %v1334, 7
  %v1336 = vsub.s32 0, %v1335
  %v1337 = vrot.slane %v1325, %v1336
  %v1338 = vmul.f32 %v1326, %v1337
  %v1339 = vmul.f32 %v1327, %v1337
  %v1340 = vmul.f32 %v1328, %v1337
  %v1341 = vmul.f32 %v1329, %v1337
  %v1342 = vmul.f32 %v1330, %v1337
  %v1343 = vmul.f32 %v1331, %v1337
  %v1344 = vmul.f32 %v1332, %v1337
  %v1345 = vmul.f32 %v1333, %v1337
  %v1346 = vadd.f32 %v1338, %v1283
  %v1347 = vadd.f32 %v1339, %v1286
  %v1348 = vadd.f32 %v1340, %v1291
  %v1349 = vadd.f32 %v1341, %v1294
  %v1350 = vadd.f32 %v1342, %v1299
  %v1351 = vadd.f32 %v1343, %v1302
  %v1352 = vadd.f32 %v1344, %v1307
  %v1353 = vadd.f32 %v1345, %v1310
  %vm1354 = vcmask 392192
  %1355 = vst.msk [vmem:[%s5] sm:$0xff] %vm1354, %v1346
  %1356 = vst.msk [vmem:[%s5 + $0x8] sm:$0xff] %vm1354, %v1347
  %1357 = vst.msk [vmem:[%s5 + $0x10] sm:$0xff] %vm1354, %v1348
  %1358 = vst.msk [vmem:[%s5 + $0x18] sm:$0xff] %vm1354, %v1349
  %1359 = vst.msk [vmem:[%s5 + $0x20] sm:$0xff] %vm1354, %v1350
  %1360 = vst.msk [vmem:[%s5 + $0x28] sm:$0xff] %vm1354, %v1351
  %1361 = vst.msk [vmem:[%s5 + $0x30] sm:$0xff] %vm1354, %v1352
  %1362 = vst.msk [vmem:[%s5 + $0x38] sm:$0xff] %vm1354, %v1353
  // Predicated region
  $region26: #{_lambda_.14} parent=0 // pred_check
    _
  $region27: #{_lambda_.14} parent=0 // pred_check_branch
    %1364 = sbr.rel (0) target = $region29
  $region28: #{_lambda_.14} parent=0 // pred_region
    _
  $region29: #{_lambda_.14} parent=0 // pred_fallthru
    _
  // Predicated region
  $region30: #{_lambda_.14} parent=0 // pred_check
    _
  $region31: #{_lambda_.14} parent=0 // pred_check_branch
    %1366 = sbr.rel (0) target = $region33
  $region32: #{_lambda_.14} parent=0 // pred_region
    _
  $region33: #{_lambda_.14} parent=0 // pred_fallthru
    _

</llo_original>
